<compile_context>
chip_gen: v7x
topology: tpu7x:2x2x1
jax: 0.10.0
libtpu: 0.0.40
codegen_flags: <defaults>
</compile_context>

<pallas_src>
import functools

import jax
import jax.numpy as jnp
from jax import lax
from jax.experimental import pallas as pl
from jax.experimental.pallas import tpu as pltpu


def _round_up(x, m):
    return ((x + m - 1) // m) * m


def _cdiv(a, b):
    return -(-a // b)


def _tpu_generation_info():
    """Best-effort (vmem_capacity_bytes, tensorcores sharing the grid)."""
    vmem_cap = 128 * 1024 * 1024
    num_tc = 1
    kind = ""
    try:
        kind = (getattr(jax.devices()[0], "device_kind", "") or "").lower()
    except Exception:
        pass
    if ("v7" in kind) or ("7x" in kind) or ("tpu7" in kind):
        vmem_cap = 64 * 1024 * 1024          # v7x: 64 MiB VMEM per TC, 2 TCs/chip
        num_tc = 2
    elif ("v5p" in kind) or ("v4" in kind):
        num_tc = 2                           # megacore
    try:                                     # refine with runtime query when available
        info = pltpu.get_tpu_info()
        cap = getattr(info, "vmem_capacity_bytes", None)
        if cap:
            vmem_cap = int(cap)
    except Exception:
        pass
    return vmem_cap, num_tc


def _pick_time_block(S, per_step_bytes, gx_budget):
    """Largest time block whose DOUBLE-buffered gates_x block fits gx_budget.

    Prefers (reasonably large) divisors of S; otherwise accepts a modest amount of
    zero left-padding on the time axis.
    """
    fits = [t for t in (64, 32, 16, 8, 4, 2, 1)
            if 2 * t * per_step_bytes <= gx_budget]
    if not fits:
        return 1
    for t in fits:                         # exact divisor, large enough to amortize
        if t >= 8 and S % t == 0:
            return t
    max_pad = max(4, S // 8)
    for t in fits:                         # small left-padding allowed
        if (-S) % t <= max_pad:
            return t
    for t in fits:                         # any exact divisor
        if S % t == 0:
            return t
    return fits[-1]


def _lstm_recurrence_kernel(gx_ref, whh_ref, h_out_ref, h_sc, c_sc, *, unroll):
    """One grid step = T timesteps of the recurrence for one batch block.

    gx_ref : (T, TB, 4*Hp)  precomputed x@W_ih + bias, gate order [i, f, o, g] (f32 or bf16)
    whh_ref: (Hp, 4*Hp)     recurrent weights (resident, possibly bf16)
    h_out  : (TB, Hp) f32   final hidden state for this batch block
    h_sc/c_sc: (TB, Hp) f32 resident LSTM state
    """
    tb = pl.program_id(1)          # time-block index (inner, sequential axis)
    T = gx_ref.shape[0]
    Hp = h_sc.shape[-1]

    @pl.when(tb == 0)
    def _():
        h_sc[...] = jnp.zeros_like(h_sc)
        c_sc[...] = jnp.zeros_like(c_sc)

    def step(s, carry):
        h, c = carry
        gates = gx_ref[s].astype(jnp.float32) + jnp.dot(
            h.astype(whh_ref.dtype), whh_ref[...],
            preferred_element_type=jnp.float32,
        )                                               # (TB, 4*Hp), order [i, f, o, g]
        # sigmoid(x) == 0.5*tanh(0.5*x) + 0.5  ->  all activations use a single EUP op kind
        sig = 0.5 * jnp.tanh(0.5 * gates[:, : 3 * Hp]) + 0.5
        i = sig[:, 0 * Hp:1 * Hp]
        f = sig[:, 1 * Hp:2 * Hp]
        o = sig[:, 2 * Hp:3 * Hp]
        g = jnp.tanh(gates[:, 3 * Hp:])
        c = f * c + i * g
        h = o * jnp.tanh(c)
        return (h, c)

    h_fin, c_fin = lax.fori_loop(0, T, step, (h_sc[...], c_sc[...]), unroll=unroll)
    h_sc[...] = h_fin
    c_sc[...] = c_fin

    # Only the final timestep's hidden state is needed; store once.
    @pl.when(tb == pl.num_programs(1) - 1)
    def _():
        h_out_ref[...] = h_fin.astype(h_out_ref.dtype)


@functools.partial(jax.jit, static_argnames=("matmul_dtype", "whh_single_buffer"))
def _forward(x, w_ih, w_hh, b_ih, b_hh, matmul_dtype, whh_single_buffer):
    B, S, E = x.shape
    H4 = w_ih.shape[0]
    H = H4 // 4

    mm = jnp.dtype(matmul_dtype)
    mm_item = mm.itemsize
    gx_dtype = mm                       # bf16 gates_x stream when matmuls are bf16
    gx_item = jnp.dtype(gx_dtype).itemsize

    vmem_cap, num_tc = _tpu_generation_info()

    # ---- lane/sublane-aligned padded sizes --------------------------------
    Hp = _round_up(H, 128)              # hidden padded to full 128-lane vregs
    Bp = _round_up(B, 8)                # batch padded to 8 sublanes

    # Batch tiling: on 2-TC chips split batch across cores (>=2 blocks); on 1-TC chips
    # fold all rows into one matmul-M block (<=256) so the latency chain runs once.
    n_bblk_min = max(num_tc if Bp >= 8 * num_tc else 1, _cdiv(Bp, 256))
    TB = _round_up(_cdiv(Bp, n_bblk_min), 8)
    Bp = _round_up(Bp, TB)
    n_bblk = Bp // TB

    # ---- VMEM budgets (generation aware) -----------------------------------
    whh_bufs = 1 if whh_single_buffer else 2
    whh_bytes = Hp * 4 * Hp * mm_item * whh_bufs
    state_bytes = 2 * TB * Hp * 4       # h + c scratch
    out_bytes = 2 * TB * Hp * 4         # double-buffered output block
    usable = max(vmem_cap - 16 * 1024 * 1024, 16 * 1024 * 1024)
    gx_budget = min(usable - whh_bytes - state_bytes - out_bytes, vmem_cap // 2)
    gx_budget = max(gx_budget, 2 * 1024 * 1024)

    T = _pick_time_block(S, TB * 4 * Hp * gx_item, gx_budget)
    unroll = max(1, min(8, T))          # partial unroll: LLO visibility w/o vreg spill blowup
    Sp = _round_up(S, T)
    n_tblk = Sp // T

    # ---- weight prep (plain-JAX glue, runs once) ---------------------------
    # PyTorch gate order is [i, f, g, o]; permute to [i, f, o, g] (contiguous sigmoid slice).
    perm = jnp.array([0, 1, 3, 2])
    wih_g = w_ih.reshape(4, H, E)[perm]                           # (4, H, E)
    whh_g = w_hh.reshape(4, H, H)[perm]                           # (4, H_out, H_in)
    bias_g = (b_ih + b_hh).reshape(4, H)[perm]                    # (4, H)

    wih_p = jnp.pad(wih_g, ((0, 0), (0, Hp - H), (0, 0)))         # (4, Hp, E)
    whh_p = jnp.pad(whh_g, ((0, 0), (0, Hp - H), (0, Hp - H)))    # (4, Hp, Hp)
    bias_p = jnp.pad(bias_g, ((0, 0), (0, Hp - H))).reshape(4 * Hp).astype(jnp.float32)

    wih_t = jnp.transpose(wih_p, (2, 0, 1)).reshape(E, 4 * Hp)    # (E, 4*Hp)
    whh_t = jnp.transpose(whh_p, (2, 0, 1)).reshape(Hp, 4 * Hp)   # (Hp, 4*Hp)

    # ---- hoisted input projection: ONE big GEMM over all timesteps ---------
    x_tm = jnp.transpose(x, (1, 0, 2)).astype(jnp.float32)        # (S, B, E)
    x_tm = jnp.pad(x_tm, ((0, 0), (0, Bp - B), (0, 0)))           # (S, Bp, E)
    gates_x = jnp.einsum(
        "sbe,eg->sbg", x_tm.astype(mm), wih_t.astype(mm),
        preferred_element_type=jnp.float32,
    ) + bias_p[None, None, :]                                     # (S, Bp, 4*Hp) f32
    gates_x = gates_x.astype(gx_dtype)                            # bf16 stream when mm=bf16
    # Zero LEFT-padding of the time axis: zero pre-activations with zero initial state
    # keep h = c = 0 exactly, so leading pad steps are numerically neutral.
    gates_x = jnp.pad(gates_x, ((Sp - S, 0), (0, 0), (0, 0)))     # (Sp, Bp, 4*Hp)

    whh_dev = whh_t.astype(mm)

    # ---- VMEM limit: actual need + headroom, capped below physical VMEM ----
    gx_block = T * TB * 4 * Hp * gx_item
    need = 2 * gx_block + whh_bytes + out_bytes + state_bytes
    vmem_limit = int(min(max(need + (4 << 20), 32 << 20),
                         max(vmem_cap - (8 << 20), 32 << 20)))

    whh_spec_kwargs = {}
    if whh_single_buffer:
        # Constant index map -> a second buffer is pure waste; single-buffer it.
        whh_spec_kwargs["pipeline_mode"] = pl.Buffered(1)

    grid_spec = pltpu.PrefetchScalarGridSpec(
        num_scalar_prefetch=0,
        grid=(n_bblk, n_tblk),
        in_specs=[
            pl.BlockSpec((T, TB, 4 * Hp), lambda bi, tb: (tb, bi, 0)),          # gates_x chunk
            pl.BlockSpec((Hp, 4 * Hp), lambda bi, tb: (0, 0), **whh_spec_kwargs),  # resident W_hh
        ],
        out_specs=pl.BlockSpec((TB, Hp), lambda bi, tb: (bi, 0)),
        scratch_shapes=[
            pltpu.VMEM((TB, Hp), jnp.float32),   # h state
            pltpu.VMEM((TB, Hp), jnp.float32),   # c state
        ],
    )

    hn_padded = pl.pallas_call(
        functools.partial(_lstm_recurrence_kernel, unroll=unroll),
        out_shape=jax.ShapeDtypeStruct((Bp, Hp), jnp.float32),
        grid_spec=grid_spec,
        compiler_params=pltpu.CompilerParams(
            dimension_semantics=("parallel", "arbitrary"),
            vmem_limit_bytes=vmem_limit,
        ),
    )(gates_x, whh_dev)

    return hn_padded[:B, :H]


def lstm_encoder_forward(x, w_ih, w_hh, b_ih, b_hh, matmul_dtype=jnp.bfloat16):
    """x: (batch, seq, embedding_dim)  ->  hn[-1]: (batch, hidden_dim)."""
    try:
        return _forward(x, w_ih, w_hh, b_ih, b_hh,
                        matmul_dtype=matmul_dtype, whh_single_buffer=True)
    except Exception:
        # Fallback for Pallas builds that reject BlockSpec(pipeline_mode=Buffered(1)):
        # identical numerics, default double-buffered W_hh (slightly more VMEM).
        return _forward(x, w_ih, w_hh, b_ih, b_hh,
                        matmul_dtype=matmul_dtype, whh_single_buffer=False)


def _reference_lstm(x, w_ih, w_hh, b_ih, b_hh):
    """Pure-JAX reference matching torch.nn.LSTM single-layer semantics."""
    B, S, E = x.shape
    H = w_hh.shape[1]

    def step(carry, x_t):
        h, c = carry
        gates = x_t @ w_ih.T + b_ih + h @ w_hh.T + b_hh
        i, f, g, o = jnp.split(gates, 4, axis=-1)
        i = jax.nn.sigmoid(i); f = jax.nn.sigmoid(f)
        g = jnp.tanh(g); o = jax.nn.sigmoid(o)
        c = f * c + i * g
        h = o * jnp.tanh(c)
        return (h, c), None

    h0 = jnp.zeros((B, H), jnp.float32)
    c0 = jnp.zeros((B, H), jnp.float32)
    (h_fin, _), _ = lax.scan(step, (h0, c0), jnp.transpose(x, (1, 0, 2)))
    return h_fin


if __name__ == "__main__":
    # Small shapes implied by the module: x is (batch, seq, embedding_dim).
    B, S, E, H = 2, 8, 4, 32

    key = jax.random.PRNGKey(0)
    kx, k1, k2, k3, k4 = jax.random.split(key, 5)

    x = jax.random.normal(kx, (B, S, E), dtype=jnp.float32)

    # PyTorch-style uniform(-1/sqrt(H), 1/sqrt(H)) init, gate row order [i, f, g, o].
    bound = 1.0 / jnp.sqrt(jnp.float32(H))
    w_ih = jax.random.uniform(k1, (4 * H, E), jnp.float32, -bound, bound)
    w_hh = jax.random.uniform(k2, (4 * H, H), jnp.float32, -bound, bound)
    b_ih = jax.random.uniform(k3, (4 * H,), jnp.float32, -bound, bound)
    b_hh = jax.random.uniform(k4, (4 * H,), jnp.float32, -bound, bound)

    ref = _reference_lstm(x, w_ih, w_hh, b_ih, b_hh)

    # f32 matmuls + f32 gates_x stream: tight numerical check vs the reference.
    hn_f32 = lstm_encoder_forward(x, w_ih, w_hh, b_ih, b_hh, matmul_dtype=jnp.float32)
    jax.block_until_ready(hn_f32)
    assert hn_f32.shape == (B, H)
    assert jnp.allclose(hn_f32, ref, atol=1e-4, rtol=1e-4), "f32 mismatch vs reference"

    # bf16 matmul operands + bf16 gates_x stream (MXU/DMA-friendly path): loose check.
    hn_bf16 = lstm_encoder_forward(x, w_ih, w_hh, b_ih, b_hh, matmul_dtype=jnp.bfloat16)
    jax.block_until_ready(hn_bf16)
    assert hn_bf16.shape == (B, H)
    assert jnp.allclose(hn_bf16, ref, atol=5e-2, rtol=5e-2), "bf16 mismatch vs reference"

    print("KERNEL_OK")
</pallas_src>

<mosaic_0001>
module attributes {stable_mosaic.version = 11 : i64} {
  func.func @_lstm_recurrence_kernel(%arg0: i32, %arg1: i32, %arg2: memref<8x8x512xf32, #tpu.memory_space<vmem>>, %arg3: memref<128x512xf32, #tpu.memory_space<vmem>>, %arg4: memref<8x128xf32, #tpu.memory_space<vmem>>, %arg5: memref<8x128xf32, #tpu.memory_space<vmem>>, %arg6: memref<8x128xf32, #tpu.memory_space<vmem>>) attributes {dimension_semantics = [#tpu.dimension_semantics<parallel>, #tpu.dimension_semantics<arbitrary>], iteration_bounds = array<i64: 1, 1>, scalar_prefetch = 0 : i64, scratch_operands = 2 : i64, tpu.core_type = #tpu.core_type<tc>, window_params = [{transform_indices = @transform_0, window_bounds = array<i64: 8, 8, 512>}, {pipeline_mode = #tpu.pipeline_mode<synchronous>, transform_indices = @transform_1, window_bounds = array<i64: 128, 512>}, {transform_indices = @transform_2, window_bounds = array<i64: 8, 128>}]} {
    %c0_i32 = arith.constant 0 : i32
    %0 = arith.cmpi eq, %arg1, %c0_i32 : i32
    %1 = arith.extui %0 : i1 to i32
    %c0_i32_0 = arith.constant 0 : i32
    %2 = arith.cmpi ne, %1, %c0_i32_0 : i32
    scf.if %2 {
      %cst_74 = arith.constant 0.000000e+00 : f32
      %202 = vector.broadcast %cst_74 : f32 to vector<8x128xf32>
      %c0_75 = arith.constant 0 : index
      %c0_76 = arith.constant 0 : index
      %203 = vector.load %arg5[%c0_75, %c0_76] : memref<8x128xf32, #tpu.memory_space<vmem>>, vector<8x128xf32>
      tpu.vector_store %arg5[%c0_75, %c0_76], %202 {strides = array<i32>} : memref<8x128xf32, #tpu.memory_space<vmem>>, vector<8x128xf32>,
      %cst_77 = arith.constant 0.000000e+00 : f32
      %204 = vector.broadcast %cst_77 : f32 to vector<8x128xf32>
      %c0_78 = arith.constant 0 : index
      %c0_79 = arith.constant 0 : index
      %205 = vector.load %arg6[%c0_78, %c0_79] : memref<8x128xf32, #tpu.memory_space<vmem>>, vector<8x128xf32>
      tpu.vector_store %arg6[%c0_78, %c0_79], %204 {strides = array<i32>} : memref<8x128xf32, #tpu.memory_space<vmem>>, vector<8x128xf32>,
    } else {
    }
    %c0 = arith.constant 0 : index
    %c0_1 = arith.constant 0 : index
    %3 = vector.load %arg5[%c0, %c0_1] : memref<8x128xf32, #tpu.memory_space<vmem>>, vector<8x128xf32>
    %c0_2 = arith.constant 0 : index
    %c0_3 = arith.constant 0 : index
    %4 = vector.load %arg6[%c0_2, %c0_3] : memref<8x128xf32, #tpu.memory_space<vmem>>, vector<8x128xf32>
    %c0_i32_4 = arith.constant 0 : i32
    %5 = arith.index_cast %c0_i32_4 : i32 to index
    %c0_5 = arith.constant 0 : index
    %c0_6 = arith.constant 0 : index
    %6 = vector.load %arg2[%5, %c0_5, %c0_6] : memref<8x8x512xf32, #tpu.memory_space<vmem>>, vector<1x8x512xf32>
    %7 = vector.shape_cast %6 : vector<1x8x512xf32> to vector<8x512xf32>
    %c0_7 = arith.constant 0 : index
    %c0_8 = arith.constant 0 : index
    %8 = vector.load %arg3[%c0_7, %c0_8] : memref<128x512xf32, #tpu.memory_space<vmem>>, vector<128x512xf32>
    %cst = arith.constant dense<0.000000e+00> : vector<8x512xf32>
    %9 = tpu.matmul %3, %8, %cst {dimension_numbers = #tpu.dot_dimension_numbers<[1], [0], [0], [1], [0, 0, 1, 1], [], []>} : vector<8x128xf32>, vector<128x512xf32>, vector<8x512xf32> -> vector<8x512xf32>
    %10 = arith.addf %7, %9 : vector<8x512xf32>
    %11 = vector.extract_strided_slice %10 {offsets = [0, 0], sizes = [8, 384], strides = [1, 1]} : vector<8x512xf32> to vector<8x384xf32>
    %cst_9 = arith.constant 5.000000e-01 : f32
    %12 = vector.broadcast %cst_9 : f32 to vector<8x384xf32>
    %13 = arith.mulf %12, %11 : vector<8x384xf32>
    %14 = math.tanh %13 : vector<8x384xf32>
    %cst_10 = arith.constant 5.000000e-01 : f32
    %15 = vector.broadcast %cst_10 : f32 to vector<8x384xf32>
    %16 = arith.mulf %15, %14 : vector<8x384xf32>
    %cst_11 = arith.constant 5.000000e-01 : f32
    %17 = vector.broadcast %cst_11 : f32 to vector<8x384xf32>
    %18 = arith.addf %16, %17 : vector<8x384xf32>
    %19 = vector.extract_strided_slice %18 {offsets = [0, 0], sizes = [8, 128], strides = [1, 1]} : vector<8x384xf32> to vector<8x128xf32>
    %20 = vector.extract_strided_slice %18 {offsets = [0, 128], sizes = [8, 128], strides = [1, 1]} : vector<8x384xf32> to vector<8x128xf32>
    %21 = vector.extract_strided_slice %18 {offsets = [0, 256], sizes = [8, 128], strides = [1, 1]} : vector<8x384xf32> to vector<8x128xf32>
    %22 = vector.extract_strided_slice %10 {offsets = [0, 384], sizes = [8, 128], strides = [1, 1]} : vector<8x512xf32> to vector<8x128xf32>
    %23 = math.tanh %22 : vector<8x128xf32>
    %24 = arith.mulf %20, %4 : vector<8x128xf32>
    %25 = arith.mulf %19, %23 : vector<8x128xf32>
    %26 = arith.addf %24, %25 : vector<8x128xf32>
    %27 = math.tanh %26 : vector<8x128xf32>
    %28 = arith.mulf %21, %27 : vector<8x128xf32>
    %c1_i32 = arith.constant 1 : i32
    %29 = arith.index_cast %c1_i32 : i32 to index
    %c0_12 = arith.constant 0 : index
    %c0_13 = arith.constant 0 : index
    %30 = vector.load %arg2[%29, %c0_12, %c0_13] : memref<8x8x512xf32, #tpu.memory_space<vmem>>, vector<1x8x512xf32>
    %31 = vector.shape_cast %30 : vector<1x8x512xf32> to vector<8x512xf32>
    %c0_14 = arith.constant 0 : index
    %c0_15 = arith.constant 0 : index
    %32 = vector.load %arg3[%c0_14, %c0_15] : memref<128x512xf32, #tpu.memory_space<vmem>>, vector<128x512xf32>
    %cst_16 = arith.constant dense<0.000000e+00> : vector<8x512xf32>
    %33 = tpu.matmul %28, %32, %cst_16 {dimension_numbers = #tpu.dot_dimension_numbers<[1], [0], [0], [1], [0, 0, 1, 1], [], []>} : vector<8x128xf32>, vector<128x512xf32>, vector<8x512xf32> -> vector<8x512xf32>
    %34 = arith.addf %31, %33 : vector<8x512xf32>
    %35 = vector.extract_strided_slice %34 {offsets = [0, 0], sizes = [8, 384], strides = [1, 1]} : vector<8x512xf32> to vector<8x384xf32>
    %cst_17 = arith.constant 5.000000e-01 : f32
    %36 = vector.broadcast %cst_17 : f32 to vector<8x384xf32>
    %37 = arith.mulf %36, %35 : vector<8x384xf32>
    %38 = math.tanh %37 : vector<8x384xf32>
    %cst_18 = arith.constant 5.000000e-01 : f32
    %39 = vector.broadcast %cst_18 : f32 to vector<8x384xf32>
    %40 = arith.mulf %39, %38 : vector<8x384xf32>
    %cst_19 = arith.constant 5.000000e-01 : f32
    %41 = vector.broadcast %cst_19 : f32 to vector<8x384xf32>
    %42 = arith.addf %40, %41 : vector<8x384xf32>
    %43 = vector.extract_strided_slice %42 {offsets = [0, 0], sizes = [8, 128], strides = [1, 1]} : vector<8x384xf32> to vector<8x128xf32>
    %44 = vector.extract_strided_slice %42 {offsets = [0, 128], sizes = [8, 128], strides = [1, 1]} : vector<8x384xf32> to vector<8x128xf32>
    %45 = vector.extract_strided_slice %42 {offsets = [0, 256], sizes = [8, 128], strides = [1, 1]} : vector<8x384xf32> to vector<8x128xf32>
    %46 = vector.extract_strided_slice %34 {offsets = [0, 384], sizes = [8, 128], strides = [1, 1]} : vector<8x512xf32> to vector<8x128xf32>
    %47 = math.tanh %46 : vector<8x128xf32>
    %48 = arith.mulf %44, %26 : vector<8x128xf32>
    %49 = arith.mulf %43, %47 : vector<8x128xf32>
    %50 = arith.addf %48, %49 : vector<8x128xf32>
    %51 = math.tanh %50 : vector<8x128xf32>
    %52 = arith.mulf %45, %51 : vector<8x128xf32>
    %c2_i32 = arith.constant 2 : i32
    %53 = arith.index_cast %c2_i32 : i32 to index
    %c0_20 = arith.constant 0 : index
    %c0_21 = arith.constant 0 : index
    %54 = vector.load %arg2[%53, %c0_20, %c0_21] : memref<8x8x512xf32, #tpu.memory_space<vmem>>, vector<1x8x512xf32>
    %55 = vector.shape_cast %54 : vector<1x8x512xf32> to vector<8x512xf32>
    %c0_22 = arith.constant 0 : index
    %c0_23 = arith.constant 0 : index
    %56 = vector.load %arg3[%c0_22, %c0_23] : memref<128x512xf32, #tpu.memory_space<vmem>>, vector<128x512xf32>
    %cst_24 = arith.constant dense<0.000000e+00> : vector<8x512xf32>
    %57 = tpu.matmul %52, %56, %cst_24 {dimension_numbers = #tpu.dot_dimension_numbers<[1], [0], [0], [1], [0, 0, 1, 1], [], []>} : vector<8x128xf32>, vector<128x512xf32>, vector<8x512xf32> -> vector<8x512xf32>
    %58 = arith.addf %55, %57 : vector<8x512xf32>
    %59 = vector.extract_strided_slice %58 {offsets = [0, 0], sizes = [8, 384], strides = [1, 1]} : vector<8x512xf32> to vector<8x384xf32>
    %cst_25 = arith.constant 5.000000e-01 : f32
    %60 = vector.broadcast %cst_25 : f32 to vector<8x384xf32>
    %61 = arith.mulf %60, %59 : vector<8x384xf32>
    %62 = math.tanh %61 : vector<8x384xf32>
    %cst_26 = arith.constant 5.000000e-01 : f32
    %63 = vector.broadcast %cst_26 : f32 to vector<8x384xf32>
    %64 = arith.mulf %63, %62 : vector<8x384xf32>
    %cst_27 = arith.constant 5.000000e-01 : f32
    %65 = vector.broadcast %cst_27 : f32 to vector<8x384xf32>
    %66 = arith.addf %64, %65 : vector<8x384xf32>
    %67 = vector.extract_strided_slice %66 {offsets = [0, 0], sizes = [8, 128], strides = [1, 1]} : vector<8x384xf32> to vector<8x128xf32>
    %68 = vector.extract_strided_slice %66 {offsets = [0, 128], sizes = [8, 128], strides = [1, 1]} : vector<8x384xf32> to vector<8x128xf32>
    %69 = vector.extract_strided_slice %66 {offsets = [0, 256], sizes = [8, 128], strides = [1, 1]} : vector<8x384xf32> to vector<8x128xf32>
    %70 = vector.extract_strided_slice %58 {offsets = [0, 384], sizes = [8, 128], strides = [1, 1]} : vector<8x512xf32> to vector<8x128xf32>
    %71 = math.tanh %70 : vector<8x128xf32>
    %72 = arith.mulf %68, %50 : vector<8x128xf32>
    %73 = arith.mulf %67, %71 : vector<8x128xf32>
    %74 = arith.addf %72, %73 : vector<8x128xf32>
    %75 = math.tanh %74 : vector<8x128xf32>
    %76 = arith.mulf %69, %75 : vector<8x128xf32>
    %c3_i32 = arith.constant 3 : i32
    %77 = arith.index_cast %c3_i32 : i32 to index
    %c0_28 = arith.constant 0 : index
    %c0_29 = arith.constant 0 : index
    %78 = vector.load %arg2[%77, %c0_28, %c0_29] : memref<8x8x512xf32, #tpu.memory_space<vmem>>, vector<1x8x512xf32>
    %79 = vector.shape_cast %78 : vector<1x8x512xf32> to vector<8x512xf32>
    %c0_30 = arith.constant 0 : index
    %c0_31 = arith.constant 0 : index
    %80 = vector.load %arg3[%c0_30, %c0_31] : memref<128x512xf32, #tpu.memory_space<vmem>>, vector<128x512xf32>
    %cst_32 = arith.constant dense<0.000000e+00> : vector<8x512xf32>
    %81 = tpu.matmul %76, %80, %cst_32 {dimension_numbers = #tpu.dot_dimension_numbers<[1], [0], [0], [1], [0, 0, 1, 1], [], []>} : vector<8x128xf32>, vector<128x512xf32>, vector<8x512xf32> -> vector<8x512xf32>
    %82 = arith.addf %79, %81 : vector<8x512xf32>
    %83 = vector.extract_strided_slice %82 {offsets = [0, 0], sizes = [8, 384], strides = [1, 1]} : vector<8x512xf32> to vector<8x384xf32>
    %cst_33 = arith.constant 5.000000e-01 : f32
    %84 = vector.broadcast %cst_33 : f32 to vector<8x384xf32>
    %85 = arith.mulf %84, %83 : vector<8x384xf32>
    %86 = math.tanh %85 : vector<8x384xf32>
    %cst_34 = arith.constant 5.000000e-01 : f32
    %87 = vector.broadcast %cst_34 : f32 to vector<8x384xf32>
    %88 = arith.mulf %87, %86 : vector<8x384xf32>
    %cst_35 = arith.constant 5.000000e-01 : f32
    %89 = vector.broadcast %cst_35 : f32 to vector<8x384xf32>
    %90 = arith.addf %88, %89 : vector<8x384xf32>
    %91 = vector.extract_strided_slice %90 {offsets = [0, 0], sizes = [8, 128], strides = [1, 1]} : vector<8x384xf32> to vector<8x128xf32>
    %92 = vector.extract_strided_slice %90 {offsets = [0, 128], sizes = [8, 128], strides = [1, 1]} : vector<8x384xf32> to vector<8x128xf32>
    %93 = vector.extract_strided_slice %90 {offsets = [0, 256], sizes = [8, 128], strides = [1, 1]} : vector<8x384xf32> to vector<8x128xf32>
    %94 = vector.extract_strided_slice %82 {offsets = [0, 384], sizes = [8, 128], strides = [1, 1]} : vector<8x512xf32> to vector<8x128xf32>
    %95 = math.tanh %94 : vector<8x128xf32>
    %96 = arith.mulf %92, %74 : vector<8x128xf32>
    %97 = arith.mulf %91, %95 : vector<8x128xf32>
    %98 = arith.addf %96, %97 : vector<8x128xf32>
    %99 = math.tanh %98 : vector<8x128xf32>
    %100 = arith.mulf %93, %99 : vector<8x128xf32>
    %c4_i32 = arith.constant 4 : i32
    %101 = arith.index_cast %c4_i32 : i32 to index
    %c0_36 = arith.constant 0 : index
    %c0_37 = arith.constant 0 : index
    %102 = vector.load %arg2[%101, %c0_36, %c0_37] : memref<8x8x512xf32, #tpu.memory_space<vmem>>, vector<1x8x512xf32>
    %103 = vector.shape_cast %102 : vector<1x8x512xf32> to vector<8x512xf32>
    %c0_38 = arith.constant 0 : index
    %c0_39 = arith.constant 0 : index
    %104 = vector.load %arg3[%c0_38, %c0_39] : memref<128x512xf32, #tpu.memory_space<vmem>>, vector<128x512xf32>
    %cst_40 = arith.constant dense<0.000000e+00> : vector<8x512xf32>
    %105 = tpu.matmul %100, %104, %cst_40 {dimension_numbers = #tpu.dot_dimension_numbers<[1], [0], [0], [1], [0, 0, 1, 1], [], []>} : vector<8x128xf32>, vector<128x512xf32>, vector<8x512xf32> -> vector<8x512xf32>
    %106 = arith.addf %103, %105 : vector<8x512xf32>
    %107 = vector.extract_strided_slice %106 {offsets = [0, 0], sizes = [8, 384], strides = [1, 1]} : vector<8x512xf32> to vector<8x384xf32>
    %cst_41 = arith.constant 5.000000e-01 : f32
    %108 = vector.broadcast %cst_41 : f32 to vector<8x384xf32>
    %109 = arith.mulf %108, %107 : vector<8x384xf32>
    %110 = math.tanh %109 : vector<8x384xf32>
    %cst_42 = arith.constant 5.000000e-01 : f32
    %111 = vector.broadcast %cst_42 : f32 to vector<8x384xf32>
    %112 = arith.mulf %111, %110 : vector<8x384xf32>
    %cst_43 = arith.constant 5.000000e-01 : f32
    %113 = vector.broadcast %cst_43 : f32 to vector<8x384xf32>
    %114 = arith.addf %112, %113 : vector<8x384xf32>
    %115 = vector.extract_strided_slice %114 {offsets = [0, 0], sizes = [8, 128], strides = [1, 1]} : vector<8x384xf32> to vector<8x128xf32>
    %116 = vector.extract_strided_slice %114 {offsets = [0, 128], sizes = [8, 128], strides = [1, 1]} : vector<8x384xf32> to vector<8x128xf32>
    %117 = vector.extract_strided_slice %114 {offsets = [0, 256], sizes = [8, 128], strides = [1, 1]} : vector<8x384xf32> to vector<8x128xf32>
    %118 = vector.extract_strided_slice %106 {offsets = [0, 384], sizes = [8, 128], strides = [1, 1]} : vector<8x512xf32> to vector<8x128xf32>
    %119 = math.tanh %118 : vector<8x128xf32>
    %120 = arith.mulf %116, %98 : vector<8x128xf32>
    %121 = arith.mulf %115, %119 : vector<8x128xf32>
    %122 = arith.addf %120, %121 : vector<8x128xf32>
    %123 = math.tanh %122 : vector<8x128xf32>
    %124 = arith.mulf %117, %123 : vector<8x128xf32>
    %c5_i32 = arith.constant 5 : i32
    %125 = arith.index_cast %c5_i32 : i32 to index
    %c0_44 = arith.constant 0 : index
    %c0_45 = arith.constant 0 : index
    %126 = vector.load %arg2[%125, %c0_44, %c0_45] : memref<8x8x512xf32, #tpu.memory_space<vmem>>, vector<1x8x512xf32>
    %127 = vector.shape_cast %126 : vector<1x8x512xf32> to vector<8x512xf32>
    %c0_46 = arith.constant 0 : index
    %c0_47 = arith.constant 0 : index
    %128 = vector.load %arg3[%c0_46, %c0_47] : memref<128x512xf32, #tpu.memory_space<vmem>>, vector<128x512xf32>
    %cst_48 = arith.constant dense<0.000000e+00> : vector<8x512xf32>
    %129 = tpu.matmul %124, %128, %cst_48 {dimension_numbers = #tpu.dot_dimension_numbers<[1], [0], [0], [1], [0, 0, 1, 1], [], []>} : vector<8x128xf32>, vector<128x512xf32>, vector<8x512xf32> -> vector<8x512xf32>
    %130 = arith.addf %127, %129 : vector<8x512xf32>
    %131 = vector.extract_strided_slice %130 {offsets = [0, 0], sizes = [8, 384], strides = [1, 1]} : vector<8x512xf32> to vector<8x384xf32>
    %cst_49 = arith.constant 5.000000e-01 : f32
    %132 = vector.broadcast %cst_49 : f32 to vector<8x384xf32>
    %133 = arith.mulf %132, %131 : vector<8x384xf32>
    %134 = math.tanh %133 : vector<8x384xf32>
    %cst_50 = arith.constant 5.000000e-01 : f32
    %135 = vector.broadcast %cst_50 : f32 to vector<8x384xf32>
    %136 = arith.mulf %135, %134 : vector<8x384xf32>
    %cst_51 = arith.constant 5.000000e-01 : f32
    %137 = vector.broadcast %cst_51 : f32 to vector<8x384xf32>
    %138 = arith.addf %136, %137 : vector<8x384xf32>
    %139 = vector.extract_strided_slice %138 {offsets = [0, 0], sizes = [8, 128], strides = [1, 1]} : vector<8x384xf32> to vector<8x128xf32>
    %140 = vector.extract_strided_slice %138 {offsets = [0, 128], sizes = [8, 128], strides = [1, 1]} : vector<8x384xf32> to vector<8x128xf32>
    %141 = vector.extract_strided_slice %138 {offsets = [0, 256], sizes = [8, 128], strides = [1, 1]} : vector<8x384xf32> to vector<8x128xf32>
    %142 = vector.extract_strided_slice %130 {offsets = [0, 384], sizes = [8, 128], strides = [1, 1]} : vector<8x512xf32> to vector<8x128xf32>
    %143 = math.tanh %142 : vector<8x128xf32>
    %144 = arith.mulf %140, %122 : vector<8x128xf32>
    %145 = arith.mulf %139, %143 : vector<8x128xf32>
    %146 = arith.addf %144, %145 : vector<8x128xf32>
    %147 = math.tanh %146 : vector<8x128xf32>
    %148 = arith.mulf %141, %147 : vector<8x128xf32>
    %c6_i32 = arith.constant 6 : i32
    %149 = arith.index_cast %c6_i32 : i32 to index
    %c0_52 = arith.constant 0 : index
    %c0_53 = arith.constant 0 : index
    %150 = vector.load %arg2[%149, %c0_52, %c0_53] : memref<8x8x512xf32, #tpu.memory_space<vmem>>, vector<1x8x512xf32>
    %151 = vector.shape_cast %150 : vector<1x8x512xf32> to vector<8x512xf32>
    %c0_54 = arith.constant 0 : index
    %c0_55 = arith.constant 0 : index
    %152 = vector.load %arg3[%c0_54, %c0_55] : memref<128x512xf32, #tpu.memory_space<vmem>>, vector<128x512xf32>
    %cst_56 = arith.constant dense<0.000000e+00> : vector<8x512xf32>
    %153 = tpu.matmul %148, %152, %cst_56 {dimension_numbers = #tpu.dot_dimension_numbers<[1], [0], [0], [1], [0, 0, 1, 1], [], []>} : vector<8x128xf32>, vector<128x512xf32>, vector<8x512xf32> -> vector<8x512xf32>
    %154 = arith.addf %151, %153 : vector<8x512xf32>
    %155 = vector.extract_strided_slice %154 {offsets = [0, 0], sizes = [8, 384], strides = [1, 1]} : vector<8x512xf32> to vector<8x384xf32>
    %cst_57 = arith.constant 5.000000e-01 : f32
    %156 = vector.broadcast %cst_57 : f32 to vector<8x384xf32>
    %157 = arith.mulf %156, %155 : vector<8x384xf32>
    %158 = math.tanh %157 : vector<8x384xf32>
    %cst_58 = arith.constant 5.000000e-01 : f32
    %159 = vector.broadcast %cst_58 : f32 to vector<8x384xf32>
    %160 = arith.mulf %159, %158 : vector<8x384xf32>
    %cst_59 = arith.constant 5.000000e-01 : f32
    %161 = vector.broadcast %cst_59 : f32 to vector<8x384xf32>
    %162 = arith.addf %160, %161 : vector<8x384xf32>
    %163 = vector.extract_strided_slice %162 {offsets = [0, 0], sizes = [8, 128], strides = [1, 1]} : vector<8x384xf32> to vector<8x128xf32>
    %164 = vector.extract_strided_slice %162 {offsets = [0, 128], sizes = [8, 128], strides = [1, 1]} : vector<8x384xf32> to vector<8x128xf32>
    %165 = vector.extract_strided_slice %162 {offsets = [0, 256], sizes = [8, 128], strides = [1, 1]} : vector<8x384xf32> to vector<8x128xf32>
    %166 = vector.extract_strided_slice %154 {offsets = [0, 384], sizes = [8, 128], strides = [1, 1]} : vector<8x512xf32> to vector<8x128xf32>
    %167 = math.tanh %166 : vector<8x128xf32>
    %168 = arith.mulf %164, %146 : vector<8x128xf32>
    %169 = arith.mulf %163, %167 : vector<8x128xf32>
    %170 = arith.addf %168, %169 : vector<8x128xf32>
    %171 = math.tanh %170 : vector<8x128xf32>
    %172 = arith.mulf %165, %171 : vector<8x128xf32>
    %c7_i32 = arith.constant 7 : i32
    %173 = arith.index_cast %c7_i32 : i32 to index
    %c0_60 = arith.constant 0 : index
    %c0_61 = arith.constant 0 : index
    %174 = vector.load %arg2[%173, %c0_60, %c0_61] : memref<8x8x512xf32, #tpu.memory_space<vmem>>, vector<1x8x512xf32>
    %175 = vector.shape_cast %174 : vector<1x8x512xf32> to vector<8x512xf32>
    %c0_62 = arith.constant 0 : index
    %c0_63 = arith.constant 0 : index
    %176 = vector.load %arg3[%c0_62, %c0_63] : memref<128x512xf32, #tpu.memory_space<vmem>>, vector<128x512xf32>
    %cst_64 = arith.constant dense<0.000000e+00> : vector<8x512xf32>
    %177 = tpu.matmul %172, %176, %cst_64 {dimension_numbers = #tpu.dot_dimension_numbers<[1], [0], [0], [1], [0, 0, 1, 1], [], []>} : vector<8x128xf32>, vector<128x512xf32>, vector<8x512xf32> -> vector<8x512xf32>
    %178 = arith.addf %175, %177 : vector<8x512xf32>
    %179 = vector.extract_strided_slice %178 {offsets = [0, 0], sizes = [8, 384], strides = [1, 1]} : vector<8x512xf32> to vector<8x384xf32>
    %cst_65 = arith.constant 5.000000e-01 : f32
    %180 = vector.broadcast %cst_65 : f32 to vector<8x384xf32>
    %181 = arith.mulf %180, %179 : vector<8x384xf32>
    %182 = math.tanh %181 : vector<8x384xf32>
    %cst_66 = arith.constant 5.000000e-01 : f32
    %183 = vector.broadcast %cst_66 : f32 to vector<8x384xf32>
    %184 = arith.mulf %183, %182 : vector<8x384xf32>
    %cst_67 = arith.constant 5.000000e-01 : f32
    %185 = vector.broadcast %cst_67 : f32 to vector<8x384xf32>
    %186 = arith.addf %184, %185 : vector<8x384xf32>
    %187 = vector.extract_strided_slice %186 {offsets = [0, 0], sizes = [8, 128], strides = [1, 1]} : vector<8x384xf32> to vector<8x128xf32>
    %188 = vector.extract_strided_slice %186 {offsets = [0, 128], sizes = [8, 128], strides = [1, 1]} : vector<8x384xf32> to vector<8x128xf32>
    %189 = vector.extract_strided_slice %186 {offsets = [0, 256], sizes = [8, 128], strides = [1, 1]} : vector<8x384xf32> to vector<8x128xf32>
    %190 = vector.extract_strided_slice %178 {offsets = [0, 384], sizes = [8, 128], strides = [1, 1]} : vector<8x512xf32> to vector<8x128xf32>
    %191 = math.tanh %190 : vector<8x128xf32>
    %192 = arith.mulf %188, %170 : vector<8x128xf32>
    %193 = arith.mulf %187, %191 : vector<8x128xf32>
    %194 = arith.addf %192, %193 : vector<8x128xf32>
    %195 = math.tanh %194 : vector<8x128xf32>
    %196 = arith.mulf %189, %195 : vector<8x128xf32>
    %c8_i32 = arith.constant 8 : i32
    %c0_68 = arith.constant 0 : index
    %c0_69 = arith.constant 0 : index
    %197 = vector.load %arg5[%c0_68, %c0_69] : memref<8x128xf32, #tpu.memory_space<vmem>>, vector<8x128xf32>
    tpu.vector_store %arg5[%c0_68, %c0_69], %196 {strides = array<i32>} : memref<8x128xf32, #tpu.memory_space<vmem>>, vector<8x128xf32>,
    %c0_70 = arith.constant 0 : index
    %c0_71 = arith.constant 0 : index
    %198 = vector.load %arg6[%c0_70, %c0_71] : memref<8x128xf32, #tpu.memory_space<vmem>>, vector<8x128xf32>
    tpu.vector_store %arg6[%c0_70, %c0_71], %194 {strides = array<i32>} : memref<8x128xf32, #tpu.memory_space<vmem>>, vector<8x128xf32>,
    %c0_i32_72 = arith.constant 0 : i32
    %199 = arith.cmpi eq, %arg1, %c0_i32_72 : i32
    %200 = arith.extui %199 : i1 to i32
    %c0_i32_73 = arith.constant 0 : i32
    %201 = arith.cmpi ne, %200, %c0_i32_73 : i32
    scf.if %201 {
      %c0_74 = arith.constant 0 : index
      %c0_75 = arith.constant 0 : index
      %202 = vector.load %arg4[%c0_74, %c0_75] : memref<8x128xf32, #tpu.memory_space<vmem>>, vector<8x128xf32>
      tpu.vector_store %arg4[%c0_74, %c0_75], %196 {strides = array<i32>} : memref<8x128xf32, #tpu.memory_space<vmem>>, vector<8x128xf32>,
    } else {
    }
    return
  }
  func.func @transform_0(%arg0: i32, %arg1: i32) -> (i32, i32, i32) {
    %c0_i32 = arith.constant 0 : i32
    %c0_i32_0 = arith.constant 0 : i32
    return %arg1, %arg0, %c0_i32 : i32, i32, i32
  }
  func.func @transform_1(%arg0: i32, %arg1: i32) -> (i32, i32) {
    %c0_i32 = arith.constant 0 : i32
    %c0_i32_0 = arith.constant 0 : i32
    %c0_i32_1 = arith.constant 0 : i32
    return %c0_i32, %c0_i32_0 : i32, i32
  }
  func.func @transform_2(%arg0: i32, %arg1: i32) -> (i32, i32) {
    %c0_i32 = arith.constant 0 : i32
    %c0_i32_0 = arith.constant 0 : i32
    return %arg0, %c0_i32 : i32, i32
  }
}

module attributes {stable_mosaic.version = 11 : i64} {
  func.func @_lstm_recurrence_kernel(%arg0: i32, %arg1: i32, %arg2: memref<8x8x512xf32, #tpu.memory_space<vmem>>, %arg3: memref<128x512xf32, #tpu.memory_space<vmem>>, %arg4: memref<8x128xf32, #tpu.memory_space<vmem>>, %arg5: memref<8x128xf32, #tpu.memory_space<vmem>>, %arg6: memref<8x128xf32, #tpu.memory_space<vmem>>) attributes {dimension_semantics = [#tpu.dimension_semantics<parallel>, #tpu.dimension_semantics<arbitrary>], iteration_bounds = array<i64: 1, 1>, scalar_prefetch = 0 : i64, scratch_operands = 2 : i64, tpu.core_type = #tpu.core_type<tc>, window_params = [{transform_indices = @transform_0, window_bounds = array<i64: 8, 8, 512>}, {pipeline_mode = #tpu.pipeline_mode<synchronous>, transform_indices = @transform_1, window_bounds = array<i64: 128, 512>}, {transform_indices = @transform_2, window_bounds = array<i64: 8, 128>}]} {
    %c0_i32 = arith.constant 0 : i32
    %0 = arith.cmpi eq, %arg1, %c0_i32 : i32
    %1 = arith.extui %0 : i1 to i32
    %c0_i32_0 = arith.constant 0 : i32
    %2 = arith.cmpi ne, %1, %c0_i32_0 : i32
    scf.if %2 {
      %cst_74 = arith.constant 0.000000e+00 : f32
      %202 = vector.broadcast %cst_74 : f32 to vector<8x128xf32>
      %c0_75 = arith.constant 0 : index
      %c0_76 = arith.constant 0 : index
      %203 = vector.load %arg5[%c0_75, %c0_76] : memref<8x128xf32, #tpu.memory_space<vmem>>, vector<8x128xf32>
      tpu.vector_store %arg5[%c0_75, %c0_76], %202 {strides = array<i32>} : memref<8x128xf32, #tpu.memory_space<vmem>>, vector<8x128xf32>,
      %cst_77 = arith.constant 0.000000e+00 : f32
      %204 = vector.broadcast %cst_77 : f32 to vector<8x128xf32>
      %c0_78 = arith.constant 0 : index
      %c0_79 = arith.constant 0 : index
      %205 = vector.load %arg6[%c0_78, %c0_79] : memref<8x128xf32, #tpu.memory_space<vmem>>, vector<8x128xf32>
      tpu.vector_store %arg6[%c0_78, %c0_79], %204 {strides = array<i32>} : memref<8x128xf32, #tpu.memory_space<vmem>>, vector<8x128xf32>,
    } else {
    }
    %c0 = arith.constant 0 : index
    %c0_1 = arith.constant 0 : index
    %3 = vector.load %arg5[%c0, %c0_1] : memref<8x128xf32, #tpu.memory_space<vmem>>, vector<8x128xf32>
    %c0_2 = arith.constant 0 : index
    %c0_3 = arith.constant 0 : index
    %4 = vector.load %arg6[%c0_2, %c0_3] : memref<8x128xf32, #tpu.memory_space<vmem>>, vector<8x128xf32>
    %c0_i32_4 = arith.constant 0 : i32
    %5 = arith.index_cast %c0_i32_4 : i32 to index
    %c0_5 = arith.constant 0 : index
    %c0_6 = arith.constant 0 : index
    %6 = vector.load %arg2[%5, %c0_5, %c0_6] : memref<8x8x512xf32, #tpu.memory_space<vmem>>, vector<1x8x512xf32>
    %7 = vector.shape_cast %6 : vector<1x8x512xf32> to vector<8x512xf32>
    %c0_7 = arith.constant 0 : index
    %c0_8 = arith.constant 0 : index
    %8 = vector.load %arg3[%c0_7, %c0_8] : memref<128x512xf32, #tpu.memory_space<vmem>>, vector<128x512xf32>
    %cst = arith.constant dense<0.000000e+00> : vector<8x512xf32>
    %9 = tpu.matmul %3, %8, %cst {dimension_numbers = #tpu.dot_dimension_numbers<[1], [0], [0], [1], [0, 0, 1, 1], [], []>} : vector<8x128xf32>, vector<128x512xf32>, vector<8x512xf32> -> vector<8x512xf32>
    %10 = arith.addf %7, %9 : vector<8x512xf32>
    %11 = vector.extract_strided_slice %10 {offsets = [0, 0], sizes = [8, 384], strides = [1, 1]} : vector<8x512xf32> to vector<8x384xf32>
    %cst_9 = arith.constant 5.000000e-01 : f32
    %12 = vector.broadcast %cst_9 : f32 to vector<8x384xf32>
    %13 = arith.mulf %12, %11 : vector<8x384xf32>
    %14 = math.tanh %13 : vector<8x384xf32>
    %cst_10 = arith.constant 5.000000e-01 : f32
    %15 = vector.broadcast %cst_10 : f32 to vector<8x384xf32>
    %16 = arith.mulf %15, %14 : vector<8x384xf32>
    %cst_11 = arith.constant 5.000000e-01 : f32
    %17 = vector.broadcast %cst_11 : f32 to vector<8x384xf32>
    %18 = arith.addf %16, %17 : vector<8x384xf32>
    %19 = vector.extract_strided_slice %18 {offsets = [0, 0], sizes = [8, 128], strides = [1, 1]} : vector<8x384xf32> to vector<8x128xf32>
    %20 = vector.extract_strided_slice %18 {offsets = [0, 128], sizes = [8, 128], strides = [1, 1]} : vector<8x384xf32> to vector<8x128xf32>
    %21 = vector.extract_strided_slice %18 {offsets = [0, 256], sizes = [8, 128], strides = [1, 1]} : vector<8x384xf32> to vector<8x128xf32>
    %22 = vector.extract_strided_slice %10 {offsets = [0, 384], sizes = [8, 128], strides = [1, 1]} : vector<8x512xf32> to vector<8x128xf32>
    %23 = math.tanh %22 : vector<8x128xf32>
    %24 = arith.mulf %20, %4 : vector<8x128xf32>
    %25 = arith.mulf %19, %23 : vector<8x128xf32>
    %26 = arith.addf %24, %25 : vector<8x128xf32>
    %27 = math.tanh %26 : vector<8x128xf32>
    %28 = arith.mulf %21, %27 : vector<8x128xf32>
    %c1_i32 = arith.constant 1 : i32
    %29 = arith.index_cast %c1_i32 : i32 to index
    %c0_12 = arith.constant 0 : index
    %c0_13 = arith.constant 0 : index
    %30 = vector.load %arg2[%29, %c0_12, %c0_13] : memref<8x8x512xf32, #tpu.memory_space<vmem>>, vector<1x8x512xf32>
    %31 = vector.shape_cast %30 : vector<1x8x512xf32> to vector<8x512xf32>
    %c0_14 = arith.constant 0 : index
    %c0_15 = arith.constant 0 : index
    %32 = vector.load %arg3[%c0_14, %c0_15] : memref<128x512xf32, #tpu.memory_space<vmem>>, vector<128x512xf32>
    %cst_16 = arith.constant dense<0.000000e+00> : vector<8x512xf32>
    %33 = tpu.matmul %28, %32, %cst_16 {dimension_numbers = #tpu.dot_dimension_numbers<[1], [0], [0], [1], [0, 0, 1, 1], [], []>} : vector<8x128xf32>, vector<128x512xf32>, vector<8x512xf32> -> vector<8x512xf32>
    %34 = arith.addf %31, %33 : vector<8x512xf32>
    %35 = vector.extract_strided_slice %34 {offsets = [0, 0], sizes = [8, 384], strides = [1, 1]} : vector<8x512xf32> to vector<8x384xf32>
    %cst_17 = arith.constant 5.000000e-01 : f32
    %36 = vector.broadcast %cst_17 : f32 to vector<8x384xf32>
    %37 = arith.mulf %36, %35 : vector<8x384xf32>
    %38 = math.tanh %37 : vector<8x384xf32>
    %cst_18 = arith.constant 5.000000e-01 : f32
    %39 = vector.broadcast %cst_18 : f32 to vector<8x384xf32>
    %40 = arith.mulf %39, %38 : vector<8x384xf32>
    %cst_19 = arith.constant 5.000000e-01 : f32
    %41 = vector.broadcast %cst_19 : f32 to vector<8x384xf32>
    %42 = arith.addf %40, %41 : vector<8x384xf32>
    %43 = vector.extract_strided_slice %42 {offsets = [0, 0], sizes = [8, 128], strides = [1, 1]} : vector<8x384xf32> to vector<8x128xf32>
    %44 = vector.extract_strided_slice %42 {offsets = [0, 128], sizes = [8, 128], strides = [1, 1]} : vector<8x384xf32> to vector<8x128xf32>
    %45 = vector.extract_strided_slice %42 {offsets = [0, 256], sizes = [8, 128], strides = [1, 1]} : vector<8x384xf32> to vector<8x128xf32>
    %46 = vector.extract_strided_slice %34 {offsets = [0, 384], sizes = [8, 128], strides = [1, 1]} : vector<8x512xf32> to vector<8x128xf32>
    %47 = math.tanh %46 : vector<8x128xf32>
    %48 = arith.mulf %44, %26 : vector<8x128xf32>
    %49 = arith.mulf %43, %47 : vector<8x128xf32>
    %50 = arith.addf %48, %49 : vector<8x128xf32>
    %51 = math.tanh %50 : vector<8x128xf32>
    %52 = arith.mulf %45, %51 : vector<8x128xf32>
    %c2_i32 = arith.constant 2 : i32
    %53 = arith.index_cast %c2_i32 : i32 to index
    %c0_20 = arith.constant 0 : index
    %c0_21 = arith.constant 0 : index
    %54 = vector.load %arg2[%53, %c0_20, %c0_21] : memref<8x8x512xf32, #tpu.memory_space<vmem>>, vector<1x8x512xf32>
    %55 = vector.shape_cast %54 : vector<1x8x512xf32> to vector<8x512xf32>
    %c0_22 = arith.constant 0 : index
    %c0_23 = arith.constant 0 : index
    %56 = vector.load %arg3[%c0_22, %c0_23] : memref<128x512xf32, #tpu.memory_space<vmem>>, vector<128x512xf32>
    %cst_24 = arith.constant dense<0.000000e+00> : vector<8x512xf32>
    %57 = tpu.matmul %52, %56, %cst_24 {dimension_numbers = #tpu.dot_dimension_numbers<[1], [0], [0], [1], [0, 0, 1, 1], [], []>} : vector<8x128xf32>, vector<128x512xf32>, vector<8x512xf32> -> vector<8x512xf32>
    %58 = arith.addf %55, %57 : vector<8x512xf32>
    %59 = vector.extract_strided_slice %58 {offsets = [0, 0], sizes = [8, 384], strides = [1, 1]} : vector<8x512xf32> to vector<8x384xf32>
    %cst_25 = arith.constant 5.000000e-01 : f32
    %60 = vector.broadcast %cst_25 : f32 to vector<8x384xf32>
    %61 = arith.mulf %60, %59 : vector<8x384xf32>
    %62 = math.tanh %61 : vector<8x384xf32>
    %cst_26 = arith.constant 5.000000e-01 : f32
    %63 = vector.broadcast %cst_26 : f32 to vector<8x384xf32>
    %64 = arith.mulf %63, %62 : vector<8x384xf32>
    %cst_27 = arith.constant 5.000000e-01 : f32
    %65 = vector.broadcast %cst_27 : f32 to vector<8x384xf32>
    %66 = arith.addf %64, %65 : vector<8x384xf32>
    %67 = vector.extract_strided_slice %66 {offsets = [0, 0], sizes = [8, 128], strides = [1, 1]} : vector<8x384xf32> to vector<8x128xf32>
    %68 = vector.extract_strided_slice %66 {offsets = [0, 128], sizes = [8, 128], strides = [1, 1]} : vector<8x384xf32> to vector<8x128xf32>
    %69 = vector.extract_strided_slice %66 {offsets = [0, 256], sizes = [8, 128], strides = [1, 1]} : vector<8x384xf32> to vector<8x128xf32>
    %70 = vector.extract_strided_slice %58 {offsets = [0, 384], sizes = [8, 128], strides = [1, 1]} : vector<8x512xf32> to vector<8x128xf32>
    %71 = math.tanh %70 : vector<8x128xf32>
    %72 = arith.mulf %68, %50 : vector<8x128xf32>
    %73 = arith.mulf %67, %71 : vector<8x128xf32>
    %74 = arith.addf %72, %73 : vector<8x128xf32>
    %75 = math.tanh %74 : vector<8x128xf32>
    %76 = arith.mulf %69, %75 : vector<8x128xf32>
    %c3_i32 = arith.constant 3 : i32
    %77 = arith.index_cast %c3_i32 : i32 to index
    %c0_28 = arith.constant 0 : index
    %c0_29 = arith.constant 0 : index
    %78 = vector.load %arg2[%77, %c0_28, %c0_29] : memref<8x8x512xf32, #tpu.memory_space<vmem>>, vector<1x8x512xf32>
    %79 = vector.shape_cast %78 : vector<1x8x512xf32> to vector<8x512xf32>
    %c0_30 = arith.constant 0 : index
    %c0_31 = arith.constant 0 : index
    %80 = vector.load %arg3[%c0_30, %c0_31] : memref<128x512xf32, #tpu.memory_space<vmem>>, vector<128x512xf32>
    %cst_32 = arith.constant dense<0.000000e+00> : vector<8x512xf32>
    %81 = tpu.matmul %76, %80, %cst_32 {dimension_numbers = #tpu.dot_dimension_numbers<[1], [0], [0], [1], [0, 0, 1, 1], [], []>} : vector<8x128xf32>, vector<128x512xf32>, vector<8x512xf32> -> vector<8x512xf32>
    %82 = arith.addf %79, %81 : vector<8x512xf32>
    %83 = vector.extract_strided_slice %82 {offsets = [0, 0], sizes = [8, 384], strides = [1, 1]} : vector<8x512xf32> to vector<8x384xf32>
    %cst_33 = arith.constant 5.000000e-01 : f32
    %84 = vector.broadcast %cst_33 : f32 to vector<8x384xf32>
    %85 = arith.mulf %84, %83 : vector<8x384xf32>
    %86 = math.tanh %85 : vector<8x384xf32>
    %cst_34 = arith.constant 5.000000e-01 : f32
    %87 = vector.broadcast %cst_34 : f32 to vector<8x384xf32>
    %88 = arith.mulf %87, %86 : vector<8x384xf32>
    %cst_35 = arith.constant 5.000000e-01 : f32
    %89 = vector.broadcast %cst_35 : f32 to vector<8x384xf32>
    %90 = arith.addf %88, %89 : vector<8x384xf32>
    %91 = vector.extract_strided_slice %90 {offsets = [0, 0], sizes = [8, 128], strides = [1, 1]} : vector<8x384xf32> to vector<8x128xf32>
    %92 = vector.extract_strided_slice %90 {offsets = [0, 128], sizes = [8, 128], strides = [1, 1]} : vector<8x384xf32> to vector<8x128xf32>
    %93 = vector.extract_strided_slice %90 {offsets = [0, 256], sizes = [8, 128], strides = [1, 1]} : vector<8x384xf32> to vector<8x128xf32>
    %94 = vector.extract_strided_slice %82 {offsets = [0, 384], sizes = [8, 128], strides = [1, 1]} : vector<8x512xf32> to vector<8x128xf32>
    %95 = math.tanh %94 : vector<8x128xf32>
    %96 = arith.mulf %92, %74 : vector<8x128xf32>
    %97 = arith.mulf %91, %95 : vector<8x128xf32>
    %98 = arith.addf %96, %97 : vector<8x128xf32>
    %99 = math.tanh %98 : vector<8x128xf32>
    %100 = arith.mulf %93, %99 : vector<8x128xf32>
    %c4_i32 = arith.constant 4 : i32
    %101 = arith.index_cast %c4_i32 : i32 to index
    %c0_36 = arith.constant 0 : index
    %c0_37 = arith.constant 0 : index
    %102 = vector.load %arg2[%101, %c0_36, %c0_37] : memref<8x8x512xf32, #tpu.memory_space<vmem>>, vector<1x8x512xf32>
    %103 = vector.shape_cast %102 : vector<1x8x512xf32> to vector<8x512xf32>
    %c0_38 = arith.constant 0 : index
    %c0_39 = arith.constant 0 : index
    %104 = vector.load %arg3[%c0_38, %c0_39] : memref<128x512xf32, #tpu.memory_space<vmem>>, vector<128x512xf32>
    %cst_40 = arith.constant dense<0.000000e+00> : vector<8x512xf32>
    %105 = tpu.matmul %100, %104, %cst_40 {dimension_numbers = #tpu.dot_dimension_numbers<[1], [0], [0], [1], [0, 0, 1, 1], [], []>} : vector<8x128xf32>, vector<128x512xf32>, vector<8x512xf32> -> vector<8x512xf32>
    %106 = arith.addf %103, %105 : vector<8x512xf32>
    %107 = vector.extract_strided_slice %106 {offsets = [0, 0], sizes = [8, 384], strides = [1, 1]} : vector<8x512xf32> to vector<8x384xf32>
    %cst_41 = arith.constant 5.000000e-01 : f32
    %108 = vector.broadcast %cst_41 : f32 to vector<8x384xf32>
    %109 = arith.mulf %108, %107 : vector<8x384xf32>
    %110 = math.tanh %109 : vector<8x384xf32>
    %cst_42 = arith.constant 5.000000e-01 : f32
    %111 = vector.broadcast %cst_42 : f32 to vector<8x384xf32>
    %112 = arith.mulf %111, %110 : vector<8x384xf32>
    %cst_43 = arith.constant 5.000000e-01 : f32
    %113 = vector.broadcast %cst_43 : f32 to vector<8x384xf32>
    %114 = arith.addf %112, %113 : vector<8x384xf32>
    %115 = vector.extract_strided_slice %114 {offsets = [0, 0], sizes = [8, 128], strides = [1, 1]} : vector<8x384xf32> to vector<8x128xf32>
    %116 = vector.extract_strided_slice %114 {offsets = [0, 128], sizes = [8, 128], strides = [1, 1]} : vector<8x384xf32> to vector<8x128xf32>
    %117 = vector.extract_strided_slice %114 {offsets = [0, 256], sizes = [8, 128], strides = [1, 1]} : vector<8x384xf32> to vector<8x128xf32>
    %118 = vector.extract_strided_slice %106 {offsets = [0, 384], sizes = [8, 128], strides = [1, 1]} : vector<8x512xf32> to vector<8x128xf32>
    %119 = math.tanh %118 : vector<8x128xf32>
    %120 = arith.mulf %116, %98 : vector<8x128xf32>
    %121 = arith.mulf %115, %119 : vector<8x128xf32>
    %122 = arith.addf %120, %121 : vector<8x128xf32>
    %123 = math.tanh %122 : vector<8x128xf32>
    %124 = arith.mulf %117, %123 : vector<8x128xf32>
    %c5_i32 = arith.constant 5 : i32
    %125 = arith.index_cast %c5_i32 : i32 to index
    %c0_44 = arith.constant 0 : index
    %c0_45 = arith.constant 0 : index
    %126 = vector.load %arg2[%125, %c0_44, %c0_45] : memref<8x8x512xf32, #tpu.memory_space<vmem>>, vector<1x8x512xf32>
    %127 = vector.shape_cast %126 : vector<1x8x512xf32> to vector<8x512xf32>
    %c0_46 = arith.constant 0 : index
    %c0_47 = arith.constant 0 : index
    %128 = vector.load %arg3[%c0_46, %c0_47] : memref<128x512xf32, #tpu.memory_space<vmem>>, vector<128x512xf32>
    %cst_48 = arith.constant dense<0.000000e+00> : vector<8x512xf32>
    %129 = tpu.matmul %124, %128, %cst_48 {dimension_numbers = #tpu.dot_dimension_numbers<[1], [0], [0], [1], [0, 0, 1, 1], [], []>} : vector<8x128xf32>, vector<128x512xf32>, vector<8x512xf32> -> vector<8x512xf32>
    %130 = arith.addf %127, %129 : vector<8x512xf32>
    %131 = vector.extract_strided_slice %130 {offsets = [0, 0], sizes = [8, 384], strides = [1, 1]} : vector<8x512xf32> to vector<8x384xf32>
    %cst_49 = arith.constant 5.000000e-01 : f32
    %132 = vector.broadcast %cst_49 : f32 to vector<8x384xf32>
    %133 = arith.mulf %132, %131 : vector<8x384xf32>
    %134 = math.tanh %133 : vector<8x384xf32>
    %cst_50 = arith.constant 5.000000e-01 : f32
    %135 = vector.broadcast %cst_50 : f32 to vector<8x384xf32>
    %136 = arith.mulf %135, %134 : vector<8x384xf32>
    %cst_51 = arith.constant 5.000000e-01 : f32
    %137 = vector.broadcast %cst_51 : f32 to vector<8x384xf32>
    %138 = arith.addf %136, %137 : vector<8x384xf32>
    %139 = vector.extract_strided_slice %138 {offsets = [0, 0], sizes = [8, 128], strides = [1, 1]} : vector<8x384xf32> to vector<8x128xf32>
    %140 = vector.extract_strided_slice %138 {offsets = [0, 128], sizes = [8, 128], strides = [1, 1]} : vector<8x384xf32> to vector<8x128xf32>
    %141 = vector.extract_strided_slice %138 {offsets = [0, 256], sizes = [8, 128], strides = [1, 1]} : vector<8x384xf32> to vector<8x128xf32>
    %142 = vector.extract_strided_slice %130 {offsets = [0, 384], sizes = [8, 128], strides = [1, 1]} : vector<8x512xf32> to vector<8x128xf32>
    %143 = math.tanh %142 : vector<8x128xf32>
    %144 = arith.mulf %140, %122 : vector<8x128xf32>
    %145 = arith.mulf %139, %143 : vector<8x128xf32>
    %146 = arith.addf %144, %145 : vector<8x128xf32>
    %147 = math.tanh %146 : vector<8x128xf32>
    %148 = arith.mulf %141, %147 : vector<8x128xf32>
    %c6_i32 = arith.constant 6 : i32
    %149 = arith.index_cast %c6_i32 : i32 to index
    %c0_52 = arith.constant 0 : index
    %c0_53 = arith.constant 0 : index
    %150 = vector.load %arg2[%149, %c0_52, %c0_53] : memref<8x8x512xf32, #tpu.memory_space<vmem>>, vector<1x8x512xf32>
    %151 = vector.shape_cast %150 : vector<1x8x512xf32> to vector<8x512xf32>
    %c0_54 = arith.constant 0 : index
    %c0_55 = arith.constant 0 : index
    %152 = vector.load %arg3[%c0_54, %c0_55] : memref<128x512xf32, #tpu.memory_space<vmem>>, vector<128x512xf32>
    %cst_56 = arith.constant dense<0.000000e+00> : vector<8x512xf32>
    %153 = tpu.matmul %148, %152, %cst_56 {dimension_numbers = #tpu.dot_dimension_numbers<[1], [0], [0], [1], [0, 0, 1, 1], [], []>} : vector<8x128xf32>, vector<128x512xf32>, vector<8x512xf32> -> vector<8x512xf32>
    %154 = arith.addf %151, %153 : vector<8x512xf32>
    %155 = vector.extract_strided_slice %154 {offsets = [0, 0], sizes = [8, 384], strides = [1, 1]} : vector<8x512xf32> to vector<8x384xf32>
    %cst_57 = arith.constant 5.000000e-01 : f32
    %156 = vector.broadcast %cst_57 : f32 to vector<8x384xf32>
    %157 = arith.mulf %156, %155 : vector<8x384xf32>
    %158 = math.tanh %157 : vector<8x384xf32>
    %cst_58 = arith.constant 5.000000e-01 : f32
    %159 = vector.broadcast %cst_58 : f32 to vector<8x384xf32>
    %160 = arith.mulf %159, %158 : vector<8x384xf32>
    %cst_59 = arith.constant 5.000000e-01 : f32
    %161 = vector.broadcast %cst_59 : f32 to vector<8x384xf32>
    %162 = arith.addf %160, %161 : vector<8x384xf32>
    %163 = vector.extract_strided_slice %162 {offsets = [0, 0], sizes = [8, 128], strides = [1, 1]} : vector<8x384xf32> to vector<8x128xf32>
    %164 = vector.extract_strided_slice %162 {offsets = [0, 128], sizes = [8, 128], strides = [1, 1]} : vector<8x384xf32> to vector<8x128xf32>
    %165 = vector.extract_strided_slice %162 {offsets = [0, 256], sizes = [8, 128], strides = [1, 1]} : vector<8x384xf32> to vector<8x128xf32>
    %166 = vector.extract_strided_slice %154 {offsets = [0, 384], sizes = [8, 128], strides = [1, 1]} : vector<8x512xf32> to vector<8x128xf32>
    %167 = math.tanh %166 : vector<8x128xf32>
    %168 = arith.mulf %164, %146 : vector<8x128xf32>
    %169 = arith.mulf %163, %167 : vector<8x128xf32>
    %170 = arith.addf %168, %169 : vector<8x128xf32>
    %171 = math.tanh %170 : vector<8x128xf32>
    %172 = arith.mulf %165, %171 : vector<8x128xf32>
    %c7_i32 = arith.constant 7 : i32
    %173 = arith.index_cast %c7_i32 : i32 to index
    %c0_60 = arith.constant 0 : index
    %c0_61 = arith.constant 0 : index
    %174 = vector.load %arg2[%173, %c0_60, %c0_61] : memref<8x8x512xf32, #tpu.memory_space<vmem>>, vector<1x8x512xf32>
    %175 = vector.shape_cast %174 : vector<1x8x512xf32> to vector<8x512xf32>
    %c0_62 = arith.constant 0 : index
    %c0_63 = arith.constant 0 : index
    %176 = vector.load %arg3[%c0_62, %c0_63] : memref<128x512xf32, #tpu.memory_space<vmem>>, vector<128x512xf32>
    %cst_64 = arith.constant dense<0.000000e+00> : vector<8x512xf32>
    %177 = tpu.matmul %172, %176, %cst_64 {dimension_numbers = #tpu.dot_dimension_numbers<[1], [0], [0], [1], [0, 0, 1, 1], [], []>} : vector<8x128xf32>, vector<128x512xf32>, vector<8x512xf32> -> vector<8x512xf32>
    %178 = arith.addf %175, %177 : vector<8x512xf32>
    %179 = vector.extract_strided_slice %178 {offsets = [0, 0], sizes = [8, 384], strides = [1, 1]} : vector<8x512xf32> to vector<8x384xf32>
    %cst_65 = arith.constant 5.000000e-01 : f32
    %180 = vector.broadcast %cst_65 : f32 to vector<8x384xf32>
    %181 = arith.mulf %180, %179 : vector<8x384xf32>
    %182 = math.tanh %181 : vector<8x384xf32>
    %cst_66 = arith.constant 5.000000e-01 : f32
    %183 = vector.broadcast %cst_66 : f32 to vector<8x384xf32>
    %184 = arith.mulf %183, %182 : vector<8x384xf32>
    %cst_67 = arith.constant 5.000000e-01 : f32
    %185 = vector.broadcast %cst_67 : f32 to vector<8x384xf32>
    %186 = arith.addf %184, %185 : vector<8x384xf32>
    %187 = vector.extract_strided_slice %186 {offsets = [0, 0], sizes = [8, 128], strides = [1, 1]} : vector<8x384xf32> to vector<8x128xf32>
    %188 = vector.extract_strided_slice %186 {offsets = [0, 128], sizes = [8, 128], strides = [1, 1]} : vector<8x384xf32> to vector<8x128xf32>
    %189 = vector.extract_strided_slice %186 {offsets = [0, 256], sizes = [8, 128], strides = [1, 1]} : vector<8x384xf32> to vector<8x128xf32>
    %190 = vector.extract_strided_slice %178 {offsets = [0, 384], sizes = [8, 128], strides = [1, 1]} : vector<8x512xf32> to vector<8x128xf32>
    %191 = math.tanh %190 : vector<8x128xf32>
    %192 = arith.mulf %188, %170 : vector<8x128xf32>
    %193 = arith.mulf %187, %191 : vector<8x128xf32>
    %194 = arith.addf %192, %193 : vector<8x128xf32>
    %195 = math.tanh %194 : vector<8x128xf32>
    %196 = arith.mulf %189, %195 : vector<8x128xf32>
    %c8_i32 = arith.constant 8 : i32
    %c0_68 = arith.constant 0 : index
    %c0_69 = arith.constant 0 : index
    %197 = vector.load %arg5[%c0_68, %c0_69] : memref<8x128xf32, #tpu.memory_space<vmem>>, vector<8x128xf32>
    tpu.vector_store %arg5[%c0_68, %c0_69], %196 {strides = array<i32>} : memref<8x128xf32, #tpu.memory_space<vmem>>, vector<8x128xf32>,
    %c0_70 = arith.constant 0 : index
    %c0_71 = arith.constant 0 : index
    %198 = vector.load %arg6[%c0_70, %c0_71] : memref<8x128xf32, #tpu.memory_space<vmem>>, vector<8x128xf32>
    tpu.vector_store %arg6[%c0_70, %c0_71], %194 {strides = array<i32>} : memref<8x128xf32, #tpu.memory_space<vmem>>, vector<8x128xf32>,
    %c0_i32_72 = arith.constant 0 : i32
    %199 = arith.cmpi eq, %arg1, %c0_i32_72 : i32
    %200 = arith.extui %199 : i1 to i32
    %c0_i32_73 = arith.constant 0 : i32
    %201 = arith.cmpi ne, %200, %c0_i32_73 : i32
    scf.if %201 {
      %c0_74 = arith.constant 0 : index
      %c0_75 = arith.constant 0 : index
      %202 = vector.load %arg4[%c0_74, %c0_75] : memref<8x128xf32, #tpu.memory_space<vmem>>, vector<8x128xf32>
      tpu.vector_store %arg4[%c0_74, %c0_75], %196 {strides = array<i32>} : memref<8x128xf32, #tpu.memory_space<vmem>>, vector<8x128xf32>,
    } else {
    }
    return
  }
  func.func @transform_0(%arg0: i32, %arg1: i32) -> (i32, i32, i32) {
    %c0_i32 = arith.constant 0 : i32
    %c0_i32_0 = arith.constant 0 : i32
    return %arg1, %arg0, %c0_i32 : i32, i32, i32
  }
  func.func @transform_1(%arg0: i32, %arg1: i32) -> (i32, i32) {
    %c0_i32 = arith.constant 0 : i32
    %c0_i32_0 = arith.constant 0 : i32
    %c0_i32_1 = arith.constant 0 : i32
    return %c0_i32, %c0_i32_0 : i32, i32
  }
  func.func @transform_2(%arg0: i32, %arg1: i32) -> (i32, i32) {
    %c0_i32 = arith.constant 0 : i32
    %c0_i32_0 = arith.constant 0 : i32
    return %arg0, %c0_i32 : i32, i32
  }
}

</mosaic_0001>

<llo_original>
// kernel: _forward.1
$region0: #{_forward.1}
  #allocation0 [shape = 'u32[]', space=smem, size = 0x4, offset = 0x4, fixed_abs, tag = 'smem constant byte address 0x4 - core index']
  #allocation1 [shape = 'u32[144,128]{1,0:T(1,128)}', space=vmem, size = 0x12000, scoped, tag = 'internal scratch']
  #allocation2 [shape = 'f32[8,128]{1,0:T(8,128)}', space=vmem, size = 0x1000, scoped, tag = 'scratch operand']
  #allocation3 [shape = 'f32[8,128]{1,0:T(8,128)}', space=vmem, size = 0x1000, scoped, tag = 'scratch operand']
  %s0 = inlined_call_operand.vmem [shape: f32[8,8,512], index: 0, kind: input, shape index: {}]
  %s1 = inlined_call_operand.vmem [shape: f32[128,512], index: 1, kind: input, shape index: {}]
  %s2 = inlined_call_operand.vmem [shape: f32[8,128], index: 2, kind: output, shape index: {}]
  %s3 = sld [smem:[#allocation0]]
  $region26: #{_forward.1} parent=0
    _
  %s5 = ssub.s32 1, %s3
  %s6 = scalar_select 0, %s5, %s3
  // Predicated region
  $region2: #{_forward.1} parent=0 // pred_check
    _
  $region3: #{_forward.1} parent=0 // pred_check_branch
    %8 = sbr.rel (0) target = $region5
  $region4: #{_forward.1} parent=0 // pred_region
    _
  $region5: #{_forward.1} parent=0 // pred_fallthru
    _
  // Predicated region
  $region6: #{_forward.1} parent=0 // pred_check
    _
  $region7: #{_forward.1} parent=0 // pred_check_branch
    %10 = sbr.rel (0) target = $region9
  $region8: #{_forward.1} parent=0 // pred_region
    _
  $region9: #{_forward.1} parent=0 // pred_fallthru
    _
  %p11 = scmp.eq.s32.totalorder 0, 0
  // Predicated region
  $region10: #{_forward.1} parent=0 // pred_check
    %p12 = pneg %p11
  $region11: #{_forward.1} parent=0 // pred_check_branch
    %14 = sbr.rel (%p12) target = $region13
  $region12: #{_forward.1} parent=0 // pred_region
    %15 = vst [vmem:[#allocation2] sm:$0xff] 0.0
    %16 = vst [vmem:[#allocation3] sm:$0xff] 0.0
  $region13: #{_forward.1} parent=0 // pred_fallthru
    _
  %v17 = vld [vmem:[#allocation2] sm:$0xff]
  %v18 = vld [vmem:[#allocation3] sm:$0xff]
  %v19 = vld [vmem:[%s0] sm:$0xff]
  %v20 = vld [vmem:[%s0 + $0x8] sm:$0xff]
  %v21 = vld [vmem:[%s0 + $0x10] sm:$0xff]
  %v22 = vld [vmem:[%s0 + $0x18] sm:$0xff]
  %v23 = vld [vmem:[%s1] sm:$0xff]
  %v24 = vld [vmem:[%s1 + $0x8] sm:$0xff]
  %v25 = vld [vmem:[%s1 + $0x10] sm:$0xff]
  %v26 = vld [vmem:[%s1 + $0x18] sm:$0xff]
  %v27 = vld [vmem:[%s1 + $0x20] sm:$0xff]
  %v28 = vld [vmem:[%s1 + $0x28] sm:$0xff]
  %v29 = vld [vmem:[%s1 + $0x30] sm:$0xff]
  %v30 = vld [vmem:[%s1 + $0x38] sm:$0xff]
  %v31 = vld [vmem:[%s1 + $0x40] sm:$0xff]
  %v32 = vld [vmem:[%s1 + $0x48] sm:$0xff]
  %v33 = vld [vmem:[%s1 + $0x50] sm:$0xff]
  %v34 = vld [vmem:[%s1 + $0x58] sm:$0xff]
  %v35 = vld [vmem:[%s1 + $0x60] sm:$0xff]
  %v36 = vld [vmem:[%s1 + $0x68] sm:$0xff]
  %v37 = vld [vmem:[%s1 + $0x70] sm:$0xff]
  %v38 = vld [vmem:[%s1 + $0x78] sm:$0xff]
  %v39 = vld [vmem:[%s1 + $0x80] sm:$0xff]
  %v40 = vld [vmem:[%s1 + $0x88] sm:$0xff]
  %v41 = vld [vmem:[%s1 + $0x90] sm:$0xff]
  %v42 = vld [vmem:[%s1 + $0x98] sm:$0xff]
  %v43 = vld [vmem:[%s1 + $0xa0] sm:$0xff]
  %v44 = vld [vmem:[%s1 + $0xa8] sm:$0xff]
  %v45 = vld [vmem:[%s1 + $0xb0] sm:$0xff]
  %v46 = vld [vmem:[%s1 + $0xb8] sm:$0xff]
  %v47 = vld [vmem:[%s1 + $0xc0] sm:$0xff]
  %v48 = vld [vmem:[%s1 + $0xc8] sm:$0xff]
  %v49 = vld [vmem:[%s1 + $0xd0] sm:$0xff]
  %v50 = vld [vmem:[%s1 + $0xd8] sm:$0xff]
  %v51 = vld [vmem:[%s1 + $0xe0] sm:$0xff]
  %v52 = vld [vmem:[%s1 + $0xe8] sm:$0xff]
  %v53 = vld [vmem:[%s1 + $0xf0] sm:$0xff]
  %v54 = vld [vmem:[%s1 + $0xf8] sm:$0xff]
  %v55 = vld [vmem:[%s1 + $0x100] sm:$0xff]
  %v56 = vld [vmem:[%s1 + $0x108] sm:$0xff]
  %v57 = vld [vmem:[%s1 + $0x110] sm:$0xff]
  %v58 = vld [vmem:[%s1 + $0x118] sm:$0xff]
  %v59 = vld [vmem:[%s1 + $0x120] sm:$0xff]
  %v60 = vld [vmem:[%s1 + $0x128] sm:$0xff]
  %v61 = vld [vmem:[%s1 + $0x130] sm:$0xff]
  %v62 = vld [vmem:[%s1 + $0x138] sm:$0xff]
  %v63 = vld [vmem:[%s1 + $0x140] sm:$0xff]
  %v64 = vld [vmem:[%s1 + $0x148] sm:$0xff]
  %v65 = vld [vmem:[%s1 + $0x150] sm:$0xff]
  %v66 = vld [vmem:[%s1 + $0x158] sm:$0xff]
  %v67 = vld [vmem:[%s1 + $0x160] sm:$0xff]
  %v68 = vld [vmem:[%s1 + $0x168] sm:$0xff]
  %v69 = vld [vmem:[%s1 + $0x170] sm:$0xff]
  %v70 = vld [vmem:[%s1 + $0x178] sm:$0xff]
  %v71 = vld [vmem:[%s1 + $0x180] sm:$0xff]
  %v72 = vld [vmem:[%s1 + $0x188] sm:$0xff]
  %v73 = vld [vmem:[%s1 + $0x190] sm:$0xff]
  %v74 = vld [vmem:[%s1 + $0x198] sm:$0xff]
  %v75 = vld [vmem:[%s1 + $0x1a0] sm:$0xff]
  %v76 = vld [vmem:[%s1 + $0x1a8] sm:$0xff]
  %v77 = vld [vmem:[%s1 + $0x1b0] sm:$0xff]
  %v78 = vld [vmem:[%s1 + $0x1b8] sm:$0xff]
  %v79 = vld [vmem:[%s1 + $0x1c0] sm:$0xff]
  %v80 = vld [vmem:[%s1 + $0x1c8] sm:$0xff]
  %v81 = vld [vmem:[%s1 + $0x1d0] sm:$0xff]
  %v82 = vld [vmem:[%s1 + $0x1d8] sm:$0xff]
  %v83 = vld [vmem:[%s1 + $0x1e0] sm:$0xff]
  %v84 = vld [vmem:[%s1 + $0x1e8] sm:$0xff]
  %v85 = vld [vmem:[%s1 + $0x1f0] sm:$0xff]
  %v86 = vld [vmem:[%s1 + $0x1f8] sm:$0xff]
  %87 = vmatprep.subr.mxu0 %v24
  %88 = vmatpush1.msra.mxu0 %v23
  %89 = vmatprep.subr.mxu0 %v28
  %90 = vmatpush1.msra.mxu0 %v27
  %91 = vmatprep.subr.mxu0 %v32
  %92 = vmatpush1.msra.mxu0 %v31
  %93 = vmatprep.subr.mxu0 %v36
  %94 = vmatpush1.msra.mxu0 %v35
  %95 = vmatprep.subr.mxu0 %v40
  %96 = vmatpush1.msra.mxu0 %v39
  %97 = vmatprep.subr.mxu0 %v44
  %98 = vmatpush1.msra.mxu0 %v43
  %99 = vmatprep.subr.mxu0 %v48
  %100 = vmatpush1.msra.mxu0 %v47
  %101 = vmatprep.subr.mxu0 %v52
  %102 = vmatpush1.msra.mxu0 %v51
  %103 = vmatprep.subr.mxu0 %v56
  %104 = vmatpush1.msra.mxu0 %v55
  %105 = vmatprep.subr.mxu0 %v60
  %106 = vmatpush1.msra.mxu0 %v59
  %107 = vmatprep.subr.mxu0 %v64
  %108 = vmatpush1.msra.mxu0 %v63
  %109 = vmatprep.subr.mxu0 %v68
  %110 = vmatpush1.msra.mxu0 %v67
  %111 = vmatprep.subr.mxu0 %v72
  %112 = vmatpush1.msra.mxu0 %v71
  %113 = vmatprep.subr.mxu0 %v76
  %114 = vmatpush1.msra.mxu0 %v75
  %115 = vmatprep.subr.mxu0 %v80
  %116 = vmatpush1.msra.mxu0 %v79
  %117 = vmatprep.subr.mxu0 %v84
  %118 = vmatpush1.msra.mxu0 %v83
  %119 = vmatprep.subr.mxu0 0.0
  %120 = vmatpush1.msra.mxu0 0.0
  %121 = vmatprep.subr.mxu0 0.0
  %122 = vmatpush1.msra.mxu0 0.0
  %123 = vmatprep.subr.mxu0 0.0
  %124 = vmatpush1.msra.mxu0 0.0
  %125 = vmatprep.subr.mxu0 0.0
  %126 = vmatpush1.msra.mxu0 0.0
  %127 = vmatprep.subr.mxu0 0.0
  %128 = vmatpush1.msra.mxu0 0.0
  %129 = vmatprep.subr.mxu0 0.0
  %130 = vmatpush1.msra.mxu0 0.0
  %131 = vmatprep.subr.mxu0 0.0
  %132 = vmatpush1.msra.mxu0 0.0
  %133 = vmatprep.subr.mxu0 0.0
  %134 = vmatpush1.msra.mxu0 0.0
  %135 = vmatprep.subr.mxu0 0.0
  %136 = vmatpush1.msra.mxu0 0.0
  %137 = vmatprep.subr.mxu0 0.0
  %138 = vmatpush1.msra.mxu0 0.0
  %139 = vmatprep.subr.mxu0 0.0
  %140 = vmatpush1.msra.mxu0 0.0
  %141 = vmatprep.subr.mxu0 0.0
  %142 = vmatpush1.msra.mxu0 0.0
  %143 = vmatprep.subr.mxu0 0.0
  %144 = vmatpush1.msra.mxu0 0.0
  %145 = vmatprep.subr.mxu0 0.0
  %146 = vmatpush1.msra.mxu0 0.0
  %147 = vmatprep.subr.mxu0 0.0
  %148 = vmatpush1.msra.mxu0 0.0
  %149 = vmatprep.subr.mxu0 0.0
  %150 = vmatpush1.msra.mxu0 0.0
  %151 = vmatprep.mubr.f32.mxu0 0.0
  %152 = vmatmul.mubr.f32.gmra.mrb[0].mxu0 %v17
  %v153 = vpop.f32.mrb[0].mxu0
  %v154 = vadd.f32 0.0, %v153
  %v155 = vpop.f32.mrb[0].mxu0
  %v156 = vadd.f32 0.0, %v155
  %157 = vdwg.mxu0
  %158 = vmatprep.subr.mxu0 %v26
  %159 = vmatpush1.msra.mxu0 %v25
  %160 = vmatprep.subr.mxu0 %v30
  %161 = vmatpush1.msra.mxu0 %v29
  %162 = vmatprep.subr.mxu0 %v34
  %163 = vmatpush1.msra.mxu0 %v33
  %164 = vmatprep.subr.mxu0 %v38
  %165 = vmatpush1.msra.mxu0 %v37
  %166 = vmatprep.subr.mxu0 %v42
  %167 = vmatpush1.msra.mxu0 %v41
  %168 = vmatprep.subr.mxu0 %v46
  %169 = vmatpush1.msra.mxu0 %v45
  %170 = vmatprep.subr.mxu0 %v50
  %171 = vmatpush1.msra.mxu0 %v49
  %172 = vmatprep.subr.mxu0 %v54
  %173 = vmatpush1.msra.mxu0 %v53
  %174 = vmatprep.subr.mxu0 %v58
  %175 = vmatpush1.msra.mxu0 %v57
  %176 = vmatprep.subr.mxu0 %v62
  %177 = vmatpush1.msra.mxu0 %v61
  %178 = vmatprep.subr.mxu0 %v66
  %179 = vmatpush1.msra.mxu0 %v65
  %180 = vmatprep.subr.mxu0 %v70
  %181 = vmatpush1.msra.mxu0 %v69
  %182 = vmatprep.subr.mxu0 %v74
  %183 = vmatpush1.msra.mxu0 %v73
  %184 = vmatprep.subr.mxu0 %v78
  %185 = vmatpush1.msra.mxu0 %v77
  %186 = vmatprep.subr.mxu0 %v82
  %187 = vmatpush1.msra.mxu0 %v81
  %188 = vmatprep.subr.mxu0 %v86
  %189 = vmatpush1.msra.mxu0 %v85
  %190 = vmatprep.subr.mxu0 0.0
  %191 = vmatpush1.msra.mxu0 0.0
  %192 = vmatprep.subr.mxu0 0.0
  %193 = vmatpush1.msra.mxu0 0.0
  %194 = vmatprep.subr.mxu0 0.0
  %195 = vmatpush1.msra.mxu0 0.0
  %196 = vmatprep.subr.mxu0 0.0
  %197 = vmatpush1.msra.mxu0 0.0
  %198 = vmatprep.subr.mxu0 0.0
  %199 = vmatpush1.msra.mxu0 0.0
  %200 = vmatprep.subr.mxu0 0.0
  %201 = vmatpush1.msra.mxu0 0.0
  %202 = vmatprep.subr.mxu0 0.0
  %203 = vmatpush1.msra.mxu0 0.0
  %204 = vmatprep.subr.mxu0 0.0
  %205 = vmatpush1.msra.mxu0 0.0
  %206 = vmatprep.subr.mxu0 0.0
  %207 = vmatpush1.msra.mxu0 0.0
  %208 = vmatprep.subr.mxu0 0.0
  %209 = vmatpush1.msra.mxu0 0.0
  %210 = vmatprep.subr.mxu0 0.0
  %211 = vmatpush1.msra.mxu0 0.0
  %212 = vmatprep.subr.mxu0 0.0
  %213 = vmatpush1.msra.mxu0 0.0
  %214 = vmatprep.subr.mxu0 0.0
  %215 = vmatpush1.msra.mxu0 0.0
  %216 = vmatprep.subr.mxu0 0.0
  %217 = vmatpush1.msra.mxu0 0.0
  %218 = vmatprep.subr.mxu0 0.0
  %219 = vmatpush1.msra.mxu0 0.0
  %220 = vmatprep.subr.mxu0 0.0
  %221 = vmatpush1.msra.mxu0 0.0
  %222 = vmatprep.mubr.f32.mxu0 0.0
  %223 = vmatmul.mubr.f32.gmra.mrb[0].mxu0 %v17
  %v224 = vpop.f32.mrb[0].mxu0
  %v225 = vadd.f32 0.0, %v224
  %v226 = vpop.f32.mrb[0].mxu0
  %v227 = vadd.f32 0.0, %v226
  %228 = vdwg.mxu0
  %v229 = vadd.f32 %v19, %v154
  %v230 = vadd.f32 %v20, %v156
  %v231 = vadd.f32 %v21, %v225
  %v232 = vadd.f32 %v22, %v227
  %v233 = vmul.f32 %v229, 0.5
  %v234 = vmul.f32 %v230, 0.5
  %v235 = vmul.f32 %v231, 0.5
  %v236 = vtanh.pop %v233
  %v237 = vtanh.pop %v234
  %v238 = vtanh.pop %v235
  %v239 = vmul.f32 %v236, 0.5
  %v240 = vmul.f32 %v237, 0.5
  %v241 = vmul.f32 %v238, 0.5
  %v242 = vadd.f32 %v239, 0.5
  %v243 = vadd.f32 %v240, 0.5
  %v244 = vadd.f32 %v241, 0.5
  %v245 = vtanh.pop %v232
  %v246 = vmul.f32 %v243, %v18
  %v247 = vmul.f32 %v242, %v245
  %v248 = vadd.f32 %v246, %v247
  %v249 = vtanh.pop %v248
  %v250 = vmul.f32 %v244, %v249
  %s251 = scalar_lea.vmem %s0, 32
  %v252 = vld [vmem:[%s251] sm:$0xff]
  %v253 = vld [vmem:[%s251 + $0x8] sm:$0xff]
  %v254 = vld [vmem:[%s251 + $0x10] sm:$0xff]
  %v255 = vld [vmem:[%s251 + $0x18] sm:$0xff]
  %256 = vmatprep.subr.mxu0 %v24
  %257 = vmatpush1.msra.mxu0 %v23
  %258 = vmatprep.subr.mxu0 %v28
  %259 = vmatpush1.msra.mxu0 %v27
  %260 = vmatprep.subr.mxu0 %v32
  %261 = vmatpush1.msra.mxu0 %v31
  %262 = vmatprep.subr.mxu0 %v36
  %263 = vmatpush1.msra.mxu0 %v35
  %264 = vmatprep.subr.mxu0 %v40
  %265 = vmatpush1.msra.mxu0 %v39
  %266 = vmatprep.subr.mxu0 %v44
  %267 = vmatpush1.msra.mxu0 %v43
  %268 = vmatprep.subr.mxu0 %v48
  %269 = vmatpush1.msra.mxu0 %v47
  %270 = vmatprep.subr.mxu0 %v52
  %271 = vmatpush1.msra.mxu0 %v51
  %272 = vmatprep.subr.mxu0 %v56
  %273 = vmatpush1.msra.mxu0 %v55
  %274 = vmatprep.subr.mxu0 %v60
  %275 = vmatpush1.msra.mxu0 %v59
  %276 = vmatprep.subr.mxu0 %v64
  %277 = vmatpush1.msra.mxu0 %v63
  %278 = vmatprep.subr.mxu0 %v68
  %279 = vmatpush1.msra.mxu0 %v67
  %280 = vmatprep.subr.mxu0 %v72
  %281 = vmatpush1.msra.mxu0 %v71
  %282 = vmatprep.subr.mxu0 %v76
  %283 = vmatpush1.msra.mxu0 %v75
  %284 = vmatprep.subr.mxu0 %v80
  %285 = vmatpush1.msra.mxu0 %v79
  %286 = vmatprep.subr.mxu0 %v84
  %287 = vmatpush1.msra.mxu0 %v83
  %288 = vmatprep.subr.mxu0 0.0
  %289 = vmatpush1.msra.mxu0 0.0
  %290 = vmatprep.subr.mxu0 0.0
  %291 = vmatpush1.msra.mxu0 0.0
  %292 = vmatprep.subr.mxu0 0.0
  %293 = vmatpush1.msra.mxu0 0.0
  %294 = vmatprep.subr.mxu0 0.0
  %295 = vmatpush1.msra.mxu0 0.0
  %296 = vmatprep.subr.mxu0 0.0
  %297 = vmatpush1.msra.mxu0 0.0
  %298 = vmatprep.subr.mxu0 0.0
  %299 = vmatpush1.msra.mxu0 0.0
  %300 = vmatprep.subr.mxu0 0.0
  %301 = vmatpush1.msra.mxu0 0.0
  %302 = vmatprep.subr.mxu0 0.0
  %303 = vmatpush1.msra.mxu0 0.0
  %304 = vmatprep.subr.mxu0 0.0
  %305 = vmatpush1.msra.mxu0 0.0
  %306 = vmatprep.subr.mxu0 0.0
  %307 = vmatpush1.msra.mxu0 0.0
  %308 = vmatprep.subr.mxu0 0.0
  %309 = vmatpush1.msra.mxu0 0.0
  %310 = vmatprep.subr.mxu0 0.0
  %311 = vmatpush1.msra.mxu0 0.0
  %312 = vmatprep.subr.mxu0 0.0
  %313 = vmatpush1.msra.mxu0 0.0
  %314 = vmatprep.subr.mxu0 0.0
  %315 = vmatpush1.msra.mxu0 0.0
  %316 = vmatprep.subr.mxu0 0.0
  %317 = vmatpush1.msra.mxu0 0.0
  %318 = vmatprep.subr.mxu0 0.0
  %319 = vmatpush1.msra.mxu0 0.0
  %320 = vmatprep.mubr.f32.mxu0 0.0
  %321 = vmatmul.mubr.f32.gmra.mrb[0].mxu0 %v250
  %v322 = vpop.f32.mrb[0].mxu0
  %v323 = vadd.f32 0.0, %v322
  %v324 = vpop.f32.mrb[0].mxu0
  %v325 = vadd.f32 0.0, %v324
  %326 = vdwg.mxu0
  %327 = vmatprep.subr.mxu0 %v26
  %328 = vmatpush1.msra.mxu0 %v25
  %329 = vmatprep.subr.mxu0 %v30
  %330 = vmatpush1.msra.mxu0 %v29
  %331 = vmatprep.subr.mxu0 %v34
  %332 = vmatpush1.msra.mxu0 %v33
  %333 = vmatprep.subr.mxu0 %v38
  %334 = vmatpush1.msra.mxu0 %v37
  %335 = vmatprep.subr.mxu0 %v42
  %336 = vmatpush1.msra.mxu0 %v41
  %337 = vmatprep.subr.mxu0 %v46
  %338 = vmatpush1.msra.mxu0 %v45
  %339 = vmatprep.subr.mxu0 %v50
  %340 = vmatpush1.msra.mxu0 %v49
  %341 = vmatprep.subr.mxu0 %v54
  %342 = vmatpush1.msra.mxu0 %v53
  %343 = vmatprep.subr.mxu0 %v58
  %344 = vmatpush1.msra.mxu0 %v57
  %345 = vmatprep.subr.mxu0 %v62
  %346 = vmatpush1.msra.mxu0 %v61
  %347 = vmatprep.subr.mxu0 %v66
  %348 = vmatpush1.msra.mxu0 %v65
  %349 = vmatprep.subr.mxu0 %v70
  %350 = vmatpush1.msra.mxu0 %v69
  %351 = vmatprep.subr.mxu0 %v74
  %352 = vmatpush1.msra.mxu0 %v73
  %353 = vmatprep.subr.mxu0 %v78
  %354 = vmatpush1.msra.mxu0 %v77
  %355 = vmatprep.subr.mxu0 %v82
  %356 = vmatpush1.msra.mxu0 %v81
  %357 = vmatprep.subr.mxu0 %v86
  %358 = vmatpush1.msra.mxu0 %v85
  %359 = vmatprep.subr.mxu0 0.0
  %360 = vmatpush1.msra.mxu0 0.0
  %361 = vmatprep.subr.mxu0 0.0
  %362 = vmatpush1.msra.mxu0 0.0
  %363 = vmatprep.subr.mxu0 0.0
  %364 = vmatpush1.msra.mxu0 0.0
  %365 = vmatprep.subr.mxu0 0.0
  %366 = vmatpush1.msra.mxu0 0.0
  %367 = vmatprep.subr.mxu0 0.0
  %368 = vmatpush1.msra.mxu0 0.0
  %369 = vmatprep.subr.mxu0 0.0
  %370 = vmatpush1.msra.mxu0 0.0
  %371 = vmatprep.subr.mxu0 0.0
  %372 = vmatpush1.msra.mxu0 0.0
  %373 = vmatprep.subr.mxu0 0.0
  %374 = vmatpush1.msra.mxu0 0.0
  %375 = vmatprep.subr.mxu0 0.0
  %376 = vmatpush1.msra.mxu0 0.0
  %377 = vmatprep.subr.mxu0 0.0
  %378 = vmatpush1.msra.mxu0 0.0
  %379 = vmatprep.subr.mxu0 0.0
  %380 = vmatpush1.msra.mxu0 0.0
  %381 = vmatprep.subr.mxu0 0.0
  %382 = vmatpush1.msra.mxu0 0.0
  %383 = vmatprep.subr.mxu0 0.0
  %384 = vmatpush1.msra.mxu0 0.0
  %385 = vmatprep.subr.mxu0 0.0
  %386 = vmatpush1.msra.mxu0 0.0
  %387 = vmatprep.subr.mxu0 0.0
  %388 = vmatpush1.msra.mxu0 0.0
  %389 = vmatprep.subr.mxu0 0.0
  %390 = vmatpush1.msra.mxu0 0.0
  %391 = vmatprep.mubr.f32.mxu0 0.0
  %392 = vmatmul.mubr.f32.gmra.mrb[0].mxu0 %v250
  %v393 = vpop.f32.mrb[0].mxu0
  %v394 = vadd.f32 0.0, %v393
  %v395 = vpop.f32.mrb[0].mxu0
  %v396 = vadd.f32 0.0, %v395
  %397 = vdwg.mxu0
  %v398 = vadd.f32 %v252, %v323
  %v399 = vadd.f32 %v253, %v325
  %v400 = vadd.f32 %v254, %v394
  %v401 = vadd.f32 %v255, %v396
  %v402 = vmul.f32 %v398, 0.5
  %v403 = vmul.f32 %v399, 0.5
  %v404 = vmul.f32 %v400, 0.5
  %v405 = vtanh.pop %v402
  %v406 = vtanh.pop %v403
  %v407 = vtanh.pop %v404
  %v408 = vmul.f32 %v405, 0.5
  %v409 = vmul.f32 %v406, 0.5
  %v410 = vmul.f32 %v407, 0.5
  %v411 = vadd.f32 %v408, 0.5
  %v412 = vadd.f32 %v409, 0.5
  %v413 = vadd.f32 %v410, 0.5
  %v414 = vtanh.pop %v401
  %v415 = vmul.f32 %v412, %v248
  %v416 = vmul.f32 %v411, %v414
  %v417 = vadd.f32 %v415, %v416
  %v418 = vtanh.pop %v417
  %v419 = vmul.f32 %v413, %v418
  %s420 = scalar_lea.vmem %s0, 64
  %v421 = vld [vmem:[%s420] sm:$0xff]
  %v422 = vld [vmem:[%s420 + $0x8] sm:$0xff]
  %v423 = vld [vmem:[%s420 + $0x10] sm:$0xff]
  %v424 = vld [vmem:[%s420 + $0x18] sm:$0xff]
  %425 = vmatprep.subr.mxu0 %v24
  %426 = vmatpush1.msra.mxu0 %v23
  %427 = vmatprep.subr.mxu0 %v28
  %428 = vmatpush1.msra.mxu0 %v27
  %429 = vmatprep.subr.mxu0 %v32
  %430 = vmatpush1.msra.mxu0 %v31
  %431 = vmatprep.subr.mxu0 %v36
  %432 = vmatpush1.msra.mxu0 %v35
  %433 = vmatprep.subr.mxu0 %v40
  %434 = vmatpush1.msra.mxu0 %v39
  %435 = vmatprep.subr.mxu0 %v44
  %436 = vmatpush1.msra.mxu0 %v43
  %437 = vmatprep.subr.mxu0 %v48
  %438 = vmatpush1.msra.mxu0 %v47
  %439 = vmatprep.subr.mxu0 %v52
  %440 = vmatpush1.msra.mxu0 %v51
  %441 = vmatprep.subr.mxu0 %v56
  %442 = vmatpush1.msra.mxu0 %v55
  %443 = vmatprep.subr.mxu0 %v60
  %444 = vmatpush1.msra.mxu0 %v59
  %445 = vmatprep.subr.mxu0 %v64
  %446 = vmatpush1.msra.mxu0 %v63
  %447 = vmatprep.subr.mxu0 %v68
  %448 = vmatpush1.msra.mxu0 %v67
  %449 = vmatprep.subr.mxu0 %v72
  %450 = vmatpush1.msra.mxu0 %v71
  %451 = vmatprep.subr.mxu0 %v76
  %452 = vmatpush1.msra.mxu0 %v75
  %453 = vmatprep.subr.mxu0 %v80
  %454 = vmatpush1.msra.mxu0 %v79
  %455 = vmatprep.subr.mxu0 %v84
  %456 = vmatpush1.msra.mxu0 %v83
  %457 = vmatprep.subr.mxu0 0.0
  %458 = vmatpush1.msra.mxu0 0.0
  %459 = vmatprep.subr.mxu0 0.0
  %460 = vmatpush1.msra.mxu0 0.0
  %461 = vmatprep.subr.mxu0 0.0
  %462 = vmatpush1.msra.mxu0 0.0
  %463 = vmatprep.subr.mxu0 0.0
  %464 = vmatpush1.msra.mxu0 0.0
  %465 = vmatprep.subr.mxu0 0.0
  %466 = vmatpush1.msra.mxu0 0.0
  %467 = vmatprep.subr.mxu0 0.0
  %468 = vmatpush1.msra.mxu0 0.0
  %469 = vmatprep.subr.mxu0 0.0
  %470 = vmatpush1.msra.mxu0 0.0
  %471 = vmatprep.subr.mxu0 0.0
  %472 = vmatpush1.msra.mxu0 0.0
  %473 = vmatprep.subr.mxu0 0.0
  %474 = vmatpush1.msra.mxu0 0.0
  %475 = vmatprep.subr.mxu0 0.0
  %476 = vmatpush1.msra.mxu0 0.0
  %477 = vmatprep.subr.mxu0 0.0
  %478 = vmatpush1.msra.mxu0 0.0
  %479 = vmatprep.subr.mxu0 0.0
  %480 = vmatpush1.msra.mxu0 0.0
  %481 = vmatprep.subr.mxu0 0.0
  %482 = vmatpush1.msra.mxu0 0.0
  %483 = vmatprep.subr.mxu0 0.0
  %484 = vmatpush1.msra.mxu0 0.0
  %485 = vmatprep.subr.mxu0 0.0
  %486 = vmatpush1.msra.mxu0 0.0
  %487 = vmatprep.subr.mxu0 0.0
  %488 = vmatpush1.msra.mxu0 0.0
  %489 = vmatprep.mubr.f32.mxu0 0.0
  %490 = vmatmul.mubr.f32.gmra.mrb[0].mxu0 %v419
  %v491 = vpop.f32.mrb[0].mxu0
  %v492 = vadd.f32 0.0, %v491
  %v493 = vpop.f32.mrb[0].mxu0
  %v494 = vadd.f32 0.0, %v493
  %495 = vdwg.mxu0
  %496 = vmatprep.subr.mxu0 %v26
  %497 = vmatpush1.msra.mxu0 %v25
  %498 = vmatprep.subr.mxu0 %v30
  %499 = vmatpush1.msra.mxu0 %v29
  %500 = vmatprep.subr.mxu0 %v34
  %501 = vmatpush1.msra.mxu0 %v33
  %502 = vmatprep.subr.mxu0 %v38
  %503 = vmatpush1.msra.mxu0 %v37
  %504 = vmatprep.subr.mxu0 %v42
  %505 = vmatpush1.msra.mxu0 %v41
  %506 = vmatprep.subr.mxu0 %v46
  %507 = vmatpush1.msra.mxu0 %v45
  %508 = vmatprep.subr.mxu0 %v50
  %509 = vmatpush1.msra.mxu0 %v49
  %510 = vmatprep.subr.mxu0 %v54
  %511 = vmatpush1.msra.mxu0 %v53
  %512 = vmatprep.subr.mxu0 %v58
  %513 = vmatpush1.msra.mxu0 %v57
  %514 = vmatprep.subr.mxu0 %v62
  %515 = vmatpush1.msra.mxu0 %v61
  %516 = vmatprep.subr.mxu0 %v66
  %517 = vmatpush1.msra.mxu0 %v65
  %518 = vmatprep.subr.mxu0 %v70
  %519 = vmatpush1.msra.mxu0 %v69
  %520 = vmatprep.subr.mxu0 %v74
  %521 = vmatpush1.msra.mxu0 %v73
  %522 = vmatprep.subr.mxu0 %v78
  %523 = vmatpush1.msra.mxu0 %v77
  %524 = vmatprep.subr.mxu0 %v82
  %525 = vmatpush1.msra.mxu0 %v81
  %526 = vmatprep.subr.mxu0 %v86
  %527 = vmatpush1.msra.mxu0 %v85
  %528 = vmatprep.subr.mxu0 0.0
  %529 = vmatpush1.msra.mxu0 0.0
  %530 = vmatprep.subr.mxu0 0.0
  %531 = vmatpush1.msra.mxu0 0.0
  %532 = vmatprep.subr.mxu0 0.0
  %533 = vmatpush1.msra.mxu0 0.0
  %534 = vmatprep.subr.mxu0 0.0
  %535 = vmatpush1.msra.mxu0 0.0
  %536 = vmatprep.subr.mxu0 0.0
  %537 = vmatpush1.msra.mxu0 0.0
  %538 = vmatprep.subr.mxu0 0.0
  %539 = vmatpush1.msra.mxu0 0.0
  %540 = vmatprep.subr.mxu0 0.0
  %541 = vmatpush1.msra.mxu0 0.0
  %542 = vmatprep.subr.mxu0 0.0
  %543 = vmatpush1.msra.mxu0 0.0
  %544 = vmatprep.subr.mxu0 0.0
  %545 = vmatpush1.msra.mxu0 0.0
  %546 = vmatprep.subr.mxu0 0.0
  %547 = vmatpush1.msra.mxu0 0.0
  %548 = vmatprep.subr.mxu0 0.0
  %549 = vmatpush1.msra.mxu0 0.0
  %550 = vmatprep.subr.mxu0 0.0
  %551 = vmatpush1.msra.mxu0 0.0
  %552 = vmatprep.subr.mxu0 0.0
  %553 = vmatpush1.msra.mxu0 0.0
  %554 = vmatprep.subr.mxu0 0.0
  %555 = vmatpush1.msra.mxu0 0.0
  %556 = vmatprep.subr.mxu0 0.0
  %557 = vmatpush1.msra.mxu0 0.0
  %558 = vmatprep.subr.mxu0 0.0
  %559 = vmatpush1.msra.mxu0 0.0
  %560 = vmatprep.mubr.f32.mxu0 0.0
  %561 = vmatmul.mubr.f32.gmra.mrb[0].mxu0 %v419
  %v562 = vpop.f32.mrb[0].mxu0
  %v563 = vadd.f32 0.0, %v562
  %v564 = vpop.f32.mrb[0].mxu0
  %v565 = vadd.f32 0.0, %v564
  %566 = vdwg.mxu0
  %v567 = vadd.f32 %v421, %v492
  %v568 = vadd.f32 %v422, %v494
  %v569 = vadd.f32 %v423, %v563
  %v570 = vadd.f32 %v424, %v565
  %v571 = vmul.f32 %v567, 0.5
  %v572 = vmul.f32 %v568, 0.5
  %v573 = vmul.f32 %v569, 0.5
  %v574 = vtanh.pop %v571
  %v575 = vtanh.pop %v572
  %v576 = vtanh.pop %v573
  %v577 = vmul.f32 %v574, 0.5
  %v578 = vmul.f32 %v575, 0.5
  %v579 = vmul.f32 %v576, 0.5
  %v580 = vadd.f32 %v577, 0.5
  %v581 = vadd.f32 %v578, 0.5
  %v582 = vadd.f32 %v579, 0.5
  %v583 = vtanh.pop %v570
  %v584 = vmul.f32 %v581, %v417
  %v585 = vmul.f32 %v580, %v583
  %v586 = vadd.f32 %v584, %v585
  %v587 = vtanh.pop %v586
  %v588 = vmul.f32 %v582, %v587
  %s589 = scalar_lea.vmem %s0, 96
  %v590 = vld [vmem:[%s589] sm:$0xff]
  %v591 = vld [vmem:[%s589 + $0x8] sm:$0xff]
  %v592 = vld [vmem:[%s589 + $0x10] sm:$0xff]
  %v593 = vld [vmem:[%s589 + $0x18] sm:$0xff]
  %594 = vmatprep.subr.mxu0 %v24
  %595 = vmatpush1.msra.mxu0 %v23
  %596 = vmatprep.subr.mxu0 %v28
  %597 = vmatpush1.msra.mxu0 %v27
  %598 = vmatprep.subr.mxu0 %v32
  %599 = vmatpush1.msra.mxu0 %v31
  %600 = vmatprep.subr.mxu0 %v36
  %601 = vmatpush1.msra.mxu0 %v35
  %602 = vmatprep.subr.mxu0 %v40
  %603 = vmatpush1.msra.mxu0 %v39
  %604 = vmatprep.subr.mxu0 %v44
  %605 = vmatpush1.msra.mxu0 %v43
  %606 = vmatprep.subr.mxu0 %v48
  %607 = vmatpush1.msra.mxu0 %v47
  %608 = vmatprep.subr.mxu0 %v52
  %609 = vmatpush1.msra.mxu0 %v51
  %610 = vmatprep.subr.mxu0 %v56
  %611 = vmatpush1.msra.mxu0 %v55
  %612 = vmatprep.subr.mxu0 %v60
  %613 = vmatpush1.msra.mxu0 %v59
  %614 = vmatprep.subr.mxu0 %v64
  %615 = vmatpush1.msra.mxu0 %v63
  %616 = vmatprep.subr.mxu0 %v68
  %617 = vmatpush1.msra.mxu0 %v67
  %618 = vmatprep.subr.mxu0 %v72
  %619 = vmatpush1.msra.mxu0 %v71
  %620 = vmatprep.subr.mxu0 %v76
  %621 = vmatpush1.msra.mxu0 %v75
  %622 = vmatprep.subr.mxu0 %v80
  %623 = vmatpush1.msra.mxu0 %v79
  %624 = vmatprep.subr.mxu0 %v84
  %625 = vmatpush1.msra.mxu0 %v83
  %626 = vmatprep.subr.mxu0 0.0
  %627 = vmatpush1.msra.mxu0 0.0
  %628 = vmatprep.subr.mxu0 0.0
  %629 = vmatpush1.msra.mxu0 0.0
  %630 = vmatprep.subr.mxu0 0.0
  %631 = vmatpush1.msra.mxu0 0.0
  %632 = vmatprep.subr.mxu0 0.0
  %633 = vmatpush1.msra.mxu0 0.0
  %634 = vmatprep.subr.mxu0 0.0
  %635 = vmatpush1.msra.mxu0 0.0
  %636 = vmatprep.subr.mxu0 0.0
  %637 = vmatpush1.msra.mxu0 0.0
  %638 = vmatprep.subr.mxu0 0.0
  %639 = vmatpush1.msra.mxu0 0.0
  %640 = vmatprep.subr.mxu0 0.0
  %641 = vmatpush1.msra.mxu0 0.0
  %642 = vmatprep.subr.mxu0 0.0
  %643 = vmatpush1.msra.mxu0 0.0
  %644 = vmatprep.subr.mxu0 0.0
  %645 = vmatpush1.msra.mxu0 0.0
  %646 = vmatprep.subr.mxu0 0.0
  %647 = vmatpush1.msra.mxu0 0.0
  %648 = vmatprep.subr.mxu0 0.0
  %649 = vmatpush1.msra.mxu0 0.0
  %650 = vmatprep.subr.mxu0 0.0
  %651 = vmatpush1.msra.mxu0 0.0
  %652 = vmatprep.subr.mxu0 0.0
  %653 = vmatpush1.msra.mxu0 0.0
  %654 = vmatprep.subr.mxu0 0.0
  %655 = vmatpush1.msra.mxu0 0.0
  %656 = vmatprep.subr.mxu0 0.0
  %657 = vmatpush1.msra.mxu0 0.0
  %658 = vmatprep.mubr.f32.mxu0 0.0
  %659 = vmatmul.mubr.f32.gmra.mrb[0].mxu0 %v588
  %v660 = vpop.f32.mrb[0].mxu0
  %v661 = vadd.f32 0.0, %v660
  %v662 = vpop.f32.mrb[0].mxu0
  %v663 = vadd.f32 0.0, %v662
  %664 = vdwg.mxu0
  %665 = vmatprep.subr.mxu0 %v26
  %666 = vmatpush1.msra.mxu0 %v25
  %667 = vmatprep.subr.mxu0 %v30
  %668 = vmatpush1.msra.mxu0 %v29
  %669 = vmatprep.subr.mxu0 %v34
  %670 = vmatpush1.msra.mxu0 %v33
  %671 = vmatprep.subr.mxu0 %v38
  %672 = vmatpush1.msra.mxu0 %v37
  %673 = vmatprep.subr.mxu0 %v42
  %674 = vmatpush1.msra.mxu0 %v41
  %675 = vmatprep.subr.mxu0 %v46
  %676 = vmatpush1.msra.mxu0 %v45
  %677 = vmatprep.subr.mxu0 %v50
  %678 = vmatpush1.msra.mxu0 %v49
  %679 = vmatprep.subr.mxu0 %v54
  %680 = vmatpush1.msra.mxu0 %v53
  %681 = vmatprep.subr.mxu0 %v58
  %682 = vmatpush1.msra.mxu0 %v57
  %683 = vmatprep.subr.mxu0 %v62
  %684 = vmatpush1.msra.mxu0 %v61
  %685 = vmatprep.subr.mxu0 %v66
  %686 = vmatpush1.msra.mxu0 %v65
  %687 = vmatprep.subr.mxu0 %v70
  %688 = vmatpush1.msra.mxu0 %v69
  %689 = vmatprep.subr.mxu0 %v74
  %690 = vmatpush1.msra.mxu0 %v73
  %691 = vmatprep.subr.mxu0 %v78
  %692 = vmatpush1.msra.mxu0 %v77
  %693 = vmatprep.subr.mxu0 %v82
  %694 = vmatpush1.msra.mxu0 %v81
  %695 = vmatprep.subr.mxu0 %v86
  %696 = vmatpush1.msra.mxu0 %v85
  %697 = vmatprep.subr.mxu0 0.0
  %698 = vmatpush1.msra.mxu0 0.0
  %699 = vmatprep.subr.mxu0 0.0
  %700 = vmatpush1.msra.mxu0 0.0
  %701 = vmatprep.subr.mxu0 0.0
  %702 = vmatpush1.msra.mxu0 0.0
  %703 = vmatprep.subr.mxu0 0.0
  %704 = vmatpush1.msra.mxu0 0.0
  %705 = vmatprep.subr.mxu0 0.0
  %706 = vmatpush1.msra.mxu0 0.0
  %707 = vmatprep.subr.mxu0 0.0
  %708 = vmatpush1.msra.mxu0 0.0
  %709 = vmatprep.subr.mxu0 0.0
  %710 = vmatpush1.msra.mxu0 0.0
  %711 = vmatprep.subr.mxu0 0.0
  %712 = vmatpush1.msra.mxu0 0.0
  %713 = vmatprep.subr.mxu0 0.0
  %714 = vmatpush1.msra.mxu0 0.0
  %715 = vmatprep.subr.mxu0 0.0
  %716 = vmatpush1.msra.mxu0 0.0
  %717 = vmatprep.subr.mxu0 0.0
  %718 = vmatpush1.msra.mxu0 0.0
  %719 = vmatprep.subr.mxu0 0.0
  %720 = vmatpush1.msra.mxu0 0.0
  %721 = vmatprep.subr.mxu0 0.0
  %722 = vmatpush1.msra.mxu0 0.0
  %723 = vmatprep.subr.mxu0 0.0
  %724 = vmatpush1.msra.mxu0 0.0
  %725 = vmatprep.subr.mxu0 0.0
  %726 = vmatpush1.msra.mxu0 0.0
  %727 = vmatprep.subr.mxu0 0.0
  %728 = vmatpush1.msra.mxu0 0.0
  %729 = vmatprep.mubr.f32.mxu0 0.0
  %730 = vmatmul.mubr.f32.gmra.mrb[0].mxu0 %v588
  %v731 = vpop.f32.mrb[0].mxu0
  %v732 = vadd.f32 0.0, %v731
  %v733 = vpop.f32.mrb[0].mxu0
  %v734 = vadd.f32 0.0, %v733
  %735 = vdwg.mxu0
  %v736 = vadd.f32 %v590, %v661
  %v737 = vadd.f32 %v591, %v663
  %v738 = vadd.f32 %v592, %v732
  %v739 = vadd.f32 %v593, %v734
  %v740 = vmul.f32 %v736, 0.5
  %v741 = vmul.f32 %v737, 0.5
  %v742 = vmul.f32 %v738, 0.5
  %v743 = vtanh.pop %v740
  %v744 = vtanh.pop %v741
  %v745 = vtanh.pop %v742
  %v746 = vmul.f32 %v743, 0.5
  %v747 = vmul.f32 %v744, 0.5
  %v748 = vmul.f32 %v745, 0.5
  %v749 = vadd.f32 %v746, 0.5
  %v750 = vadd.f32 %v747, 0.5
  %v751 = vadd.f32 %v748, 0.5
  %v752 = vtanh.pop %v739
  %v753 = vmul.f32 %v750, %v586
  %v754 = vmul.f32 %v749, %v752
  %v755 = vadd.f32 %v753, %v754
  %v756 = vtanh.pop %v755
  %v757 = vmul.f32 %v751, %v756
  %s758 = scalar_lea.vmem %s0, 128
  %v759 = vld [vmem:[%s758] sm:$0xff]
  %v760 = vld [vmem:[%s758 + $0x8] sm:$0xff]
  %v761 = vld [vmem:[%s758 + $0x10] sm:$0xff]
  %v762 = vld [vmem:[%s758 + $0x18] sm:$0xff]
  %763 = vmatprep.subr.mxu0 %v24
  %764 = vmatpush1.msra.mxu0 %v23
  %765 = vmatprep.subr.mxu0 %v28
  %766 = vmatpush1.msra.mxu0 %v27
  %767 = vmatprep.subr.mxu0 %v32
  %768 = vmatpush1.msra.mxu0 %v31
  %769 = vmatprep.subr.mxu0 %v36
  %770 = vmatpush1.msra.mxu0 %v35
  %771 = vmatprep.subr.mxu0 %v40
  %772 = vmatpush1.msra.mxu0 %v39
  %773 = vmatprep.subr.mxu0 %v44
  %774 = vmatpush1.msra.mxu0 %v43
  %775 = vmatprep.subr.mxu0 %v48
  %776 = vmatpush1.msra.mxu0 %v47
  %777 = vmatprep.subr.mxu0 %v52
  %778 = vmatpush1.msra.mxu0 %v51
  %779 = vmatprep.subr.mxu0 %v56
  %780 = vmatpush1.msra.mxu0 %v55
  %781 = vmatprep.subr.mxu0 %v60
  %782 = vmatpush1.msra.mxu0 %v59
  %783 = vmatprep.subr.mxu0 %v64
  %784 = vmatpush1.msra.mxu0 %v63
  %785 = vmatprep.subr.mxu0 %v68
  %786 = vmatpush1.msra.mxu0 %v67
  %787 = vmatprep.subr.mxu0 %v72
  %788 = vmatpush1.msra.mxu0 %v71
  %789 = vmatprep.subr.mxu0 %v76
  %790 = vmatpush1.msra.mxu0 %v75
  %791 = vmatprep.subr.mxu0 %v80
  %792 = vmatpush1.msra.mxu0 %v79
  %793 = vmatprep.subr.mxu0 %v84
  %794 = vmatpush1.msra.mxu0 %v83
  %795 = vmatprep.subr.mxu0 0.0
  %796 = vmatpush1.msra.mxu0 0.0
  %797 = vmatprep.subr.mxu0 0.0
  %798 = vmatpush1.msra.mxu0 0.0
  %799 = vmatprep.subr.mxu0 0.0
  %800 = vmatpush1.msra.mxu0 0.0
  %801 = vmatprep.subr.mxu0 0.0
  %802 = vmatpush1.msra.mxu0 0.0
  %803 = vmatprep.subr.mxu0 0.0
  %804 = vmatpush1.msra.mxu0 0.0
  %805 = vmatprep.subr.mxu0 0.0
  %806 = vmatpush1.msra.mxu0 0.0
  %807 = vmatprep.subr.mxu0 0.0
  %808 = vmatpush1.msra.mxu0 0.0
  %809 = vmatprep.subr.mxu0 0.0
  %810 = vmatpush1.msra.mxu0 0.0
  %811 = vmatprep.subr.mxu0 0.0
  %812 = vmatpush1.msra.mxu0 0.0
  %813 = vmatprep.subr.mxu0 0.0
  %814 = vmatpush1.msra.mxu0 0.0
  %815 = vmatprep.subr.mxu0 0.0
  %816 = vmatpush1.msra.mxu0 0.0
  %817 = vmatprep.subr.mxu0 0.0
  %818 = vmatpush1.msra.mxu0 0.0
  %819 = vmatprep.subr.mxu0 0.0
  %820 = vmatpush1.msra.mxu0 0.0
  %821 = vmatprep.subr.mxu0 0.0
  %822 = vmatpush1.msra.mxu0 0.0
  %823 = vmatprep.subr.mxu0 0.0
  %824 = vmatpush1.msra.mxu0 0.0
  %825 = vmatprep.subr.mxu0 0.0
  %826 = vmatpush1.msra.mxu0 0.0
  %827 = vmatprep.mubr.f32.mxu0 0.0
  %828 = vmatmul.mubr.f32.gmra.mrb[0].mxu0 %v757
  %v829 = vpop.f32.mrb[0].mxu0
  %v830 = vadd.f32 0.0, %v829
  %v831 = vpop.f32.mrb[0].mxu0
  %v832 = vadd.f32 0.0, %v831
  %833 = vdwg.mxu0
  %834 = vmatprep.subr.mxu0 %v26
  %835 = vmatpush1.msra.mxu0 %v25
  %836 = vmatprep.subr.mxu0 %v30
  %837 = vmatpush1.msra.mxu0 %v29
  %838 = vmatprep.subr.mxu0 %v34
  %839 = vmatpush1.msra.mxu0 %v33
  %840 = vmatprep.subr.mxu0 %v38
  %841 = vmatpush1.msra.mxu0 %v37
  %842 = vmatprep.subr.mxu0 %v42
  %843 = vmatpush1.msra.mxu0 %v41
  %844 = vmatprep.subr.mxu0 %v46
  %845 = vmatpush1.msra.mxu0 %v45
  %846 = vmatprep.subr.mxu0 %v50
  %847 = vmatpush1.msra.mxu0 %v49
  %848 = vmatprep.subr.mxu0 %v54
  %849 = vmatpush1.msra.mxu0 %v53
  %850 = vmatprep.subr.mxu0 %v58
  %851 = vmatpush1.msra.mxu0 %v57
  %852 = vmatprep.subr.mxu0 %v62
  %853 = vmatpush1.msra.mxu0 %v61
  %854 = vmatprep.subr.mxu0 %v66
  %855 = vmatpush1.msra.mxu0 %v65
  %856 = vmatprep.subr.mxu0 %v70
  %857 = vmatpush1.msra.mxu0 %v69
  %858 = vmatprep.subr.mxu0 %v74
  %859 = vmatpush1.msra.mxu0 %v73
  %860 = vmatprep.subr.mxu0 %v78
  %861 = vmatpush1.msra.mxu0 %v77
  %862 = vmatprep.subr.mxu0 %v82
  %863 = vmatpush1.msra.mxu0 %v81
  %864 = vmatprep.subr.mxu0 %v86
  %865 = vmatpush1.msra.mxu0 %v85
  %866 = vmatprep.subr.mxu0 0.0
  %867 = vmatpush1.msra.mxu0 0.0
  %868 = vmatprep.subr.mxu0 0.0
  %869 = vmatpush1.msra.mxu0 0.0
  %870 = vmatprep.subr.mxu0 0.0
  %871 = vmatpush1.msra.mxu0 0.0
  %872 = vmatprep.subr.mxu0 0.0
  %873 = vmatpush1.msra.mxu0 0.0
  %874 = vmatprep.subr.mxu0 0.0
  %875 = vmatpush1.msra.mxu0 0.0
  %876 = vmatprep.subr.mxu0 0.0
  %877 = vmatpush1.msra.mxu0 0.0
  %878 = vmatprep.subr.mxu0 0.0
  %879 = vmatpush1.msra.mxu0 0.0
  %880 = vmatprep.subr.mxu0 0.0
  %881 = vmatpush1.msra.mxu0 0.0
  %882 = vmatprep.subr.mxu0 0.0
  %883 = vmatpush1.msra.mxu0 0.0
  %884 = vmatprep.subr.mxu0 0.0
  %885 = vmatpush1.msra.mxu0 0.0
  %886 = vmatprep.subr.mxu0 0.0
  %887 = vmatpush1.msra.mxu0 0.0
  %888 = vmatprep.subr.mxu0 0.0
  %889 = vmatpush1.msra.mxu0 0.0
  %890 = vmatprep.subr.mxu0 0.0
  %891 = vmatpush1.msra.mxu0 0.0
  %892 = vmatprep.subr.mxu0 0.0
  %893 = vmatpush1.msra.mxu0 0.0
  %894 = vmatprep.subr.mxu0 0.0
  %895 = vmatpush1.msra.mxu0 0.0
  %896 = vmatprep.subr.mxu0 0.0
  %897 = vmatpush1.msra.mxu0 0.0
  %898 = vmatprep.mubr.f32.mxu0 0.0
  %899 = vmatmul.mubr.f32.gmra.mrb[0].mxu0 %v757
  %v900 = vpop.f32.mrb[0].mxu0
  %v901 = vadd.f32 0.0, %v900
  %v902 = vpop.f32.mrb[0].mxu0
  %v903 = vadd.f32 0.0, %v902
  %904 = vdwg.mxu0
  %v905 = vadd.f32 %v759, %v830
  %v906 = vadd.f32 %v760, %v832
  %v907 = vadd.f32 %v761, %v901
  %v908 = vadd.f32 %v762, %v903
  %v909 = vmul.f32 %v905, 0.5
  %v910 = vmul.f32 %v906, 0.5
  %v911 = vmul.f32 %v907, 0.5
  %v912 = vtanh.pop %v909
  %v913 = vtanh.pop %v910
  %v914 = vtanh.pop %v911
  %v915 = vmul.f32 %v912, 0.5
  %v916 = vmul.f32 %v913, 0.5
  %v917 = vmul.f32 %v914, 0.5
  %v918 = vadd.f32 %v915, 0.5
  %v919 = vadd.f32 %v916, 0.5
  %v920 = vadd.f32 %v917, 0.5
  %v921 = vtanh.pop %v908
  %v922 = vmul.f32 %v919, %v755
  %v923 = vmul.f32 %v918, %v921
  %v924 = vadd.f32 %v922, %v923
  %v925 = vtanh.pop %v924
  %v926 = vmul.f32 %v920, %v925
  %s927 = scalar_lea.vmem %s0, 160
  %v928 = vld [vmem:[%s927] sm:$0xff]
  %v929 = vld [vmem:[%s927 + $0x8] sm:$0xff]
  %v930 = vld [vmem:[%s927 + $0x10] sm:$0xff]
  %v931 = vld [vmem:[%s927 + $0x18] sm:$0xff]
  %932 = vmatprep.subr.mxu0 %v24
  %933 = vmatpush1.msra.mxu0 %v23
  %934 = vmatprep.subr.mxu0 %v28
  %935 = vmatpush1.msra.mxu0 %v27
  %936 = vmatprep.subr.mxu0 %v32
  %937 = vmatpush1.msra.mxu0 %v31
  %938 = vmatprep.subr.mxu0 %v36
  %939 = vmatpush1.msra.mxu0 %v35
  %940 = vmatprep.subr.mxu0 %v40
  %941 = vmatpush1.msra.mxu0 %v39
  %942 = vmatprep.subr.mxu0 %v44
  %943 = vmatpush1.msra.mxu0 %v43
  %944 = vmatprep.subr.mxu0 %v48
  %945 = vmatpush1.msra.mxu0 %v47
  %946 = vmatprep.subr.mxu0 %v52
  %947 = vmatpush1.msra.mxu0 %v51
  %948 = vmatprep.subr.mxu0 %v56
  %949 = vmatpush1.msra.mxu0 %v55
  %950 = vmatprep.subr.mxu0 %v60
  %951 = vmatpush1.msra.mxu0 %v59
  %952 = vmatprep.subr.mxu0 %v64
  %953 = vmatpush1.msra.mxu0 %v63
  %954 = vmatprep.subr.mxu0 %v68
  %955 = vmatpush1.msra.mxu0 %v67
  %956 = vmatprep.subr.mxu0 %v72
  %957 = vmatpush1.msra.mxu0 %v71
  %958 = vmatprep.subr.mxu0 %v76
  %959 = vmatpush1.msra.mxu0 %v75
  %960 = vmatprep.subr.mxu0 %v80
  %961 = vmatpush1.msra.mxu0 %v79
  %962 = vmatprep.subr.mxu0 %v84
  %963 = vmatpush1.msra.mxu0 %v83
  %964 = vmatprep.subr.mxu0 0.0
  %965 = vmatpush1.msra.mxu0 0.0
  %966 = vmatprep.subr.mxu0 0.0
  %967 = vmatpush1.msra.mxu0 0.0
  %968 = vmatprep.subr.mxu0 0.0
  %969 = vmatpush1.msra.mxu0 0.0
  %970 = vmatprep.subr.mxu0 0.0
  %971 = vmatpush1.msra.mxu0 0.0
  %972 = vmatprep.subr.mxu0 0.0
  %973 = vmatpush1.msra.mxu0 0.0
  %974 = vmatprep.subr.mxu0 0.0
  %975 = vmatpush1.msra.mxu0 0.0
  %976 = vmatprep.subr.mxu0 0.0
  %977 = vmatpush1.msra.mxu0 0.0
  %978 = vmatprep.subr.mxu0 0.0
  %979 = vmatpush1.msra.mxu0 0.0
  %980 = vmatprep.subr.mxu0 0.0
  %981 = vmatpush1.msra.mxu0 0.0
  %982 = vmatprep.subr.mxu0 0.0
  %983 = vmatpush1.msra.mxu0 0.0
  %984 = vmatprep.subr.mxu0 0.0
  %985 = vmatpush1.msra.mxu0 0.0
  %986 = vmatprep.subr.mxu0 0.0
  %987 = vmatpush1.msra.mxu0 0.0
  %988 = vmatprep.subr.mxu0 0.0
  %989 = vmatpush1.msra.mxu0 0.0
  %990 = vmatprep.subr.mxu0 0.0
  %991 = vmatpush1.msra.mxu0 0.0
  %992 = vmatprep.subr.mxu0 0.0
  %993 = vmatpush1.msra.mxu0 0.0
  %994 = vmatprep.subr.mxu0 0.0
  %995 = vmatpush1.msra.mxu0 0.0
  %996 = vmatprep.mubr.f32.mxu0 0.0
  %997 = vmatmul.mubr.f32.gmra.mrb[0].mxu0 %v926
  %v998 = vpop.f32.mrb[0].mxu0
  %v999 = vadd.f32 0.0, %v998
  %v1000 = vpop.f32.mrb[0].mxu0
  %v1001 = vadd.f32 0.0, %v1000
  %1002 = vdwg.mxu0
  %1003 = vmatprep.subr.mxu0 %v26
  %1004 = vmatpush1.msra.mxu0 %v25
  %1005 = vmatprep.subr.mxu0 %v30
  %1006 = vmatpush1.msra.mxu0 %v29
  %1007 = vmatprep.subr.mxu0 %v34
  %1008 = vmatpush1.msra.mxu0 %v33
  %1009 = vmatprep.subr.mxu0 %v38
  %1010 = vmatpush1.msra.mxu0 %v37
  %1011 = vmatprep.subr.mxu0 %v42
  %1012 = vmatpush1.msra.mxu0 %v41
  %1013 = vmatprep.subr.mxu0 %v46
  %1014 = vmatpush1.msra.mxu0 %v45
  %1015 = vmatprep.subr.mxu0 %v50
  %1016 = vmatpush1.msra.mxu0 %v49
  %1017 = vmatprep.subr.mxu0 %v54
  %1018 = vmatpush1.msra.mxu0 %v53
  %1019 = vmatprep.subr.mxu0 %v58
  %1020 = vmatpush1.msra.mxu0 %v57
  %1021 = vmatprep.subr.mxu0 %v62
  %1022 = vmatpush1.msra.mxu0 %v61
  %1023 = vmatprep.subr.mxu0 %v66
  %1024 = vmatpush1.msra.mxu0 %v65
  %1025 = vmatprep.subr.mxu0 %v70
  %1026 = vmatpush1.msra.mxu0 %v69
  %1027 = vmatprep.subr.mxu0 %v74
  %1028 = vmatpush1.msra.mxu0 %v73
  %1029 = vmatprep.subr.mxu0 %v78
  %1030 = vmatpush1.msra.mxu0 %v77
  %1031 = vmatprep.subr.mxu0 %v82
  %1032 = vmatpush1.msra.mxu0 %v81
  %1033 = vmatprep.subr.mxu0 %v86
  %1034 = vmatpush1.msra.mxu0 %v85
  %1035 = vmatprep.subr.mxu0 0.0
  %1036 = vmatpush1.msra.mxu0 0.0
  %1037 = vmatprep.subr.mxu0 0.0
  %1038 = vmatpush1.msra.mxu0 0.0
  %1039 = vmatprep.subr.mxu0 0.0
  %1040 = vmatpush1.msra.mxu0 0.0
  %1041 = vmatprep.subr.mxu0 0.0
  %1042 = vmatpush1.msra.mxu0 0.0
  %1043 = vmatprep.subr.mxu0 0.0
  %1044 = vmatpush1.msra.mxu0 0.0
  %1045 = vmatprep.subr.mxu0 0.0
  %1046 = vmatpush1.msra.mxu0 0.0
  %1047 = vmatprep.subr.mxu0 0.0
  %1048 = vmatpush1.msra.mxu0 0.0
  %1049 = vmatprep.subr.mxu0 0.0
  %1050 = vmatpush1.msra.mxu0 0.0
  %1051 = vmatprep.subr.mxu0 0.0
  %1052 = vmatpush1.msra.mxu0 0.0
  %1053 = vmatprep.subr.mxu0 0.0
  %1054 = vmatpush1.msra.mxu0 0.0
  %1055 = vmatprep.subr.mxu0 0.0
  %1056 = vmatpush1.msra.mxu0 0.0
  %1057 = vmatprep.subr.mxu0 0.0
  %1058 = vmatpush1.msra.mxu0 0.0
  %1059 = vmatprep.subr.mxu0 0.0
  %1060 = vmatpush1.msra.mxu0 0.0
  %1061 = vmatprep.subr.mxu0 0.0
  %1062 = vmatpush1.msra.mxu0 0.0
  %1063 = vmatprep.subr.mxu0 0.0
  %1064 = vmatpush1.msra.mxu0 0.0
  %1065 = vmatprep.subr.mxu0 0.0
  %1066 = vmatpush1.msra.mxu0 0.0
  %1067 = vmatprep.mubr.f32.mxu0 0.0
  %1068 = vmatmul.mubr.f32.gmra.mrb[0].mxu0 %v926
  %v1069 = vpop.f32.mrb[0].mxu0
  %v1070 = vadd.f32 0.0, %v1069
  %v1071 = vpop.f32.mrb[0].mxu0
  %v1072 = vadd.f32 0.0, %v1071
  %1073 = vdwg.mxu0
  %v1074 = vadd.f32 %v928, %v999
  %v1075 = vadd.f32 %v929, %v1001
  %v1076 = vadd.f32 %v930, %v1070
  %v1077 = vadd.f32 %v931, %v1072
  %v1078 = vmul.f32 %v1074, 0.5
  %v1079 = vmul.f32 %v1075, 0.5
  %v1080 = vmul.f32 %v1076, 0.5
  %v1081 = vtanh.pop %v1078
  %v1082 = vtanh.pop %v1079
  %v1083 = vtanh.pop %v1080
  %v1084 = vmul.f32 %v1081, 0.5
  %v1085 = vmul.f32 %v1082, 0.5
  %v1086 = vmul.f32 %v1083, 0.5
  %v1087 = vadd.f32 %v1084, 0.5
  %v1088 = vadd.f32 %v1085, 0.5
  %v1089 = vadd.f32 %v1086, 0.5
  %v1090 = vtanh.pop %v1077
  %v1091 = vmul.f32 %v1088, %v924
  %v1092 = vmul.f32 %v1087, %v1090
  %v1093 = vadd.f32 %v1091, %v1092
  %v1094 = vtanh.pop %v1093
  %v1095 = vmul.f32 %v1089, %v1094
  %s1096 = scalar_lea.vmem %s0, 192
  %v1097 = vld [vmem:[%s1096] sm:$0xff]
  %v1098 = vld [vmem:[%s1096 + $0x8] sm:$0xff]
  %v1099 = vld [vmem:[%s1096 + $0x10] sm:$0xff]
  %v1100 = vld [vmem:[%s1096 + $0x18] sm:$0xff]
  %1101 = vmatprep.subr.mxu0 %v24
  %1102 = vmatpush1.msra.mxu0 %v23
  %1103 = vmatprep.subr.mxu0 %v28
  %1104 = vmatpush1.msra.mxu0 %v27
  %1105 = vmatprep.subr.mxu0 %v32
  %1106 = vmatpush1.msra.mxu0 %v31
  %1107 = vmatprep.subr.mxu0 %v36
  %1108 = vmatpush1.msra.mxu0 %v35
  %1109 = vmatprep.subr.mxu0 %v40
  %1110 = vmatpush1.msra.mxu0 %v39
  %1111 = vmatprep.subr.mxu0 %v44
  %1112 = vmatpush1.msra.mxu0 %v43
  %1113 = vmatprep.subr.mxu0 %v48
  %1114 = vmatpush1.msra.mxu0 %v47
  %1115 = vmatprep.subr.mxu0 %v52
  %1116 = vmatpush1.msra.mxu0 %v51
  %1117 = vmatprep.subr.mxu0 %v56
  %1118 = vmatpush1.msra.mxu0 %v55
  %1119 = vmatprep.subr.mxu0 %v60
  %1120 = vmatpush1.msra.mxu0 %v59
  %1121 = vmatprep.subr.mxu0 %v64
  %1122 = vmatpush1.msra.mxu0 %v63
  %1123 = vmatprep.subr.mxu0 %v68
  %1124 = vmatpush1.msra.mxu0 %v67
  %1125 = vmatprep.subr.mxu0 %v72
  %1126 = vmatpush1.msra.mxu0 %v71
  %1127 = vmatprep.subr.mxu0 %v76
  %1128 = vmatpush1.msra.mxu0 %v75
  %1129 = vmatprep.subr.mxu0 %v80
  %1130 = vmatpush1.msra.mxu0 %v79
  %1131 = vmatprep.subr.mxu0 %v84
  %1132 = vmatpush1.msra.mxu0 %v83
  %1133 = vmatprep.subr.mxu0 0.0
  %1134 = vmatpush1.msra.mxu0 0.0
  %1135 = vmatprep.subr.mxu0 0.0
  %1136 = vmatpush1.msra.mxu0 0.0
  %1137 = vmatprep.subr.mxu0 0.0
  %1138 = vmatpush1.msra.mxu0 0.0
  %1139 = vmatprep.subr.mxu0 0.0
  %1140 = vmatpush1.msra.mxu0 0.0
  %1141 = vmatprep.subr.mxu0 0.0
  %1142 = vmatpush1.msra.mxu0 0.0
  %1143 = vmatprep.subr.mxu0 0.0
  %1144 = vmatpush1.msra.mxu0 0.0
  %1145 = vmatprep.subr.mxu0 0.0
  %1146 = vmatpush1.msra.mxu0 0.0
  %1147 = vmatprep.subr.mxu0 0.0
  %1148 = vmatpush1.msra.mxu0 0.0
  %1149 = vmatprep.subr.mxu0 0.0
  %1150 = vmatpush1.msra.mxu0 0.0
  %1151 = vmatprep.subr.mxu0 0.0
  %1152 = vmatpush1.msra.mxu0 0.0
  %1153 = vmatprep.subr.mxu0 0.0
  %1154 = vmatpush1.msra.mxu0 0.0
  %1155 = vmatprep.subr.mxu0 0.0
  %1156 = vmatpush1.msra.mxu0 0.0
  %1157 = vmatprep.subr.mxu0 0.0
  %1158 = vmatpush1.msra.mxu0 0.0
  %1159 = vmatprep.subr.mxu0 0.0
  %1160 = vmatpush1.msra.mxu0 0.0
  %1161 = vmatprep.subr.mxu0 0.0
  %1162 = vmatpush1.msra.mxu0 0.0
  %1163 = vmatprep.subr.mxu0 0.0
  %1164 = vmatpush1.msra.mxu0 0.0
  %1165 = vmatprep.mubr.f32.mxu0 0.0
  %1166 = vmatmul.mubr.f32.gmra.mrb[0].mxu0 %v1095
  %v1167 = vpop.f32.mrb[0].mxu0
  %v1168 = vadd.f32 0.0, %v1167
  %v1169 = vpop.f32.mrb[0].mxu0
  %v1170 = vadd.f32 0.0, %v1169
  %1171 = vdwg.mxu0
  %1172 = vmatprep.subr.mxu0 %v26
  %1173 = vmatpush1.msra.mxu0 %v25
  %1174 = vmatprep.subr.mxu0 %v30
  %1175 = vmatpush1.msra.mxu0 %v29
  %1176 = vmatprep.subr.mxu0 %v34
  %1177 = vmatpush1.msra.mxu0 %v33
  %1178 = vmatprep.subr.mxu0 %v38
  %1179 = vmatpush1.msra.mxu0 %v37
  %1180 = vmatprep.subr.mxu0 %v42
  %1181 = vmatpush1.msra.mxu0 %v41
  %1182 = vmatprep.subr.mxu0 %v46
  %1183 = vmatpush1.msra.mxu0 %v45
  %1184 = vmatprep.subr.mxu0 %v50
  %1185 = vmatpush1.msra.mxu0 %v49
  %1186 = vmatprep.subr.mxu0 %v54
  %1187 = vmatpush1.msra.mxu0 %v53
  %1188 = vmatprep.subr.mxu0 %v58
  %1189 = vmatpush1.msra.mxu0 %v57
  %1190 = vmatprep.subr.mxu0 %v62
  %1191 = vmatpush1.msra.mxu0 %v61
  %1192 = vmatprep.subr.mxu0 %v66
  %1193 = vmatpush1.msra.mxu0 %v65
  %1194 = vmatprep.subr.mxu0 %v70
  %1195 = vmatpush1.msra.mxu0 %v69
  %1196 = vmatprep.subr.mxu0 %v74
  %1197 = vmatpush1.msra.mxu0 %v73
  %1198 = vmatprep.subr.mxu0 %v78
  %1199 = vmatpush1.msra.mxu0 %v77
  %1200 = vmatprep.subr.mxu0 %v82
  %1201 = vmatpush1.msra.mxu0 %v81
  %1202 = vmatprep.subr.mxu0 %v86
  %1203 = vmatpush1.msra.mxu0 %v85
  %1204 = vmatprep.subr.mxu0 0.0
  %1205 = vmatpush1.msra.mxu0 0.0
  %1206 = vmatprep.subr.mxu0 0.0
  %1207 = vmatpush1.msra.mxu0 0.0
  %1208 = vmatprep.subr.mxu0 0.0
  %1209 = vmatpush1.msra.mxu0 0.0
  %1210 = vmatprep.subr.mxu0 0.0
  %1211 = vmatpush1.msra.mxu0 0.0
  %1212 = vmatprep.subr.mxu0 0.0
  %1213 = vmatpush1.msra.mxu0 0.0
  %1214 = vmatprep.subr.mxu0 0.0
  %1215 = vmatpush1.msra.mxu0 0.0
  %1216 = vmatprep.subr.mxu0 0.0
  %1217 = vmatpush1.msra.mxu0 0.0
  %1218 = vmatprep.subr.mxu0 0.0
  %1219 = vmatpush1.msra.mxu0 0.0
  %1220 = vmatprep.subr.mxu0 0.0
  %1221 = vmatpush1.msra.mxu0 0.0
  %1222 = vmatprep.subr.mxu0 0.0
  %1223 = vmatpush1.msra.mxu0 0.0
  %1224 = vmatprep.subr.mxu0 0.0
  %1225 = vmatpush1.msra.mxu0 0.0
  %1226 = vmatprep.subr.mxu0 0.0
  %1227 = vmatpush1.msra.mxu0 0.0
  %1228 = vmatprep.subr.mxu0 0.0
  %1229 = vmatpush1.msra.mxu0 0.0
  %1230 = vmatprep.subr.mxu0 0.0
  %1231 = vmatpush1.msra.mxu0 0.0
  %1232 = vmatprep.subr.mxu0 0.0
  %1233 = vmatpush1.msra.mxu0 0.0
  %1234 = vmatprep.subr.mxu0 0.0
  %1235 = vmatpush1.msra.mxu0 0.0
  %1236 = vmatprep.mubr.f32.mxu0 0.0
  %1237 = vmatmul.mubr.f32.gmra.mrb[0].mxu0 %v1095
  %v1238 = vpop.f32.mrb[0].mxu0
  %v1239 = vadd.f32 0.0, %v1238
  %v1240 = vpop.f32.mrb[0].mxu0
  %v1241 = vadd.f32 0.0, %v1240
  %1242 = vdwg.mxu0
  %v1243 = vadd.f32 %v1097, %v1168
  %v1244 = vadd.f32 %v1098, %v1170
  %v1245 = vadd.f32 %v1099, %v1239
  %v1246 = vadd.f32 %v1100, %v1241
  %v1247 = vmul.f32 %v1243, 0.5
  %v1248 = vmul.f32 %v1244, 0.5
  %v1249 = vmul.f32 %v1245, 0.5
  %v1250 = vtanh.pop %v1247
  %v1251 = vtanh.pop %v1248
  %v1252 = vtanh.pop %v1249
  %v1253 = vmul.f32 %v1250, 0.5
  %v1254 = vmul.f32 %v1251, 0.5
  %v1255 = vmul.f32 %v1252, 0.5
  %v1256 = vadd.f32 %v1253, 0.5
  %v1257 = vadd.f32 %v1254, 0.5
  %v1258 = vadd.f32 %v1255, 0.5
  %v1259 = vtanh.pop %v1246
  %v1260 = vmul.f32 %v1257, %v1093
  %v1261 = vmul.f32 %v1256, %v1259
  %v1262 = vadd.f32 %v1260, %v1261
  %v1263 = vtanh.pop %v1262
  %v1264 = vmul.f32 %v1258, %v1263
  %s1265 = scalar_lea.vmem %s0, 224
  %v1266 = vld [vmem:[%s1265] sm:$0xff]
  %v1267 = vld [vmem:[%s1265 + $0x8] sm:$0xff]
  %v1268 = vld [vmem:[%s1265 + $0x10] sm:$0xff]
  %v1269 = vld [vmem:[%s1265 + $0x18] sm:$0xff]
  %1270 = vmatprep.subr.mxu0 %v24
  %1271 = vmatpush1.msra.mxu0 %v23
  %1272 = vmatprep.subr.mxu0 %v28
  %1273 = vmatpush1.msra.mxu0 %v27
  %1274 = vmatprep.subr.mxu0 %v32
  %1275 = vmatpush1.msra.mxu0 %v31
  %1276 = vmatprep.subr.mxu0 %v36
  %1277 = vmatpush1.msra.mxu0 %v35
  %1278 = vmatprep.subr.mxu0 %v40
  %1279 = vmatpush1.msra.mxu0 %v39
  %1280 = vmatprep.subr.mxu0 %v44
  %1281 = vmatpush1.msra.mxu0 %v43
  %1282 = vmatprep.subr.mxu0 %v48
  %1283 = vmatpush1.msra.mxu0 %v47
  %1284 = vmatprep.subr.mxu0 %v52
  %1285 = vmatpush1.msra.mxu0 %v51
  %1286 = vmatprep.subr.mxu0 %v56
  %1287 = vmatpush1.msra.mxu0 %v55
  %1288 = vmatprep.subr.mxu0 %v60
  %1289 = vmatpush1.msra.mxu0 %v59
  %1290 = vmatprep.subr.mxu0 %v64
  %1291 = vmatpush1.msra.mxu0 %v63
  %1292 = vmatprep.subr.mxu0 %v68
  %1293 = vmatpush1.msra.mxu0 %v67
  %1294 = vmatprep.subr.mxu0 %v72
  %1295 = vmatpush1.msra.mxu0 %v71
  %1296 = vmatprep.subr.mxu0 %v76
  %1297 = vmatpush1.msra.mxu0 %v75
  %1298 = vmatprep.subr.mxu0 %v80
  %1299 = vmatpush1.msra.mxu0 %v79
  %1300 = vmatprep.subr.mxu0 %v84
  %1301 = vmatpush1.msra.mxu0 %v83
  %1302 = vmatprep.subr.mxu0 0.0
  %1303 = vmatpush1.msra.mxu0 0.0
  %1304 = vmatprep.subr.mxu0 0.0
  %1305 = vmatpush1.msra.mxu0 0.0
  %1306 = vmatprep.subr.mxu0 0.0
  %1307 = vmatpush1.msra.mxu0 0.0
  %1308 = vmatprep.subr.mxu0 0.0
  %1309 = vmatpush1.msra.mxu0 0.0
  %1310 = vmatprep.subr.mxu0 0.0
  %1311 = vmatpush1.msra.mxu0 0.0
  %1312 = vmatprep.subr.mxu0 0.0
  %1313 = vmatpush1.msra.mxu0 0.0
  %1314 = vmatprep.subr.mxu0 0.0
  %1315 = vmatpush1.msra.mxu0 0.0
  %1316 = vmatprep.subr.mxu0 0.0
  %1317 = vmatpush1.msra.mxu0 0.0
  %1318 = vmatprep.subr.mxu0 0.0
  %1319 = vmatpush1.msra.mxu0 0.0
  %1320 = vmatprep.subr.mxu0 0.0
  %1321 = vmatpush1.msra.mxu0 0.0
  %1322 = vmatprep.subr.mxu0 0.0
  %1323 = vmatpush1.msra.mxu0 0.0
  %1324 = vmatprep.subr.mxu0 0.0
  %1325 = vmatpush1.msra.mxu0 0.0
  %1326 = vmatprep.subr.mxu0 0.0
  %1327 = vmatpush1.msra.mxu0 0.0
  %1328 = vmatprep.subr.mxu0 0.0
  %1329 = vmatpush1.msra.mxu0 0.0
  %1330 = vmatprep.subr.mxu0 0.0
  %1331 = vmatpush1.msra.mxu0 0.0
  %1332 = vmatprep.subr.mxu0 0.0
  %1333 = vmatpush1.msra.mxu0 0.0
  %1334 = vmatprep.mubr.f32.mxu0 0.0
  %1335 = vmatmul.mubr.f32.gmra.mrb[0].mxu0 %v1264
  %v1336 = vpop.f32.mrb[0].mxu0
  %v1337 = vadd.f32 0.0, %v1336
  %v1338 = vpop.f32.mrb[0].mxu0
  %v1339 = vadd.f32 0.0, %v1338
  %1340 = vdwg.mxu0
  %1341 = vmatprep.subr.mxu0 %v26
  %1342 = vmatpush1.msra.mxu0 %v25
  %1343 = vmatprep.subr.mxu0 %v30
  %1344 = vmatpush1.msra.mxu0 %v29
  %1345 = vmatprep.subr.mxu0 %v34
  %1346 = vmatpush1.msra.mxu0 %v33
  %1347 = vmatprep.subr.mxu0 %v38
  %1348 = vmatpush1.msra.mxu0 %v37
  %1349 = vmatprep.subr.mxu0 %v42
  %1350 = vmatpush1.msra.mxu0 %v41
  %1351 = vmatprep.subr.mxu0 %v46
  %1352 = vmatpush1.msra.mxu0 %v45
  %1353 = vmatprep.subr.mxu0 %v50
  %1354 = vmatpush1.msra.mxu0 %v49
  %1355 = vmatprep.subr.mxu0 %v54
  %1356 = vmatpush1.msra.mxu0 %v53
  %1357 = vmatprep.subr.mxu0 %v58
  %1358 = vmatpush1.msra.mxu0 %v57
  %1359 = vmatprep.subr.mxu0 %v62
  %1360 = vmatpush1.msra.mxu0 %v61
  %1361 = vmatprep.subr.mxu0 %v66
  %1362 = vmatpush1.msra.mxu0 %v65
  %1363 = vmatprep.subr.mxu0 %v70
  %1364 = vmatpush1.msra.mxu0 %v69
  %1365 = vmatprep.subr.mxu0 %v74
  %1366 = vmatpush1.msra.mxu0 %v73
  %1367 = vmatprep.subr.mxu0 %v78
  %1368 = vmatpush1.msra.mxu0 %v77
  %1369 = vmatprep.subr.mxu0 %v82
  %1370 = vmatpush1.msra.mxu0 %v81
  %1371 = vmatprep.subr.mxu0 %v86
  %1372 = vmatpush1.msra.mxu0 %v85
  %1373 = vmatprep.subr.mxu0 0.0
  %1374 = vmatpush1.msra.mxu0 0.0
  %1375 = vmatprep.subr.mxu0 0.0
  %1376 = vmatpush1.msra.mxu0 0.0
  %1377 = vmatprep.subr.mxu0 0.0
  %1378 = vmatpush1.msra.mxu0 0.0
  %1379 = vmatprep.subr.mxu0 0.0
  %1380 = vmatpush1.msra.mxu0 0.0
  %1381 = vmatprep.subr.mxu0 0.0
  %1382 = vmatpush1.msra.mxu0 0.0
  %1383 = vmatprep.subr.mxu0 0.0
  %1384 = vmatpush1.msra.mxu0 0.0
  %1385 = vmatprep.subr.mxu0 0.0
  %1386 = vmatpush1.msra.mxu0 0.0
  %1387 = vmatprep.subr.mxu0 0.0
  %1388 = vmatpush1.msra.mxu0 0.0
  %1389 = vmatprep.subr.mxu0 0.0
  %1390 = vmatpush1.msra.mxu0 0.0
  %1391 = vmatprep.subr.mxu0 0.0
  %1392 = vmatpush1.msra.mxu0 0.0
  %1393 = vmatprep.subr.mxu0 0.0
  %1394 = vmatpush1.msra.mxu0 0.0
  %1395 = vmatprep.subr.mxu0 0.0
  %1396 = vmatpush1.msra.mxu0 0.0
  %1397 = vmatprep.subr.mxu0 0.0
  %1398 = vmatpush1.msra.mxu0 0.0
  %1399 = vmatprep.subr.mxu0 0.0
  %1400 = vmatpush1.msra.mxu0 0.0
  %1401 = vmatprep.subr.mxu0 0.0
  %1402 = vmatpush1.msra.mxu0 0.0
  %1403 = vmatprep.subr.mxu0 0.0
  %1404 = vmatpush1.msra.mxu0 0.0
  %1405 = vmatprep.mubr.f32.mxu0 0.0
  %1406 = vmatmul.mubr.f32.gmra.mrb[0].mxu0 %v1264
  %v1407 = vpop.f32.mrb[0].mxu0
  %v1408 = vadd.f32 0.0, %v1407
  %v1409 = vpop.f32.mrb[0].mxu0
  %v1410 = vadd.f32 0.0, %v1409
  %1411 = vdwg.mxu0
  %v1412 = vadd.f32 %v1266, %v1337
  %v1413 = vadd.f32 %v1267, %v1339
  %v1414 = vadd.f32 %v1268, %v1408
  %v1415 = vadd.f32 %v1269, %v1410
  %v1416 = vmul.f32 %v1412, 0.5
  %v1417 = vmul.f32 %v1413, 0.5
  %v1418 = vmul.f32 %v1414, 0.5
  %v1419 = vtanh.pop %v1416
  %v1420 = vtanh.pop %v1417
  %v1421 = vtanh.pop %v1418
  %v1422 = vmul.f32 %v1419, 0.5
  %v1423 = vmul.f32 %v1420, 0.5
  %v1424 = vmul.f32 %v1421, 0.5
  %v1425 = vadd.f32 %v1422, 0.5
  %v1426 = vadd.f32 %v1423, 0.5
  %v1427 = vadd.f32 %v1424, 0.5
  %v1428 = vtanh.pop %v1415
  %v1429 = vmul.f32 %v1426, %v1262
  %v1430 = vmul.f32 %v1425, %v1428
  %v1431 = vadd.f32 %v1429, %v1430
  %v1432 = vtanh.pop %v1431
  %v1433 = vmul.f32 %v1427, %v1432
  %1434 = vst [vmem:[#allocation2] sm:$0xff] %v1433
  %1435 = vst [vmem:[#allocation3] sm:$0xff] %v1431
  // Predicated region
  $region14: #{_forward.1} parent=0 // pred_check
    %p1436 = pneg %p11
  $region15: #{_forward.1} parent=0 // pred_check_branch
    %1438 = sbr.rel (%p1436) target = $region17
  $region16: #{_forward.1} parent=0 // pred_region
    %1439 = vst [vmem:[%s2] sm:$0xff] %v1433
  $region17: #{_forward.1} parent=0 // pred_fallthru
    _
  // Predicated region
  $region18: #{_forward.1} parent=0 // pred_check
    _
  $region19: #{_forward.1} parent=0 // pred_check_branch
    %1441 = sbr.rel (0) target = $region21
  $region20: #{_forward.1} parent=0 // pred_region
    _
  $region21: #{_forward.1} parent=0 // pred_fallthru
    _
  // Predicated region
  $region22: #{_forward.1} parent=0 // pred_check
    _
  $region23: #{_forward.1} parent=0 // pred_check_branch
    %1443 = sbr.rel (0) target = $region25
  $region24: #{_forward.1} parent=0 // pred_region
    _
  $region25: #{_forward.1} parent=0 // pred_fallthru
    _

// kernel: _forward.1
$region0: #{_forward.1}
  #allocation0 [shape = 'u32[]', space=smem, size = 0x4, offset = 0x4, fixed_abs, tag = 'smem constant byte address 0x4 - core index']
  #allocation1 [shape = 'u32[144,128]{1,0:T(1,128)}', space=vmem, size = 0x12000, scoped, tag = 'internal scratch']
  #allocation2 [shape = 'f32[8,128]{1,0:T(8,128)}', space=vmem, size = 0x1000, scoped, tag = 'scratch operand']
  #allocation3 [shape = 'f32[8,128]{1,0:T(8,128)}', space=vmem, size = 0x1000, scoped, tag = 'scratch operand']
  %s0 = inlined_call_operand.vmem [shape: f32[8,8,512], index: 0, kind: input, shape index: {}]
  %s1 = inlined_call_operand.vmem [shape: f32[128,512], index: 1, kind: input, shape index: {}]
  %s2 = inlined_call_operand.vmem [shape: f32[8,128], index: 2, kind: output, shape index: {}]
  %s3 = sld [smem:[#allocation0]]
  $region26: #{_forward.1} parent=0
    _
  %s5 = ssub.s32 1, %s3
  %s6 = scalar_select 0, %s5, %s3
  // Predicated region
  $region2: #{_forward.1} parent=0 // pred_check
    _
  $region3: #{_forward.1} parent=0 // pred_check_branch
    %8 = sbr.rel (0) target = $region5
  $region4: #{_forward.1} parent=0 // pred_region
    _
  $region5: #{_forward.1} parent=0 // pred_fallthru
    _
  // Predicated region
  $region6: #{_forward.1} parent=0 // pred_check
    _
  $region7: #{_forward.1} parent=0 // pred_check_branch
    %10 = sbr.rel (0) target = $region9
  $region8: #{_forward.1} parent=0 // pred_region
    _
  $region9: #{_forward.1} parent=0 // pred_fallthru
    _
  %p11 = scmp.eq.s32.totalorder 0, 0
  // Predicated region
  $region10: #{_forward.1} parent=0 // pred_check
    %p12 = pneg %p11
  $region11: #{_forward.1} parent=0 // pred_check_branch
    %14 = sbr.rel (%p12) target = $region13
  $region12: #{_forward.1} parent=0 // pred_region
    %15 = vst [vmem:[#allocation2] sm:$0xff] 0.0
    %16 = vst [vmem:[#allocation3] sm:$0xff] 0.0
  $region13: #{_forward.1} parent=0 // pred_fallthru
    _
  %v17 = vld [vmem:[#allocation2] sm:$0xff]
  %v18 = vld [vmem:[#allocation3] sm:$0xff]
  %v19 = vld [vmem:[%s0] sm:$0xff]
  %v20 = vld [vmem:[%s0 + $0x8] sm:$0xff]
  %v21 = vld [vmem:[%s0 + $0x10] sm:$0xff]
  %v22 = vld [vmem:[%s0 + $0x18] sm:$0xff]
  %v23 = vld [vmem:[%s1] sm:$0xff]
  %v24 = vld [vmem:[%s1 + $0x8] sm:$0xff]
  %v25 = vld [vmem:[%s1 + $0x10] sm:$0xff]
  %v26 = vld [vmem:[%s1 + $0x18] sm:$0xff]
  %v27 = vld [vmem:[%s1 + $0x20] sm:$0xff]
  %v28 = vld [vmem:[%s1 + $0x28] sm:$0xff]
  %v29 = vld [vmem:[%s1 + $0x30] sm:$0xff]
  %v30 = vld [vmem:[%s1 + $0x38] sm:$0xff]
  %v31 = vld [vmem:[%s1 + $0x40] sm:$0xff]
  %v32 = vld [vmem:[%s1 + $0x48] sm:$0xff]
  %v33 = vld [vmem:[%s1 + $0x50] sm:$0xff]
  %v34 = vld [vmem:[%s1 + $0x58] sm:$0xff]
  %v35 = vld [vmem:[%s1 + $0x60] sm:$0xff]
  %v36 = vld [vmem:[%s1 + $0x68] sm:$0xff]
  %v37 = vld [vmem:[%s1 + $0x70] sm:$0xff]
  %v38 = vld [vmem:[%s1 + $0x78] sm:$0xff]
  %v39 = vld [vmem:[%s1 + $0x80] sm:$0xff]
  %v40 = vld [vmem:[%s1 + $0x88] sm:$0xff]
  %v41 = vld [vmem:[%s1 + $0x90] sm:$0xff]
  %v42 = vld [vmem:[%s1 + $0x98] sm:$0xff]
  %v43 = vld [vmem:[%s1 + $0xa0] sm:$0xff]
  %v44 = vld [vmem:[%s1 + $0xa8] sm:$0xff]
  %v45 = vld [vmem:[%s1 + $0xb0] sm:$0xff]
  %v46 = vld [vmem:[%s1 + $0xb8] sm:$0xff]
  %v47 = vld [vmem:[%s1 + $0xc0] sm:$0xff]
  %v48 = vld [vmem:[%s1 + $0xc8] sm:$0xff]
  %v49 = vld [vmem:[%s1 + $0xd0] sm:$0xff]
  %v50 = vld [vmem:[%s1 + $0xd8] sm:$0xff]
  %v51 = vld [vmem:[%s1 + $0xe0] sm:$0xff]
  %v52 = vld [vmem:[%s1 + $0xe8] sm:$0xff]
  %v53 = vld [vmem:[%s1 + $0xf0] sm:$0xff]
  %v54 = vld [vmem:[%s1 + $0xf8] sm:$0xff]
  %v55 = vld [vmem:[%s1 + $0x100] sm:$0xff]
  %v56 = vld [vmem:[%s1 + $0x108] sm:$0xff]
  %v57 = vld [vmem:[%s1 + $0x110] sm:$0xff]
  %v58 = vld [vmem:[%s1 + $0x118] sm:$0xff]
  %v59 = vld [vmem:[%s1 + $0x120] sm:$0xff]
  %v60 = vld [vmem:[%s1 + $0x128] sm:$0xff]
  %v61 = vld [vmem:[%s1 + $0x130] sm:$0xff]
  %v62 = vld [vmem:[%s1 + $0x138] sm:$0xff]
  %v63 = vld [vmem:[%s1 + $0x140] sm:$0xff]
  %v64 = vld [vmem:[%s1 + $0x148] sm:$0xff]
  %v65 = vld [vmem:[%s1 + $0x150] sm:$0xff]
  %v66 = vld [vmem:[%s1 + $0x158] sm:$0xff]
  %v67 = vld [vmem:[%s1 + $0x160] sm:$0xff]
  %v68 = vld [vmem:[%s1 + $0x168] sm:$0xff]
  %v69 = vld [vmem:[%s1 + $0x170] sm:$0xff]
  %v70 = vld [vmem:[%s1 + $0x178] sm:$0xff]
  %v71 = vld [vmem:[%s1 + $0x180] sm:$0xff]
  %v72 = vld [vmem:[%s1 + $0x188] sm:$0xff]
  %v73 = vld [vmem:[%s1 + $0x190] sm:$0xff]
  %v74 = vld [vmem:[%s1 + $0x198] sm:$0xff]
  %v75 = vld [vmem:[%s1 + $0x1a0] sm:$0xff]
  %v76 = vld [vmem:[%s1 + $0x1a8] sm:$0xff]
  %v77 = vld [vmem:[%s1 + $0x1b0] sm:$0xff]
  %v78 = vld [vmem:[%s1 + $0x1b8] sm:$0xff]
  %v79 = vld [vmem:[%s1 + $0x1c0] sm:$0xff]
  %v80 = vld [vmem:[%s1 + $0x1c8] sm:$0xff]
  %v81 = vld [vmem:[%s1 + $0x1d0] sm:$0xff]
  %v82 = vld [vmem:[%s1 + $0x1d8] sm:$0xff]
  %v83 = vld [vmem:[%s1 + $0x1e0] sm:$0xff]
  %v84 = vld [vmem:[%s1 + $0x1e8] sm:$0xff]
  %v85 = vld [vmem:[%s1 + $0x1f0] sm:$0xff]
  %v86 = vld [vmem:[%s1 + $0x1f8] sm:$0xff]
  %87 = vmatprep.subr.mxu0 %v24
  %88 = vmatpush1.msra.mxu0 %v23
  %89 = vmatprep.subr.mxu0 %v28
  %90 = vmatpush1.msra.mxu0 %v27
  %91 = vmatprep.subr.mxu0 %v32
  %92 = vmatpush1.msra.mxu0 %v31
  %93 = vmatprep.subr.mxu0 %v36
  %94 = vmatpush1.msra.mxu0 %v35
  %95 = vmatprep.subr.mxu0 %v40
  %96 = vmatpush1.msra.mxu0 %v39
  %97 = vmatprep.subr.mxu0 %v44
  %98 = vmatpush1.msra.mxu0 %v43
  %99 = vmatprep.subr.mxu0 %v48
  %100 = vmatpush1.msra.mxu0 %v47
  %101 = vmatprep.subr.mxu0 %v52
  %102 = vmatpush1.msra.mxu0 %v51
  %103 = vmatprep.subr.mxu0 %v56
  %104 = vmatpush1.msra.mxu0 %v55
  %105 = vmatprep.subr.mxu0 %v60
  %106 = vmatpush1.msra.mxu0 %v59
  %107 = vmatprep.subr.mxu0 %v64
  %108 = vmatpush1.msra.mxu0 %v63
  %109 = vmatprep.subr.mxu0 %v68
  %110 = vmatpush1.msra.mxu0 %v67
  %111 = vmatprep.subr.mxu0 %v72
  %112 = vmatpush1.msra.mxu0 %v71
  %113 = vmatprep.subr.mxu0 %v76
  %114 = vmatpush1.msra.mxu0 %v75
  %115 = vmatprep.subr.mxu0 %v80
  %116 = vmatpush1.msra.mxu0 %v79
  %117 = vmatprep.subr.mxu0 %v84
  %118 = vmatpush1.msra.mxu0 %v83
  %119 = vmatprep.subr.mxu0 0.0
  %120 = vmatpush1.msra.mxu0 0.0
  %121 = vmatprep.subr.mxu0 0.0
  %122 = vmatpush1.msra.mxu0 0.0
  %123 = vmatprep.subr.mxu0 0.0
  %124 = vmatpush1.msra.mxu0 0.0
  %125 = vmatprep.subr.mxu0 0.0
  %126 = vmatpush1.msra.mxu0 0.0
  %127 = vmatprep.subr.mxu0 0.0
  %128 = vmatpush1.msra.mxu0 0.0
  %129 = vmatprep.subr.mxu0 0.0
  %130 = vmatpush1.msra.mxu0 0.0
  %131 = vmatprep.subr.mxu0 0.0
  %132 = vmatpush1.msra.mxu0 0.0
  %133 = vmatprep.subr.mxu0 0.0
  %134 = vmatpush1.msra.mxu0 0.0
  %135 = vmatprep.subr.mxu0 0.0
  %136 = vmatpush1.msra.mxu0 0.0
  %137 = vmatprep.subr.mxu0 0.0
  %138 = vmatpush1.msra.mxu0 0.0
  %139 = vmatprep.subr.mxu0 0.0
  %140 = vmatpush1.msra.mxu0 0.0
  %141 = vmatprep.subr.mxu0 0.0
  %142 = vmatpush1.msra.mxu0 0.0
  %143 = vmatprep.subr.mxu0 0.0
  %144 = vmatpush1.msra.mxu0 0.0
  %145 = vmatprep.subr.mxu0 0.0
  %146 = vmatpush1.msra.mxu0 0.0
  %147 = vmatprep.subr.mxu0 0.0
  %148 = vmatpush1.msra.mxu0 0.0
  %149 = vmatprep.subr.mxu0 0.0
  %150 = vmatpush1.msra.mxu0 0.0
  %151 = vmatprep.mubr.f32.mxu0 0.0
  %152 = vmatmul.mubr.f32.gmra.mrb[0].mxu0 %v17
  %v153 = vpop.f32.mrb[0].mxu0
  %v154 = vadd.f32 0.0, %v153
  %v155 = vpop.f32.mrb[0].mxu0
  %v156 = vadd.f32 0.0, %v155
  %157 = vdwg.mxu0
  %158 = vmatprep.subr.mxu0 %v26
  %159 = vmatpush1.msra.mxu0 %v25
  %160 = vmatprep.subr.mxu0 %v30
  %161 = vmatpush1.msra.mxu0 %v29
  %162 = vmatprep.subr.mxu0 %v34
  %163 = vmatpush1.msra.mxu0 %v33
  %164 = vmatprep.subr.mxu0 %v38
  %165 = vmatpush1.msra.mxu0 %v37
  %166 = vmatprep.subr.mxu0 %v42
  %167 = vmatpush1.msra.mxu0 %v41
  %168 = vmatprep.subr.mxu0 %v46
  %169 = vmatpush1.msra.mxu0 %v45
  %170 = vmatprep.subr.mxu0 %v50
  %171 = vmatpush1.msra.mxu0 %v49
  %172 = vmatprep.subr.mxu0 %v54
  %173 = vmatpush1.msra.mxu0 %v53
  %174 = vmatprep.subr.mxu0 %v58
  %175 = vmatpush1.msra.mxu0 %v57
  %176 = vmatprep.subr.mxu0 %v62
  %177 = vmatpush1.msra.mxu0 %v61
  %178 = vmatprep.subr.mxu0 %v66
  %179 = vmatpush1.msra.mxu0 %v65
  %180 = vmatprep.subr.mxu0 %v70
  %181 = vmatpush1.msra.mxu0 %v69
  %182 = vmatprep.subr.mxu0 %v74
  %183 = vmatpush1.msra.mxu0 %v73
  %184 = vmatprep.subr.mxu0 %v78
  %185 = vmatpush1.msra.mxu0 %v77
  %186 = vmatprep.subr.mxu0 %v82
  %187 = vmatpush1.msra.mxu0 %v81
  %188 = vmatprep.subr.mxu0 %v86
  %189 = vmatpush1.msra.mxu0 %v85
  %190 = vmatprep.subr.mxu0 0.0
  %191 = vmatpush1.msra.mxu0 0.0
  %192 = vmatprep.subr.mxu0 0.0
  %193 = vmatpush1.msra.mxu0 0.0
  %194 = vmatprep.subr.mxu0 0.0
  %195 = vmatpush1.msra.mxu0 0.0
  %196 = vmatprep.subr.mxu0 0.0
  %197 = vmatpush1.msra.mxu0 0.0
  %198 = vmatprep.subr.mxu0 0.0
  %199 = vmatpush1.msra.mxu0 0.0
  %200 = vmatprep.subr.mxu0 0.0
  %201 = vmatpush1.msra.mxu0 0.0
  %202 = vmatprep.subr.mxu0 0.0
  %203 = vmatpush1.msra.mxu0 0.0
  %204 = vmatprep.subr.mxu0 0.0
  %205 = vmatpush1.msra.mxu0 0.0
  %206 = vmatprep.subr.mxu0 0.0
  %207 = vmatpush1.msra.mxu0 0.0
  %208 = vmatprep.subr.mxu0 0.0
  %209 = vmatpush1.msra.mxu0 0.0
  %210 = vmatprep.subr.mxu0 0.0
  %211 = vmatpush1.msra.mxu0 0.0
  %212 = vmatprep.subr.mxu0 0.0
  %213 = vmatpush1.msra.mxu0 0.0
  %214 = vmatprep.subr.mxu0 0.0
  %215 = vmatpush1.msra.mxu0 0.0
  %216 = vmatprep.subr.mxu0 0.0
  %217 = vmatpush1.msra.mxu0 0.0
  %218 = vmatprep.subr.mxu0 0.0
  %219 = vmatpush1.msra.mxu0 0.0
  %220 = vmatprep.subr.mxu0 0.0
  %221 = vmatpush1.msra.mxu0 0.0
  %222 = vmatprep.mubr.f32.mxu0 0.0
  %223 = vmatmul.mubr.f32.gmra.mrb[0].mxu0 %v17
  %v224 = vpop.f32.mrb[0].mxu0
  %v225 = vadd.f32 0.0, %v224
  %v226 = vpop.f32.mrb[0].mxu0
  %v227 = vadd.f32 0.0, %v226
  %228 = vdwg.mxu0
  %v229 = vadd.f32 %v19, %v154
  %v230 = vadd.f32 %v20, %v156
  %v231 = vadd.f32 %v21, %v225
  %v232 = vadd.f32 %v22, %v227
  %v233 = vmul.f32 %v229, 0.5
  %v234 = vmul.f32 %v230, 0.5
  %v235 = vmul.f32 %v231, 0.5
  %v236 = vtanh.pop %v233
  %v237 = vtanh.pop %v234
  %v238 = vtanh.pop %v235
  %v239 = vmul.f32 %v236, 0.5
  %v240 = vmul.f32 %v237, 0.5
  %v241 = vmul.f32 %v238, 0.5
  %v242 = vadd.f32 %v239, 0.5
  %v243 = vadd.f32 %v240, 0.5
  %v244 = vadd.f32 %v241, 0.5
  %v245 = vtanh.pop %v232
  %v246 = vmul.f32 %v243, %v18
  %v247 = vmul.f32 %v242, %v245
  %v248 = vadd.f32 %v246, %v247
  %v249 = vtanh.pop %v248
  %v250 = vmul.f32 %v244, %v249
  %s251 = scalar_lea.vmem %s0, 32
  %v252 = vld [vmem:[%s251] sm:$0xff]
  %v253 = vld [vmem:[%s251 + $0x8] sm:$0xff]
  %v254 = vld [vmem:[%s251 + $0x10] sm:$0xff]
  %v255 = vld [vmem:[%s251 + $0x18] sm:$0xff]
  %256 = vmatprep.subr.mxu0 %v24
  %257 = vmatpush1.msra.mxu0 %v23
  %258 = vmatprep.subr.mxu0 %v28
  %259 = vmatpush1.msra.mxu0 %v27
  %260 = vmatprep.subr.mxu0 %v32
  %261 = vmatpush1.msra.mxu0 %v31
  %262 = vmatprep.subr.mxu0 %v36
  %263 = vmatpush1.msra.mxu0 %v35
  %264 = vmatprep.subr.mxu0 %v40
  %265 = vmatpush1.msra.mxu0 %v39
  %266 = vmatprep.subr.mxu0 %v44
  %267 = vmatpush1.msra.mxu0 %v43
  %268 = vmatprep.subr.mxu0 %v48
  %269 = vmatpush1.msra.mxu0 %v47
  %270 = vmatprep.subr.mxu0 %v52
  %271 = vmatpush1.msra.mxu0 %v51
  %272 = vmatprep.subr.mxu0 %v56
  %273 = vmatpush1.msra.mxu0 %v55
  %274 = vmatprep.subr.mxu0 %v60
  %275 = vmatpush1.msra.mxu0 %v59
  %276 = vmatprep.subr.mxu0 %v64
  %277 = vmatpush1.msra.mxu0 %v63
  %278 = vmatprep.subr.mxu0 %v68
  %279 = vmatpush1.msra.mxu0 %v67
  %280 = vmatprep.subr.mxu0 %v72
  %281 = vmatpush1.msra.mxu0 %v71
  %282 = vmatprep.subr.mxu0 %v76
  %283 = vmatpush1.msra.mxu0 %v75
  %284 = vmatprep.subr.mxu0 %v80
  %285 = vmatpush1.msra.mxu0 %v79
  %286 = vmatprep.subr.mxu0 %v84
  %287 = vmatpush1.msra.mxu0 %v83
  %288 = vmatprep.subr.mxu0 0.0
  %289 = vmatpush1.msra.mxu0 0.0
  %290 = vmatprep.subr.mxu0 0.0
  %291 = vmatpush1.msra.mxu0 0.0
  %292 = vmatprep.subr.mxu0 0.0
  %293 = vmatpush1.msra.mxu0 0.0
  %294 = vmatprep.subr.mxu0 0.0
  %295 = vmatpush1.msra.mxu0 0.0
  %296 = vmatprep.subr.mxu0 0.0
  %297 = vmatpush1.msra.mxu0 0.0
  %298 = vmatprep.subr.mxu0 0.0
  %299 = vmatpush1.msra.mxu0 0.0
  %300 = vmatprep.subr.mxu0 0.0
  %301 = vmatpush1.msra.mxu0 0.0
  %302 = vmatprep.subr.mxu0 0.0
  %303 = vmatpush1.msra.mxu0 0.0
  %304 = vmatprep.subr.mxu0 0.0
  %305 = vmatpush1.msra.mxu0 0.0
  %306 = vmatprep.subr.mxu0 0.0
  %307 = vmatpush1.msra.mxu0 0.0
  %308 = vmatprep.subr.mxu0 0.0
  %309 = vmatpush1.msra.mxu0 0.0
  %310 = vmatprep.subr.mxu0 0.0
  %311 = vmatpush1.msra.mxu0 0.0
  %312 = vmatprep.subr.mxu0 0.0
  %313 = vmatpush1.msra.mxu0 0.0
  %314 = vmatprep.subr.mxu0 0.0
  %315 = vmatpush1.msra.mxu0 0.0
  %316 = vmatprep.subr.mxu0 0.0
  %317 = vmatpush1.msra.mxu0 0.0
  %318 = vmatprep.subr.mxu0 0.0
  %319 = vmatpush1.msra.mxu0 0.0
  %320 = vmatprep.mubr.f32.mxu0 0.0
  %321 = vmatmul.mubr.f32.gmra.mrb[0].mxu0 %v250
  %v322 = vpop.f32.mrb[0].mxu0
  %v323 = vadd.f32 0.0, %v322
  %v324 = vpop.f32.mrb[0].mxu0
  %v325 = vadd.f32 0.0, %v324
  %326 = vdwg.mxu0
  %327 = vmatprep.subr.mxu0 %v26
  %328 = vmatpush1.msra.mxu0 %v25
  %329 = vmatprep.subr.mxu0 %v30
  %330 = vmatpush1.msra.mxu0 %v29
  %331 = vmatprep.subr.mxu0 %v34
  %332 = vmatpush1.msra.mxu0 %v33
  %333 = vmatprep.subr.mxu0 %v38
  %334 = vmatpush1.msra.mxu0 %v37
  %335 = vmatprep.subr.mxu0 %v42
  %336 = vmatpush1.msra.mxu0 %v41
  %337 = vmatprep.subr.mxu0 %v46
  %338 = vmatpush1.msra.mxu0 %v45
  %339 = vmatprep.subr.mxu0 %v50
  %340 = vmatpush1.msra.mxu0 %v49
  %341 = vmatprep.subr.mxu0 %v54
  %342 = vmatpush1.msra.mxu0 %v53
  %343 = vmatprep.subr.mxu0 %v58
  %344 = vmatpush1.msra.mxu0 %v57
  %345 = vmatprep.subr.mxu0 %v62
  %346 = vmatpush1.msra.mxu0 %v61
  %347 = vmatprep.subr.mxu0 %v66
  %348 = vmatpush1.msra.mxu0 %v65
  %349 = vmatprep.subr.mxu0 %v70
  %350 = vmatpush1.msra.mxu0 %v69
  %351 = vmatprep.subr.mxu0 %v74
  %352 = vmatpush1.msra.mxu0 %v73
  %353 = vmatprep.subr.mxu0 %v78
  %354 = vmatpush1.msra.mxu0 %v77
  %355 = vmatprep.subr.mxu0 %v82
  %356 = vmatpush1.msra.mxu0 %v81
  %357 = vmatprep.subr.mxu0 %v86
  %358 = vmatpush1.msra.mxu0 %v85
  %359 = vmatprep.subr.mxu0 0.0
  %360 = vmatpush1.msra.mxu0 0.0
  %361 = vmatprep.subr.mxu0 0.0
  %362 = vmatpush1.msra.mxu0 0.0
  %363 = vmatprep.subr.mxu0 0.0
  %364 = vmatpush1.msra.mxu0 0.0
  %365 = vmatprep.subr.mxu0 0.0
  %366 = vmatpush1.msra.mxu0 0.0
  %367 = vmatprep.subr.mxu0 0.0
  %368 = vmatpush1.msra.mxu0 0.0
  %369 = vmatprep.subr.mxu0 0.0
  %370 = vmatpush1.msra.mxu0 0.0
  %371 = vmatprep.subr.mxu0 0.0
  %372 = vmatpush1.msra.mxu0 0.0
  %373 = vmatprep.subr.mxu0 0.0
  %374 = vmatpush1.msra.mxu0 0.0
  %375 = vmatprep.subr.mxu0 0.0
  %376 = vmatpush1.msra.mxu0 0.0
  %377 = vmatprep.subr.mxu0 0.0
  %378 = vmatpush1.msra.mxu0 0.0
  %379 = vmatprep.subr.mxu0 0.0
  %380 = vmatpush1.msra.mxu0 0.0
  %381 = vmatprep.subr.mxu0 0.0
  %382 = vmatpush1.msra.mxu0 0.0
  %383 = vmatprep.subr.mxu0 0.0
  %384 = vmatpush1.msra.mxu0 0.0
  %385 = vmatprep.subr.mxu0 0.0
  %386 = vmatpush1.msra.mxu0 0.0
  %387 = vmatprep.subr.mxu0 0.0
  %388 = vmatpush1.msra.mxu0 0.0
  %389 = vmatprep.subr.mxu0 0.0
  %390 = vmatpush1.msra.mxu0 0.0
  %391 = vmatprep.mubr.f32.mxu0 0.0
  %392 = vmatmul.mubr.f32.gmra.mrb[0].mxu0 %v250
  %v393 = vpop.f32.mrb[0].mxu0
  %v394 = vadd.f32 0.0, %v393
  %v395 = vpop.f32.mrb[0].mxu0
  %v396 = vadd.f32 0.0, %v395
  %397 = vdwg.mxu0
  %v398 = vadd.f32 %v252, %v323
  %v399 = vadd.f32 %v253, %v325
  %v400 = vadd.f32 %v254, %v394
  %v401 = vadd.f32 %v255, %v396
  %v402 = vmul.f32 %v398, 0.5
  %v403 = vmul.f32 %v399, 0.5
  %v404 = vmul.f32 %v400, 0.5
  %v405 = vtanh.pop %v402
  %v406 = vtanh.pop %v403
  %v407 = vtanh.pop %v404
  %v408 = vmul.f32 %v405, 0.5
  %v409 = vmul.f32 %v406, 0.5
  %v410 = vmul.f32 %v407, 0.5
  %v411 = vadd.f32 %v408, 0.5
  %v412 = vadd.f32 %v409, 0.5
  %v413 = vadd.f32 %v410, 0.5
  %v414 = vtanh.pop %v401
  %v415 = vmul.f32 %v412, %v248
  %v416 = vmul.f32 %v411, %v414
  %v417 = vadd.f32 %v415, %v416
  %v418 = vtanh.pop %v417
  %v419 = vmul.f32 %v413, %v418
  %s420 = scalar_lea.vmem %s0, 64
  %v421 = vld [vmem:[%s420] sm:$0xff]
  %v422 = vld [vmem:[%s420 + $0x8] sm:$0xff]
  %v423 = vld [vmem:[%s420 + $0x10] sm:$0xff]
  %v424 = vld [vmem:[%s420 + $0x18] sm:$0xff]
  %425 = vmatprep.subr.mxu0 %v24
  %426 = vmatpush1.msra.mxu0 %v23
  %427 = vmatprep.subr.mxu0 %v28
  %428 = vmatpush1.msra.mxu0 %v27
  %429 = vmatprep.subr.mxu0 %v32
  %430 = vmatpush1.msra.mxu0 %v31
  %431 = vmatprep.subr.mxu0 %v36
  %432 = vmatpush1.msra.mxu0 %v35
  %433 = vmatprep.subr.mxu0 %v40
  %434 = vmatpush1.msra.mxu0 %v39
  %435 = vmatprep.subr.mxu0 %v44
  %436 = vmatpush1.msra.mxu0 %v43
  %437 = vmatprep.subr.mxu0 %v48
  %438 = vmatpush1.msra.mxu0 %v47
  %439 = vmatprep.subr.mxu0 %v52
  %440 = vmatpush1.msra.mxu0 %v51
  %441 = vmatprep.subr.mxu0 %v56
  %442 = vmatpush1.msra.mxu0 %v55
  %443 = vmatprep.subr.mxu0 %v60
  %444 = vmatpush1.msra.mxu0 %v59
  %445 = vmatprep.subr.mxu0 %v64
  %446 = vmatpush1.msra.mxu0 %v63
  %447 = vmatprep.subr.mxu0 %v68
  %448 = vmatpush1.msra.mxu0 %v67
  %449 = vmatprep.subr.mxu0 %v72
  %450 = vmatpush1.msra.mxu0 %v71
  %451 = vmatprep.subr.mxu0 %v76
  %452 = vmatpush1.msra.mxu0 %v75
  %453 = vmatprep.subr.mxu0 %v80
  %454 = vmatpush1.msra.mxu0 %v79
  %455 = vmatprep.subr.mxu0 %v84
  %456 = vmatpush1.msra.mxu0 %v83
  %457 = vmatprep.subr.mxu0 0.0
  %458 = vmatpush1.msra.mxu0 0.0
  %459 = vmatprep.subr.mxu0 0.0
  %460 = vmatpush1.msra.mxu0 0.0
  %461 = vmatprep.subr.mxu0 0.0
  %462 = vmatpush1.msra.mxu0 0.0
  %463 = vmatprep.subr.mxu0 0.0
  %464 = vmatpush1.msra.mxu0 0.0
  %465 = vmatprep.subr.mxu0 0.0
  %466 = vmatpush1.msra.mxu0 0.0
  %467 = vmatprep.subr.mxu0 0.0
  %468 = vmatpush1.msra.mxu0 0.0
  %469 = vmatprep.subr.mxu0 0.0
  %470 = vmatpush1.msra.mxu0 0.0
  %471 = vmatprep.subr.mxu0 0.0
  %472 = vmatpush1.msra.mxu0 0.0
  %473 = vmatprep.subr.mxu0 0.0
  %474 = vmatpush1.msra.mxu0 0.0
  %475 = vmatprep.subr.mxu0 0.0
  %476 = vmatpush1.msra.mxu0 0.0
  %477 = vmatprep.subr.mxu0 0.0
  %478 = vmatpush1.msra.mxu0 0.0
  %479 = vmatprep.subr.mxu0 0.0
  %480 = vmatpush1.msra.mxu0 0.0
  %481 = vmatprep.subr.mxu0 0.0
  %482 = vmatpush1.msra.mxu0 0.0
  %483 = vmatprep.subr.mxu0 0.0
  %484 = vmatpush1.msra.mxu0 0.0
  %485 = vmatprep.subr.mxu0 0.0
  %486 = vmatpush1.msra.mxu0 0.0
  %487 = vmatprep.subr.mxu0 0.0
  %488 = vmatpush1.msra.mxu0 0.0
  %489 = vmatprep.mubr.f32.mxu0 0.0
  %490 = vmatmul.mubr.f32.gmra.mrb[0].mxu0 %v419
  %v491 = vpop.f32.mrb[0].mxu0
  %v492 = vadd.f32 0.0, %v491
  %v493 = vpop.f32.mrb[0].mxu0
  %v494 = vadd.f32 0.0, %v493
  %495 = vdwg.mxu0
  %496 = vmatprep.subr.mxu0 %v26
  %497 = vmatpush1.msra.mxu0 %v25
  %498 = vmatprep.subr.mxu0 %v30
  %499 = vmatpush1.msra.mxu0 %v29
  %500 = vmatprep.subr.mxu0 %v34
  %501 = vmatpush1.msra.mxu0 %v33
  %502 = vmatprep.subr.mxu0 %v38
  %503 = vmatpush1.msra.mxu0 %v37
  %504 = vmatprep.subr.mxu0 %v42
  %505 = vmatpush1.msra.mxu0 %v41
  %506 = vmatprep.subr.mxu0 %v46
  %507 = vmatpush1.msra.mxu0 %v45
  %508 = vmatprep.subr.mxu0 %v50
  %509 = vmatpush1.msra.mxu0 %v49
  %510 = vmatprep.subr.mxu0 %v54
  %511 = vmatpush1.msra.mxu0 %v53
  %512 = vmatprep.subr.mxu0 %v58
  %513 = vmatpush1.msra.mxu0 %v57
  %514 = vmatprep.subr.mxu0 %v62
  %515 = vmatpush1.msra.mxu0 %v61
  %516 = vmatprep.subr.mxu0 %v66
  %517 = vmatpush1.msra.mxu0 %v65
  %518 = vmatprep.subr.mxu0 %v70
  %519 = vmatpush1.msra.mxu0 %v69
  %520 = vmatprep.subr.mxu0 %v74
  %521 = vmatpush1.msra.mxu0 %v73
  %522 = vmatprep.subr.mxu0 %v78
  %523 = vmatpush1.msra.mxu0 %v77
  %524 = vmatprep.subr.mxu0 %v82
  %525 = vmatpush1.msra.mxu0 %v81
  %526 = vmatprep.subr.mxu0 %v86
  %527 = vmatpush1.msra.mxu0 %v85
  %528 = vmatprep.subr.mxu0 0.0
  %529 = vmatpush1.msra.mxu0 0.0
  %530 = vmatprep.subr.mxu0 0.0
  %531 = vmatpush1.msra.mxu0 0.0
  %532 = vmatprep.subr.mxu0 0.0
  %533 = vmatpush1.msra.mxu0 0.0
  %534 = vmatprep.subr.mxu0 0.0
  %535 = vmatpush1.msra.mxu0 0.0
  %536 = vmatprep.subr.mxu0 0.0
  %537 = vmatpush1.msra.mxu0 0.0
  %538 = vmatprep.subr.mxu0 0.0
  %539 = vmatpush1.msra.mxu0 0.0
  %540 = vmatprep.subr.mxu0 0.0
  %541 = vmatpush1.msra.mxu0 0.0
  %542 = vmatprep.subr.mxu0 0.0
  %543 = vmatpush1.msra.mxu0 0.0
  %544 = vmatprep.subr.mxu0 0.0
  %545 = vmatpush1.msra.mxu0 0.0
  %546 = vmatprep.subr.mxu0 0.0
  %547 = vmatpush1.msra.mxu0 0.0
  %548 = vmatprep.subr.mxu0 0.0
  %549 = vmatpush1.msra.mxu0 0.0
  %550 = vmatprep.subr.mxu0 0.0
  %551 = vmatpush1.msra.mxu0 0.0
  %552 = vmatprep.subr.mxu0 0.0
  %553 = vmatpush1.msra.mxu0 0.0
  %554 = vmatprep.subr.mxu0 0.0
  %555 = vmatpush1.msra.mxu0 0.0
  %556 = vmatprep.subr.mxu0 0.0
  %557 = vmatpush1.msra.mxu0 0.0
  %558 = vmatprep.subr.mxu0 0.0
  %559 = vmatpush1.msra.mxu0 0.0
  %560 = vmatprep.mubr.f32.mxu0 0.0
  %561 = vmatmul.mubr.f32.gmra.mrb[0].mxu0 %v419
  %v562 = vpop.f32.mrb[0].mxu0
  %v563 = vadd.f32 0.0, %v562
  %v564 = vpop.f32.mrb[0].mxu0
  %v565 = vadd.f32 0.0, %v564
  %566 = vdwg.mxu0
  %v567 = vadd.f32 %v421, %v492
  %v568 = vadd.f32 %v422, %v494
  %v569 = vadd.f32 %v423, %v563
  %v570 = vadd.f32 %v424, %v565
  %v571 = vmul.f32 %v567, 0.5
  %v572 = vmul.f32 %v568, 0.5
  %v573 = vmul.f32 %v569, 0.5
  %v574 = vtanh.pop %v571
  %v575 = vtanh.pop %v572
  %v576 = vtanh.pop %v573
  %v577 = vmul.f32 %v574, 0.5
  %v578 = vmul.f32 %v575, 0.5
  %v579 = vmul.f32 %v576, 0.5
  %v580 = vadd.f32 %v577, 0.5
  %v581 = vadd.f32 %v578, 0.5
  %v582 = vadd.f32 %v579, 0.5
  %v583 = vtanh.pop %v570
  %v584 = vmul.f32 %v581, %v417
  %v585 = vmul.f32 %v580, %v583
  %v586 = vadd.f32 %v584, %v585
  %v587 = vtanh.pop %v586
  %v588 = vmul.f32 %v582, %v587
  %s589 = scalar_lea.vmem %s0, 96
  %v590 = vld [vmem:[%s589] sm:$0xff]
  %v591 = vld [vmem:[%s589 + $0x8] sm:$0xff]
  %v592 = vld [vmem:[%s589 + $0x10] sm:$0xff]
  %v593 = vld [vmem:[%s589 + $0x18] sm:$0xff]
  %594 = vmatprep.subr.mxu0 %v24
  %595 = vmatpush1.msra.mxu0 %v23
  %596 = vmatprep.subr.mxu0 %v28
  %597 = vmatpush1.msra.mxu0 %v27
  %598 = vmatprep.subr.mxu0 %v32
  %599 = vmatpush1.msra.mxu0 %v31
  %600 = vmatprep.subr.mxu0 %v36
  %601 = vmatpush1.msra.mxu0 %v35
  %602 = vmatprep.subr.mxu0 %v40
  %603 = vmatpush1.msra.mxu0 %v39
  %604 = vmatprep.subr.mxu0 %v44
  %605 = vmatpush1.msra.mxu0 %v43
  %606 = vmatprep.subr.mxu0 %v48
  %607 = vmatpush1.msra.mxu0 %v47
  %608 = vmatprep.subr.mxu0 %v52
  %609 = vmatpush1.msra.mxu0 %v51
  %610 = vmatprep.subr.mxu0 %v56
  %611 = vmatpush1.msra.mxu0 %v55
  %612 = vmatprep.subr.mxu0 %v60
  %613 = vmatpush1.msra.mxu0 %v59
  %614 = vmatprep.subr.mxu0 %v64
  %615 = vmatpush1.msra.mxu0 %v63
  %616 = vmatprep.subr.mxu0 %v68
  %617 = vmatpush1.msra.mxu0 %v67
  %618 = vmatprep.subr.mxu0 %v72
  %619 = vmatpush1.msra.mxu0 %v71
  %620 = vmatprep.subr.mxu0 %v76
  %621 = vmatpush1.msra.mxu0 %v75
  %622 = vmatprep.subr.mxu0 %v80
  %623 = vmatpush1.msra.mxu0 %v79
  %624 = vmatprep.subr.mxu0 %v84
  %625 = vmatpush1.msra.mxu0 %v83
  %626 = vmatprep.subr.mxu0 0.0
  %627 = vmatpush1.msra.mxu0 0.0
  %628 = vmatprep.subr.mxu0 0.0
  %629 = vmatpush1.msra.mxu0 0.0
  %630 = vmatprep.subr.mxu0 0.0
  %631 = vmatpush1.msra.mxu0 0.0
  %632 = vmatprep.subr.mxu0 0.0
  %633 = vmatpush1.msra.mxu0 0.0
  %634 = vmatprep.subr.mxu0 0.0
  %635 = vmatpush1.msra.mxu0 0.0
  %636 = vmatprep.subr.mxu0 0.0
  %637 = vmatpush1.msra.mxu0 0.0
  %638 = vmatprep.subr.mxu0 0.0
  %639 = vmatpush1.msra.mxu0 0.0
  %640 = vmatprep.subr.mxu0 0.0
  %641 = vmatpush1.msra.mxu0 0.0
  %642 = vmatprep.subr.mxu0 0.0
  %643 = vmatpush1.msra.mxu0 0.0
  %644 = vmatprep.subr.mxu0 0.0
  %645 = vmatpush1.msra.mxu0 0.0
  %646 = vmatprep.subr.mxu0 0.0
  %647 = vmatpush1.msra.mxu0 0.0
  %648 = vmatprep.subr.mxu0 0.0
  %649 = vmatpush1.msra.mxu0 0.0
  %650 = vmatprep.subr.mxu0 0.0
  %651 = vmatpush1.msra.mxu0 0.0
  %652 = vmatprep.subr.mxu0 0.0
  %653 = vmatpush1.msra.mxu0 0.0
  %654 = vmatprep.subr.mxu0 0.0
  %655 = vmatpush1.msra.mxu0 0.0
  %656 = vmatprep.subr.mxu0 0.0
  %657 = vmatpush1.msra.mxu0 0.0
  %658 = vmatprep.mubr.f32.mxu0 0.0
  %659 = vmatmul.mubr.f32.gmra.mrb[0].mxu0 %v588
  %v660 = vpop.f32.mrb[0].mxu0
  %v661 = vadd.f32 0.0, %v660
  %v662 = vpop.f32.mrb[0].mxu0
  %v663 = vadd.f32 0.0, %v662
  %664 = vdwg.mxu0
  %665 = vmatprep.subr.mxu0 %v26
  %666 = vmatpush1.msra.mxu0 %v25
  %667 = vmatprep.subr.mxu0 %v30
  %668 = vmatpush1.msra.mxu0 %v29
  %669 = vmatprep.subr.mxu0 %v34
  %670 = vmatpush1.msra.mxu0 %v33
  %671 = vmatprep.subr.mxu0 %v38
  %672 = vmatpush1.msra.mxu0 %v37
  %673 = vmatprep.subr.mxu0 %v42
  %674 = vmatpush1.msra.mxu0 %v41
  %675 = vmatprep.subr.mxu0 %v46
  %676 = vmatpush1.msra.mxu0 %v45
  %677 = vmatprep.subr.mxu0 %v50
  %678 = vmatpush1.msra.mxu0 %v49
  %679 = vmatprep.subr.mxu0 %v54
  %680 = vmatpush1.msra.mxu0 %v53
  %681 = vmatprep.subr.mxu0 %v58
  %682 = vmatpush1.msra.mxu0 %v57
  %683 = vmatprep.subr.mxu0 %v62
  %684 = vmatpush1.msra.mxu0 %v61
  %685 = vmatprep.subr.mxu0 %v66
  %686 = vmatpush1.msra.mxu0 %v65
  %687 = vmatprep.subr.mxu0 %v70
  %688 = vmatpush1.msra.mxu0 %v69
  %689 = vmatprep.subr.mxu0 %v74
  %690 = vmatpush1.msra.mxu0 %v73
  %691 = vmatprep.subr.mxu0 %v78
  %692 = vmatpush1.msra.mxu0 %v77
  %693 = vmatprep.subr.mxu0 %v82
  %694 = vmatpush1.msra.mxu0 %v81
  %695 = vmatprep.subr.mxu0 %v86
  %696 = vmatpush1.msra.mxu0 %v85
  %697 = vmatprep.subr.mxu0 0.0
  %698 = vmatpush1.msra.mxu0 0.0
  %699 = vmatprep.subr.mxu0 0.0
  %700 = vmatpush1.msra.mxu0 0.0
  %701 = vmatprep.subr.mxu0 0.0
  %702 = vmatpush1.msra.mxu0 0.0
  %703 = vmatprep.subr.mxu0 0.0
  %704 = vmatpush1.msra.mxu0 0.0
  %705 = vmatprep.subr.mxu0 0.0
  %706 = vmatpush1.msra.mxu0 0.0
  %707 = vmatprep.subr.mxu0 0.0
  %708 = vmatpush1.msra.mxu0 0.0
  %709 = vmatprep.subr.mxu0 0.0
  %710 = vmatpush1.msra.mxu0 0.0
  %711 = vmatprep.subr.mxu0 0.0
  %712 = vmatpush1.msra.mxu0 0.0
  %713 = vmatprep.subr.mxu0 0.0
  %714 = vmatpush1.msra.mxu0 0.0
  %715 = vmatprep.subr.mxu0 0.0
  %716 = vmatpush1.msra.mxu0 0.0
  %717 = vmatprep.subr.mxu0 0.0
  %718 = vmatpush1.msra.mxu0 0.0
  %719 = vmatprep.subr.mxu0 0.0
  %720 = vmatpush1.msra.mxu0 0.0
  %721 = vmatprep.subr.mxu0 0.0
  %722 = vmatpush1.msra.mxu0 0.0
  %723 = vmatprep.subr.mxu0 0.0
  %724 = vmatpush1.msra.mxu0 0.0
  %725 = vmatprep.subr.mxu0 0.0
  %726 = vmatpush1.msra.mxu0 0.0
  %727 = vmatprep.subr.mxu0 0.0
  %728 = vmatpush1.msra.mxu0 0.0
  %729 = vmatprep.mubr.f32.mxu0 0.0
  %730 = vmatmul.mubr.f32.gmra.mrb[0].mxu0 %v588
  %v731 = vpop.f32.mrb[0].mxu0
  %v732 = vadd.f32 0.0, %v731
  %v733 = vpop.f32.mrb[0].mxu0
  %v734 = vadd.f32 0.0, %v733
  %735 = vdwg.mxu0
  %v736 = vadd.f32 %v590, %v661
  %v737 = vadd.f32 %v591, %v663
  %v738 = vadd.f32 %v592, %v732
  %v739 = vadd.f32 %v593, %v734
  %v740 = vmul.f32 %v736, 0.5
  %v741 = vmul.f32 %v737, 0.5
  %v742 = vmul.f32 %v738, 0.5
  %v743 = vtanh.pop %v740
  %v744 = vtanh.pop %v741
  %v745 = vtanh.pop %v742
  %v746 = vmul.f32 %v743, 0.5
  %v747 = vmul.f32 %v744, 0.5
  %v748 = vmul.f32 %v745, 0.5
  %v749 = vadd.f32 %v746, 0.5
  %v750 = vadd.f32 %v747, 0.5
  %v751 = vadd.f32 %v748, 0.5
  %v752 = vtanh.pop %v739
  %v753 = vmul.f32 %v750, %v586
  %v754 = vmul.f32 %v749, %v752
  %v755 = vadd.f32 %v753, %v754
  %v756 = vtanh.pop %v755
  %v757 = vmul.f32 %v751, %v756
  %s758 = scalar_lea.vmem %s0, 128
  %v759 = vld [vmem:[%s758] sm:$0xff]
  %v760 = vld [vmem:[%s758 + $0x8] sm:$0xff]
  %v761 = vld [vmem:[%s758 + $0x10] sm:$0xff]
  %v762 = vld [vmem:[%s758 + $0x18] sm:$0xff]
  %763 = vmatprep.subr.mxu0 %v24
  %764 = vmatpush1.msra.mxu0 %v23
  %765 = vmatprep.subr.mxu0 %v28
  %766 = vmatpush1.msra.mxu0 %v27
  %767 = vmatprep.subr.mxu0 %v32
  %768 = vmatpush1.msra.mxu0 %v31
  %769 = vmatprep.subr.mxu0 %v36
  %770 = vmatpush1.msra.mxu0 %v35
  %771 = vmatprep.subr.mxu0 %v40
  %772 = vmatpush1.msra.mxu0 %v39
  %773 = vmatprep.subr.mxu0 %v44
  %774 = vmatpush1.msra.mxu0 %v43
  %775 = vmatprep.subr.mxu0 %v48
  %776 = vmatpush1.msra.mxu0 %v47
  %777 = vmatprep.subr.mxu0 %v52
  %778 = vmatpush1.msra.mxu0 %v51
  %779 = vmatprep.subr.mxu0 %v56
  %780 = vmatpush1.msra.mxu0 %v55
  %781 = vmatprep.subr.mxu0 %v60
  %782 = vmatpush1.msra.mxu0 %v59
  %783 = vmatprep.subr.mxu0 %v64
  %784 = vmatpush1.msra.mxu0 %v63
  %785 = vmatprep.subr.mxu0 %v68
  %786 = vmatpush1.msra.mxu0 %v67
  %787 = vmatprep.subr.mxu0 %v72
  %788 = vmatpush1.msra.mxu0 %v71
  %789 = vmatprep.subr.mxu0 %v76
  %790 = vmatpush1.msra.mxu0 %v75
  %791 = vmatprep.subr.mxu0 %v80
  %792 = vmatpush1.msra.mxu0 %v79
  %793 = vmatprep.subr.mxu0 %v84
  %794 = vmatpush1.msra.mxu0 %v83
  %795 = vmatprep.subr.mxu0 0.0
  %796 = vmatpush1.msra.mxu0 0.0
  %797 = vmatprep.subr.mxu0 0.0
  %798 = vmatpush1.msra.mxu0 0.0
  %799 = vmatprep.subr.mxu0 0.0
  %800 = vmatpush1.msra.mxu0 0.0
  %801 = vmatprep.subr.mxu0 0.0
  %802 = vmatpush1.msra.mxu0 0.0
  %803 = vmatprep.subr.mxu0 0.0
  %804 = vmatpush1.msra.mxu0 0.0
  %805 = vmatprep.subr.mxu0 0.0
  %806 = vmatpush1.msra.mxu0 0.0
  %807 = vmatprep.subr.mxu0 0.0
  %808 = vmatpush1.msra.mxu0 0.0
  %809 = vmatprep.subr.mxu0 0.0
  %810 = vmatpush1.msra.mxu0 0.0
  %811 = vmatprep.subr.mxu0 0.0
  %812 = vmatpush1.msra.mxu0 0.0
  %813 = vmatprep.subr.mxu0 0.0
  %814 = vmatpush1.msra.mxu0 0.0
  %815 = vmatprep.subr.mxu0 0.0
  %816 = vmatpush1.msra.mxu0 0.0
  %817 = vmatprep.subr.mxu0 0.0
  %818 = vmatpush1.msra.mxu0 0.0
  %819 = vmatprep.subr.mxu0 0.0
  %820 = vmatpush1.msra.mxu0 0.0
  %821 = vmatprep.subr.mxu0 0.0
  %822 = vmatpush1.msra.mxu0 0.0
  %823 = vmatprep.subr.mxu0 0.0
  %824 = vmatpush1.msra.mxu0 0.0
  %825 = vmatprep.subr.mxu0 0.0
  %826 = vmatpush1.msra.mxu0 0.0
  %827 = vmatprep.mubr.f32.mxu0 0.0
  %828 = vmatmul.mubr.f32.gmra.mrb[0].mxu0 %v757
  %v829 = vpop.f32.mrb[0].mxu0
  %v830 = vadd.f32 0.0, %v829
  %v831 = vpop.f32.mrb[0].mxu0
  %v832 = vadd.f32 0.0, %v831
  %833 = vdwg.mxu0
  %834 = vmatprep.subr.mxu0 %v26
  %835 = vmatpush1.msra.mxu0 %v25
  %836 = vmatprep.subr.mxu0 %v30
  %837 = vmatpush1.msra.mxu0 %v29
  %838 = vmatprep.subr.mxu0 %v34
  %839 = vmatpush1.msra.mxu0 %v33
  %840 = vmatprep.subr.mxu0 %v38
  %841 = vmatpush1.msra.mxu0 %v37
  %842 = vmatprep.subr.mxu0 %v42
  %843 = vmatpush1.msra.mxu0 %v41
  %844 = vmatprep.subr.mxu0 %v46
  %845 = vmatpush1.msra.mxu0 %v45
  %846 = vmatprep.subr.mxu0 %v50
  %847 = vmatpush1.msra.mxu0 %v49
  %848 = vmatprep.subr.mxu0 %v54
  %849 = vmatpush1.msra.mxu0 %v53
  %850 = vmatprep.subr.mxu0 %v58
  %851 = vmatpush1.msra.mxu0 %v57
  %852 = vmatprep.subr.mxu0 %v62
  %853 = vmatpush1.msra.mxu0 %v61
  %854 = vmatprep.subr.mxu0 %v66
  %855 = vmatpush1.msra.mxu0 %v65
  %856 = vmatprep.subr.mxu0 %v70
  %857 = vmatpush1.msra.mxu0 %v69
  %858 = vmatprep.subr.mxu0 %v74
  %859 = vmatpush1.msra.mxu0 %v73
  %860 = vmatprep.subr.mxu0 %v78
  %861 = vmatpush1.msra.mxu0 %v77
  %862 = vmatprep.subr.mxu0 %v82
  %863 = vmatpush1.msra.mxu0 %v81
  %864 = vmatprep.subr.mxu0 %v86
  %865 = vmatpush1.msra.mxu0 %v85
  %866 = vmatprep.subr.mxu0 0.0
  %867 = vmatpush1.msra.mxu0 0.0
  %868 = vmatprep.subr.mxu0 0.0
  %869 = vmatpush1.msra.mxu0 0.0
  %870 = vmatprep.subr.mxu0 0.0
  %871 = vmatpush1.msra.mxu0 0.0
  %872 = vmatprep.subr.mxu0 0.0
  %873 = vmatpush1.msra.mxu0 0.0
  %874 = vmatprep.subr.mxu0 0.0
  %875 = vmatpush1.msra.mxu0 0.0
  %876 = vmatprep.subr.mxu0 0.0
  %877 = vmatpush1.msra.mxu0 0.0
  %878 = vmatprep.subr.mxu0 0.0
  %879 = vmatpush1.msra.mxu0 0.0
  %880 = vmatprep.subr.mxu0 0.0
  %881 = vmatpush1.msra.mxu0 0.0
  %882 = vmatprep.subr.mxu0 0.0
  %883 = vmatpush1.msra.mxu0 0.0
  %884 = vmatprep.subr.mxu0 0.0
  %885 = vmatpush1.msra.mxu0 0.0
  %886 = vmatprep.subr.mxu0 0.0
  %887 = vmatpush1.msra.mxu0 0.0
  %888 = vmatprep.subr.mxu0 0.0
  %889 = vmatpush1.msra.mxu0 0.0
  %890 = vmatprep.subr.mxu0 0.0
  %891 = vmatpush1.msra.mxu0 0.0
  %892 = vmatprep.subr.mxu0 0.0
  %893 = vmatpush1.msra.mxu0 0.0
  %894 = vmatprep.subr.mxu0 0.0
  %895 = vmatpush1.msra.mxu0 0.0
  %896 = vmatprep.subr.mxu0 0.0
  %897 = vmatpush1.msra.mxu0 0.0
  %898 = vmatprep.mubr.f32.mxu0 0.0
  %899 = vmatmul.mubr.f32.gmra.mrb[0].mxu0 %v757
  %v900 = vpop.f32.mrb[0].mxu0
  %v901 = vadd.f32 0.0, %v900
  %v902 = vpop.f32.mrb[0].mxu0
  %v903 = vadd.f32 0.0, %v902
  %904 = vdwg.mxu0
  %v905 = vadd.f32 %v759, %v830
  %v906 = vadd.f32 %v760, %v832
  %v907 = vadd.f32 %v761, %v901
  %v908 = vadd.f32 %v762, %v903
  %v909 = vmul.f32 %v905, 0.5
  %v910 = vmul.f32 %v906, 0.5
  %v911 = vmul.f32 %v907, 0.5
  %v912 = vtanh.pop %v909
  %v913 = vtanh.pop %v910
  %v914 = vtanh.pop %v911
  %v915 = vmul.f32 %v912, 0.5
  %v916 = vmul.f32 %v913, 0.5
  %v917 = vmul.f32 %v914, 0.5
  %v918 = vadd.f32 %v915, 0.5
  %v919 = vadd.f32 %v916, 0.5
  %v920 = vadd.f32 %v917, 0.5
  %v921 = vtanh.pop %v908
  %v922 = vmul.f32 %v919, %v755
  %v923 = vmul.f32 %v918, %v921
  %v924 = vadd.f32 %v922, %v923
  %v925 = vtanh.pop %v924
  %v926 = vmul.f32 %v920, %v925
  %s927 = scalar_lea.vmem %s0, 160
  %v928 = vld [vmem:[%s927] sm:$0xff]
  %v929 = vld [vmem:[%s927 + $0x8] sm:$0xff]
  %v930 = vld [vmem:[%s927 + $0x10] sm:$0xff]
  %v931 = vld [vmem:[%s927 + $0x18] sm:$0xff]
  %932 = vmatprep.subr.mxu0 %v24
  %933 = vmatpush1.msra.mxu0 %v23
  %934 = vmatprep.subr.mxu0 %v28
  %935 = vmatpush1.msra.mxu0 %v27
  %936 = vmatprep.subr.mxu0 %v32
  %937 = vmatpush1.msra.mxu0 %v31
  %938 = vmatprep.subr.mxu0 %v36
  %939 = vmatpush1.msra.mxu0 %v35
  %940 = vmatprep.subr.mxu0 %v40
  %941 = vmatpush1.msra.mxu0 %v39
  %942 = vmatprep.subr.mxu0 %v44
  %943 = vmatpush1.msra.mxu0 %v43
  %944 = vmatprep.subr.mxu0 %v48
  %945 = vmatpush1.msra.mxu0 %v47
  %946 = vmatprep.subr.mxu0 %v52
  %947 = vmatpush1.msra.mxu0 %v51
  %948 = vmatprep.subr.mxu0 %v56
  %949 = vmatpush1.msra.mxu0 %v55
  %950 = vmatprep.subr.mxu0 %v60
  %951 = vmatpush1.msra.mxu0 %v59
  %952 = vmatprep.subr.mxu0 %v64
  %953 = vmatpush1.msra.mxu0 %v63
  %954 = vmatprep.subr.mxu0 %v68
  %955 = vmatpush1.msra.mxu0 %v67
  %956 = vmatprep.subr.mxu0 %v72
  %957 = vmatpush1.msra.mxu0 %v71
  %958 = vmatprep.subr.mxu0 %v76
  %959 = vmatpush1.msra.mxu0 %v75
  %960 = vmatprep.subr.mxu0 %v80
  %961 = vmatpush1.msra.mxu0 %v79
  %962 = vmatprep.subr.mxu0 %v84
  %963 = vmatpush1.msra.mxu0 %v83
  %964 = vmatprep.subr.mxu0 0.0
  %965 = vmatpush1.msra.mxu0 0.0
  %966 = vmatprep.subr.mxu0 0.0
  %967 = vmatpush1.msra.mxu0 0.0
  %968 = vmatprep.subr.mxu0 0.0
  %969 = vmatpush1.msra.mxu0 0.0
  %970 = vmatprep.subr.mxu0 0.0
  %971 = vmatpush1.msra.mxu0 0.0
  %972 = vmatprep.subr.mxu0 0.0
  %973 = vmatpush1.msra.mxu0 0.0
  %974 = vmatprep.subr.mxu0 0.0
  %975 = vmatpush1.msra.mxu0 0.0
  %976 = vmatprep.subr.mxu0 0.0
  %977 = vmatpush1.msra.mxu0 0.0
  %978 = vmatprep.subr.mxu0 0.0
  %979 = vmatpush1.msra.mxu0 0.0
  %980 = vmatprep.subr.mxu0 0.0
  %981 = vmatpush1.msra.mxu0 0.0
  %982 = vmatprep.subr.mxu0 0.0
  %983 = vmatpush1.msra.mxu0 0.0
  %984 = vmatprep.subr.mxu0 0.0
  %985 = vmatpush1.msra.mxu0 0.0
  %986 = vmatprep.subr.mxu0 0.0
  %987 = vmatpush1.msra.mxu0 0.0
  %988 = vmatprep.subr.mxu0 0.0
  %989 = vmatpush1.msra.mxu0 0.0
  %990 = vmatprep.subr.mxu0 0.0
  %991 = vmatpush1.msra.mxu0 0.0
  %992 = vmatprep.subr.mxu0 0.0
  %993 = vmatpush1.msra.mxu0 0.0
  %994 = vmatprep.subr.mxu0 0.0
  %995 = vmatpush1.msra.mxu0 0.0
  %996 = vmatprep.mubr.f32.mxu0 0.0
  %997 = vmatmul.mubr.f32.gmra.mrb[0].mxu0 %v926
  %v998 = vpop.f32.mrb[0].mxu0
  %v999 = vadd.f32 0.0, %v998
  %v1000 = vpop.f32.mrb[0].mxu0
  %v1001 = vadd.f32 0.0, %v1000
  %1002 = vdwg.mxu0
  %1003 = vmatprep.subr.mxu0 %v26
  %1004 = vmatpush1.msra.mxu0 %v25
  %1005 = vmatprep.subr.mxu0 %v30
  %1006 = vmatpush1.msra.mxu0 %v29
  %1007 = vmatprep.subr.mxu0 %v34
  %1008 = vmatpush1.msra.mxu0 %v33
  %1009 = vmatprep.subr.mxu0 %v38
  %1010 = vmatpush1.msra.mxu0 %v37
  %1011 = vmatprep.subr.mxu0 %v42
  %1012 = vmatpush1.msra.mxu0 %v41
  %1013 = vmatprep.subr.mxu0 %v46
  %1014 = vmatpush1.msra.mxu0 %v45
  %1015 = vmatprep.subr.mxu0 %v50
  %1016 = vmatpush1.msra.mxu0 %v49
  %1017 = vmatprep.subr.mxu0 %v54
  %1018 = vmatpush1.msra.mxu0 %v53
  %1019 = vmatprep.subr.mxu0 %v58
  %1020 = vmatpush1.msra.mxu0 %v57
  %1021 = vmatprep.subr.mxu0 %v62
  %1022 = vmatpush1.msra.mxu0 %v61
  %1023 = vmatprep.subr.mxu0 %v66
  %1024 = vmatpush1.msra.mxu0 %v65
  %1025 = vmatprep.subr.mxu0 %v70
  %1026 = vmatpush1.msra.mxu0 %v69
  %1027 = vmatprep.subr.mxu0 %v74
  %1028 = vmatpush1.msra.mxu0 %v73
  %1029 = vmatprep.subr.mxu0 %v78
  %1030 = vmatpush1.msra.mxu0 %v77
  %1031 = vmatprep.subr.mxu0 %v82
  %1032 = vmatpush1.msra.mxu0 %v81
  %1033 = vmatprep.subr.mxu0 %v86
  %1034 = vmatpush1.msra.mxu0 %v85
  %1035 = vmatprep.subr.mxu0 0.0
  %1036 = vmatpush1.msra.mxu0 0.0
  %1037 = vmatprep.subr.mxu0 0.0
  %1038 = vmatpush1.msra.mxu0 0.0
  %1039 = vmatprep.subr.mxu0 0.0
  %1040 = vmatpush1.msra.mxu0 0.0
  %1041 = vmatprep.subr.mxu0 0.0
  %1042 = vmatpush1.msra.mxu0 0.0
  %1043 = vmatprep.subr.mxu0 0.0
  %1044 = vmatpush1.msra.mxu0 0.0
  %1045 = vmatprep.subr.mxu0 0.0
  %1046 = vmatpush1.msra.mxu0 0.0
  %1047 = vmatprep.subr.mxu0 0.0
  %1048 = vmatpush1.msra.mxu0 0.0
  %1049 = vmatprep.subr.mxu0 0.0
  %1050 = vmatpush1.msra.mxu0 0.0
  %1051 = vmatprep.subr.mxu0 0.0
  %1052 = vmatpush1.msra.mxu0 0.0
  %1053 = vmatprep.subr.mxu0 0.0
  %1054 = vmatpush1.msra.mxu0 0.0
  %1055 = vmatprep.subr.mxu0 0.0
  %1056 = vmatpush1.msra.mxu0 0.0
  %1057 = vmatprep.subr.mxu0 0.0
  %1058 = vmatpush1.msra.mxu0 0.0
  %1059 = vmatprep.subr.mxu0 0.0
  %1060 = vmatpush1.msra.mxu0 0.0
  %1061 = vmatprep.subr.mxu0 0.0
  %1062 = vmatpush1.msra.mxu0 0.0
  %1063 = vmatprep.subr.mxu0 0.0
  %1064 = vmatpush1.msra.mxu0 0.0
  %1065 = vmatprep.subr.mxu0 0.0
  %1066 = vmatpush1.msra.mxu0 0.0
  %1067 = vmatprep.mubr.f32.mxu0 0.0
  %1068 = vmatmul.mubr.f32.gmra.mrb[0].mxu0 %v926
  %v1069 = vpop.f32.mrb[0].mxu0
  %v1070 = vadd.f32 0.0, %v1069
  %v1071 = vpop.f32.mrb[0].mxu0
  %v1072 = vadd.f32 0.0, %v1071
  %1073 = vdwg.mxu0
  %v1074 = vadd.f32 %v928, %v999
  %v1075 = vadd.f32 %v929, %v1001
  %v1076 = vadd.f32 %v930, %v1070
  %v1077 = vadd.f32 %v931, %v1072
  %v1078 = vmul.f32 %v1074, 0.5
  %v1079 = vmul.f32 %v1075, 0.5
  %v1080 = vmul.f32 %v1076, 0.5
  %v1081 = vtanh.pop %v1078
  %v1082 = vtanh.pop %v1079
  %v1083 = vtanh.pop %v1080
  %v1084 = vmul.f32 %v1081, 0.5
  %v1085 = vmul.f32 %v1082, 0.5
  %v1086 = vmul.f32 %v1083, 0.5
  %v1087 = vadd.f32 %v1084, 0.5
  %v1088 = vadd.f32 %v1085, 0.5
  %v1089 = vadd.f32 %v1086, 0.5
  %v1090 = vtanh.pop %v1077
  %v1091 = vmul.f32 %v1088, %v924
  %v1092 = vmul.f32 %v1087, %v1090
  %v1093 = vadd.f32 %v1091, %v1092
  %v1094 = vtanh.pop %v1093
  %v1095 = vmul.f32 %v1089, %v1094
  %s1096 = scalar_lea.vmem %s0, 192
  %v1097 = vld [vmem:[%s1096] sm:$0xff]
  %v1098 = vld [vmem:[%s1096 + $0x8] sm:$0xff]
  %v1099 = vld [vmem:[%s1096 + $0x10] sm:$0xff]
  %v1100 = vld [vmem:[%s1096 + $0x18] sm:$0xff]
  %1101 = vmatprep.subr.mxu0 %v24
  %1102 = vmatpush1.msra.mxu0 %v23
  %1103 = vmatprep.subr.mxu0 %v28
  %1104 = vmatpush1.msra.mxu0 %v27
  %1105 = vmatprep.subr.mxu0 %v32
  %1106 = vmatpush1.msra.mxu0 %v31
  %1107 = vmatprep.subr.mxu0 %v36
  %1108 = vmatpush1.msra.mxu0 %v35
  %1109 = vmatprep.subr.mxu0 %v40
  %1110 = vmatpush1.msra.mxu0 %v39
  %1111 = vmatprep.subr.mxu0 %v44
  %1112 = vmatpush1.msra.mxu0 %v43
  %1113 = vmatprep.subr.mxu0 %v48
  %1114 = vmatpush1.msra.mxu0 %v47
  %1115 = vmatprep.subr.mxu0 %v52
  %1116 = vmatpush1.msra.mxu0 %v51
  %1117 = vmatprep.subr.mxu0 %v56
  %1118 = vmatpush1.msra.mxu0 %v55
  %1119 = vmatprep.subr.mxu0 %v60
  %1120 = vmatpush1.msra.mxu0 %v59
  %1121 = vmatprep.subr.mxu0 %v64
  %1122 = vmatpush1.msra.mxu0 %v63
  %1123 = vmatprep.subr.mxu0 %v68
  %1124 = vmatpush1.msra.mxu0 %v67
  %1125 = vmatprep.subr.mxu0 %v72
  %1126 = vmatpush1.msra.mxu0 %v71
  %1127 = vmatprep.subr.mxu0 %v76
  %1128 = vmatpush1.msra.mxu0 %v75
  %1129 = vmatprep.subr.mxu0 %v80
  %1130 = vmatpush1.msra.mxu0 %v79
  %1131 = vmatprep.subr.mxu0 %v84
  %1132 = vmatpush1.msra.mxu0 %v83
  %1133 = vmatprep.subr.mxu0 0.0
  %1134 = vmatpush1.msra.mxu0 0.0
  %1135 = vmatprep.subr.mxu0 0.0
  %1136 = vmatpush1.msra.mxu0 0.0
  %1137 = vmatprep.subr.mxu0 0.0
  %1138 = vmatpush1.msra.mxu0 0.0
  %1139 = vmatprep.subr.mxu0 0.0
  %1140 = vmatpush1.msra.mxu0 0.0
  %1141 = vmatprep.subr.mxu0 0.0
  %1142 = vmatpush1.msra.mxu0 0.0
  %1143 = vmatprep.subr.mxu0 0.0
  %1144 = vmatpush1.msra.mxu0 0.0
  %1145 = vmatprep.subr.mxu0 0.0
  %1146 = vmatpush1.msra.mxu0 0.0
  %1147 = vmatprep.subr.mxu0 0.0
  %1148 = vmatpush1.msra.mxu0 0.0
  %1149 = vmatprep.subr.mxu0 0.0
  %1150 = vmatpush1.msra.mxu0 0.0
  %1151 = vmatprep.subr.mxu0 0.0
  %1152 = vmatpush1.msra.mxu0 0.0
  %1153 = vmatprep.subr.mxu0 0.0
  %1154 = vmatpush1.msra.mxu0 0.0
  %1155 = vmatprep.subr.mxu0 0.0
  %1156 = vmatpush1.msra.mxu0 0.0
  %1157 = vmatprep.subr.mxu0 0.0
  %1158 = vmatpush1.msra.mxu0 0.0
  %1159 = vmatprep.subr.mxu0 0.0
  %1160 = vmatpush1.msra.mxu0 0.0
  %1161 = vmatprep.subr.mxu0 0.0
  %1162 = vmatpush1.msra.mxu0 0.0
  %1163 = vmatprep.subr.mxu0 0.0
  %1164 = vmatpush1.msra.mxu0 0.0
  %1165 = vmatprep.mubr.f32.mxu0 0.0
  %1166 = vmatmul.mubr.f32.gmra.mrb[0].mxu0 %v1095
  %v1167 = vpop.f32.mrb[0].mxu0
  %v1168 = vadd.f32 0.0, %v1167
  %v1169 = vpop.f32.mrb[0].mxu0
  %v1170 = vadd.f32 0.0, %v1169
  %1171 = vdwg.mxu0
  %1172 = vmatprep.subr.mxu0 %v26
  %1173 = vmatpush1.msra.mxu0 %v25
  %1174 = vmatprep.subr.mxu0 %v30
  %1175 = vmatpush1.msra.mxu0 %v29
  %1176 = vmatprep.subr.mxu0 %v34
  %1177 = vmatpush1.msra.mxu0 %v33
  %1178 = vmatprep.subr.mxu0 %v38
  %1179 = vmatpush1.msra.mxu0 %v37
  %1180 = vmatprep.subr.mxu0 %v42
  %1181 = vmatpush1.msra.mxu0 %v41
  %1182 = vmatprep.subr.mxu0 %v46
  %1183 = vmatpush1.msra.mxu0 %v45
  %1184 = vmatprep.subr.mxu0 %v50
  %1185 = vmatpush1.msra.mxu0 %v49
  %1186 = vmatprep.subr.mxu0 %v54
  %1187 = vmatpush1.msra.mxu0 %v53
  %1188 = vmatprep.subr.mxu0 %v58
  %1189 = vmatpush1.msra.mxu0 %v57
  %1190 = vmatprep.subr.mxu0 %v62
  %1191 = vmatpush1.msra.mxu0 %v61
  %1192 = vmatprep.subr.mxu0 %v66
  %1193 = vmatpush1.msra.mxu0 %v65
  %1194 = vmatprep.subr.mxu0 %v70
  %1195 = vmatpush1.msra.mxu0 %v69
  %1196 = vmatprep.subr.mxu0 %v74
  %1197 = vmatpush1.msra.mxu0 %v73
  %1198 = vmatprep.subr.mxu0 %v78
  %1199 = vmatpush1.msra.mxu0 %v77
  %1200 = vmatprep.subr.mxu0 %v82
  %1201 = vmatpush1.msra.mxu0 %v81
  %1202 = vmatprep.subr.mxu0 %v86
  %1203 = vmatpush1.msra.mxu0 %v85
  %1204 = vmatprep.subr.mxu0 0.0
  %1205 = vmatpush1.msra.mxu0 0.0
  %1206 = vmatprep.subr.mxu0 0.0
  %1207 = vmatpush1.msra.mxu0 0.0
  %1208 = vmatprep.subr.mxu0 0.0
  %1209 = vmatpush1.msra.mxu0 0.0
  %1210 = vmatprep.subr.mxu0 0.0
  %1211 = vmatpush1.msra.mxu0 0.0
  %1212 = vmatprep.subr.mxu0 0.0
  %1213 = vmatpush1.msra.mxu0 0.0
  %1214 = vmatprep.subr.mxu0 0.0
  %1215 = vmatpush1.msra.mxu0 0.0
  %1216 = vmatprep.subr.mxu0 0.0
  %1217 = vmatpush1.msra.mxu0 0.0
  %1218 = vmatprep.subr.mxu0 0.0
  %1219 = vmatpush1.msra.mxu0 0.0
  %1220 = vmatprep.subr.mxu0 0.0
  %1221 = vmatpush1.msra.mxu0 0.0
  %1222 = vmatprep.subr.mxu0 0.0
  %1223 = vmatpush1.msra.mxu0 0.0
  %1224 = vmatprep.subr.mxu0 0.0
  %1225 = vmatpush1.msra.mxu0 0.0
  %1226 = vmatprep.subr.mxu0 0.0
  %1227 = vmatpush1.msra.mxu0 0.0
  %1228 = vmatprep.subr.mxu0 0.0
  %1229 = vmatpush1.msra.mxu0 0.0
  %1230 = vmatprep.subr.mxu0 0.0
  %1231 = vmatpush1.msra.mxu0 0.0
  %1232 = vmatprep.subr.mxu0 0.0
  %1233 = vmatpush1.msra.mxu0 0.0
  %1234 = vmatprep.subr.mxu0 0.0
  %1235 = vmatpush1.msra.mxu0 0.0
  %1236 = vmatprep.mubr.f32.mxu0 0.0
  %1237 = vmatmul.mubr.f32.gmra.mrb[0].mxu0 %v1095
  %v1238 = vpop.f32.mrb[0].mxu0
  %v1239 = vadd.f32 0.0, %v1238
  %v1240 = vpop.f32.mrb[0].mxu0
  %v1241 = vadd.f32 0.0, %v1240
  %1242 = vdwg.mxu0
  %v1243 = vadd.f32 %v1097, %v1168
  %v1244 = vadd.f32 %v1098, %v1170
  %v1245 = vadd.f32 %v1099, %v1239
  %v1246 = vadd.f32 %v1100, %v1241
  %v1247 = vmul.f32 %v1243, 0.5
  %v1248 = vmul.f32 %v1244, 0.5
  %v1249 = vmul.f32 %v1245, 0.5
  %v1250 = vtanh.pop %v1247
  %v1251 = vtanh.pop %v1248
  %v1252 = vtanh.pop %v1249
  %v1253 = vmul.f32 %v1250, 0.5
  %v1254 = vmul.f32 %v1251, 0.5
  %v1255 = vmul.f32 %v1252, 0.5
  %v1256 = vadd.f32 %v1253, 0.5
  %v1257 = vadd.f32 %v1254, 0.5
  %v1258 = vadd.f32 %v1255, 0.5
  %v1259 = vtanh.pop %v1246
  %v1260 = vmul.f32 %v1257, %v1093
  %v1261 = vmul.f32 %v1256, %v1259
  %v1262 = vadd.f32 %v1260, %v1261
  %v1263 = vtanh.pop %v1262
  %v1264 = vmul.f32 %v1258, %v1263
  %s1265 = scalar_lea.vmem %s0, 224
  %v1266 = vld [vmem:[%s1265] sm:$0xff]
  %v1267 = vld [vmem:[%s1265 + $0x8] sm:$0xff]
  %v1268 = vld [vmem:[%s1265 + $0x10] sm:$0xff]
  %v1269 = vld [vmem:[%s1265 + $0x18] sm:$0xff]
  %1270 = vmatprep.subr.mxu0 %v24
  %1271 = vmatpush1.msra.mxu0 %v23
  %1272 = vmatprep.subr.mxu0 %v28
  %1273 = vmatpush1.msra.mxu0 %v27
  %1274 = vmatprep.subr.mxu0 %v32
  %1275 = vmatpush1.msra.mxu0 %v31
  %1276 = vmatprep.subr.mxu0 %v36
  %1277 = vmatpush1.msra.mxu0 %v35
  %1278 = vmatprep.subr.mxu0 %v40
  %1279 = vmatpush1.msra.mxu0 %v39
  %1280 = vmatprep.subr.mxu0 %v44
  %1281 = vmatpush1.msra.mxu0 %v43
  %1282 = vmatprep.subr.mxu0 %v48
  %1283 = vmatpush1.msra.mxu0 %v47
  %1284 = vmatprep.subr.mxu0 %v52
  %1285 = vmatpush1.msra.mxu0 %v51
  %1286 = vmatprep.subr.mxu0 %v56
  %1287 = vmatpush1.msra.mxu0 %v55
  %1288 = vmatprep.subr.mxu0 %v60
  %1289 = vmatpush1.msra.mxu0 %v59
  %1290 = vmatprep.subr.mxu0 %v64
  %1291 = vmatpush1.msra.mxu0 %v63
  %1292 = vmatprep.subr.mxu0 %v68
  %1293 = vmatpush1.msra.mxu0 %v67
  %1294 = vmatprep.subr.mxu0 %v72
  %1295 = vmatpush1.msra.mxu0 %v71
  %1296 = vmatprep.subr.mxu0 %v76
  %1297 = vmatpush1.msra.mxu0 %v75
  %1298 = vmatprep.subr.mxu0 %v80
  %1299 = vmatpush1.msra.mxu0 %v79
  %1300 = vmatprep.subr.mxu0 %v84
  %1301 = vmatpush1.msra.mxu0 %v83
  %1302 = vmatprep.subr.mxu0 0.0
  %1303 = vmatpush1.msra.mxu0 0.0
  %1304 = vmatprep.subr.mxu0 0.0
  %1305 = vmatpush1.msra.mxu0 0.0
  %1306 = vmatprep.subr.mxu0 0.0
  %1307 = vmatpush1.msra.mxu0 0.0
  %1308 = vmatprep.subr.mxu0 0.0
  %1309 = vmatpush1.msra.mxu0 0.0
  %1310 = vmatprep.subr.mxu0 0.0
  %1311 = vmatpush1.msra.mxu0 0.0
  %1312 = vmatprep.subr.mxu0 0.0
  %1313 = vmatpush1.msra.mxu0 0.0
  %1314 = vmatprep.subr.mxu0 0.0
  %1315 = vmatpush1.msra.mxu0 0.0
  %1316 = vmatprep.subr.mxu0 0.0
  %1317 = vmatpush1.msra.mxu0 0.0
  %1318 = vmatprep.subr.mxu0 0.0
  %1319 = vmatpush1.msra.mxu0 0.0
  %1320 = vmatprep.subr.mxu0 0.0
  %1321 = vmatpush1.msra.mxu0 0.0
  %1322 = vmatprep.subr.mxu0 0.0
  %1323 = vmatpush1.msra.mxu0 0.0
  %1324 = vmatprep.subr.mxu0 0.0
  %1325 = vmatpush1.msra.mxu0 0.0
  %1326 = vmatprep.subr.mxu0 0.0
  %1327 = vmatpush1.msra.mxu0 0.0
  %1328 = vmatprep.subr.mxu0 0.0
  %1329 = vmatpush1.msra.mxu0 0.0
  %1330 = vmatprep.subr.mxu0 0.0
  %1331 = vmatpush1.msra.mxu0 0.0
  %1332 = vmatprep.subr.mxu0 0.0
  %1333 = vmatpush1.msra.mxu0 0.0
  %1334 = vmatprep.mubr.f32.mxu0 0.0
  %1335 = vmatmul.mubr.f32.gmra.mrb[0].mxu0 %v1264
  %v1336 = vpop.f32.mrb[0].mxu0
  %v1337 = vadd.f32 0.0, %v1336
  %v1338 = vpop.f32.mrb[0].mxu0
  %v1339 = vadd.f32 0.0, %v1338
  %1340 = vdwg.mxu0
  %1341 = vmatprep.subr.mxu0 %v26
  %1342 = vmatpush1.msra.mxu0 %v25
  %1343 = vmatprep.subr.mxu0 %v30
  %1344 = vmatpush1.msra.mxu0 %v29
  %1345 = vmatprep.subr.mxu0 %v34
  %1346 = vmatpush1.msra.mxu0 %v33
  %1347 = vmatprep.subr.mxu0 %v38
  %1348 = vmatpush1.msra.mxu0 %v37
  %1349 = vmatprep.subr.mxu0 %v42
  %1350 = vmatpush1.msra.mxu0 %v41
  %1351 = vmatprep.subr.mxu0 %v46
  %1352 = vmatpush1.msra.mxu0 %v45
  %1353 = vmatprep.subr.mxu0 %v50
  %1354 = vmatpush1.msra.mxu0 %v49
  %1355 = vmatprep.subr.mxu0 %v54
  %1356 = vmatpush1.msra.mxu0 %v53
  %1357 = vmatprep.subr.mxu0 %v58
  %1358 = vmatpush1.msra.mxu0 %v57
  %1359 = vmatprep.subr.mxu0 %v62
  %1360 = vmatpush1.msra.mxu0 %v61
  %1361 = vmatprep.subr.mxu0 %v66
  %1362 = vmatpush1.msra.mxu0 %v65
  %1363 = vmatprep.subr.mxu0 %v70
  %1364 = vmatpush1.msra.mxu0 %v69
  %1365 = vmatprep.subr.mxu0 %v74
  %1366 = vmatpush1.msra.mxu0 %v73
  %1367 = vmatprep.subr.mxu0 %v78
  %1368 = vmatpush1.msra.mxu0 %v77
  %1369 = vmatprep.subr.mxu0 %v82
  %1370 = vmatpush1.msra.mxu0 %v81
  %1371 = vmatprep.subr.mxu0 %v86
  %1372 = vmatpush1.msra.mxu0 %v85
  %1373 = vmatprep.subr.mxu0 0.0
  %1374 = vmatpush1.msra.mxu0 0.0
  %1375 = vmatprep.subr.mxu0 0.0
  %1376 = vmatpush1.msra.mxu0 0.0
  %1377 = vmatprep.subr.mxu0 0.0
  %1378 = vmatpush1.msra.mxu0 0.0
  %1379 = vmatprep.subr.mxu0 0.0
  %1380 = vmatpush1.msra.mxu0 0.0
  %1381 = vmatprep.subr.mxu0 0.0
  %1382 = vmatpush1.msra.mxu0 0.0
  %1383 = vmatprep.subr.mxu0 0.0
  %1384 = vmatpush1.msra.mxu0 0.0
  %1385 = vmatprep.subr.mxu0 0.0
  %1386 = vmatpush1.msra.mxu0 0.0
  %1387 = vmatprep.subr.mxu0 0.0
  %1388 = vmatpush1.msra.mxu0 0.0
  %1389 = vmatprep.subr.mxu0 0.0
  %1390 = vmatpush1.msra.mxu0 0.0
  %1391 = vmatprep.subr.mxu0 0.0
  %1392 = vmatpush1.msra.mxu0 0.0
  %1393 = vmatprep.subr.mxu0 0.0
  %1394 = vmatpush1.msra.mxu0 0.0
  %1395 = vmatprep.subr.mxu0 0.0
  %1396 = vmatpush1.msra.mxu0 0.0
  %1397 = vmatprep.subr.mxu0 0.0
  %1398 = vmatpush1.msra.mxu0 0.0
  %1399 = vmatprep.subr.mxu0 0.0
  %1400 = vmatpush1.msra.mxu0 0.0
  %1401 = vmatprep.subr.mxu0 0.0
  %1402 = vmatpush1.msra.mxu0 0.0
  %1403 = vmatprep.subr.mxu0 0.0
  %1404 = vmatpush1.msra.mxu0 0.0
  %1405 = vmatprep.mubr.f32.mxu0 0.0
  %1406 = vmatmul.mubr.f32.gmra.mrb[0].mxu0 %v1264
  %v1407 = vpop.f32.mrb[0].mxu0
  %v1408 = vadd.f32 0.0, %v1407
  %v1409 = vpop.f32.mrb[0].mxu0
  %v1410 = vadd.f32 0.0, %v1409
  %1411 = vdwg.mxu0
  %v1412 = vadd.f32 %v1266, %v1337
  %v1413 = vadd.f32 %v1267, %v1339
  %v1414 = vadd.f32 %v1268, %v1408
  %v1415 = vadd.f32 %v1269, %v1410
  %v1416 = vmul.f32 %v1412, 0.5
  %v1417 = vmul.f32 %v1413, 0.5
  %v1418 = vmul.f32 %v1414, 0.5
  %v1419 = vtanh.pop %v1416
  %v1420 = vtanh.pop %v1417
  %v1421 = vtanh.pop %v1418
  %v1422 = vmul.f32 %v1419, 0.5
  %v1423 = vmul.f32 %v1420, 0.5
  %v1424 = vmul.f32 %v1421, 0.5
  %v1425 = vadd.f32 %v1422, 0.5
  %v1426 = vadd.f32 %v1423, 0.5
  %v1427 = vadd.f32 %v1424, 0.5
  %v1428 = vtanh.pop %v1415
  %v1429 = vmul.f32 %v1426, %v1262
  %v1430 = vmul.f32 %v1425, %v1428
  %v1431 = vadd.f32 %v1429, %v1430
  %v1432 = vtanh.pop %v1431
  %v1433 = vmul.f32 %v1427, %v1432
  %1434 = vst [vmem:[#allocation2] sm:$0xff] %v1433
  %1435 = vst [vmem:[#allocation3] sm:$0xff] %v1431
  // Predicated region
  $region14: #{_forward.1} parent=0 // pred_check
    %p1436 = pneg %p11
  $region15: #{_forward.1} parent=0 // pred_check_branch
    %1438 = sbr.rel (%p1436) target = $region17
  $region16: #{_forward.1} parent=0 // pred_region
    %1439 = vst [vmem:[%s2] sm:$0xff] %v1433
  $region17: #{_forward.1} parent=0 // pred_fallthru
    _
  // Predicated region
  $region18: #{_forward.1} parent=0 // pred_check
    _
  $region19: #{_forward.1} parent=0 // pred_check_branch
    %1441 = sbr.rel (0) target = $region21
  $region20: #{_forward.1} parent=0 // pred_region
    _
  $region21: #{_forward.1} parent=0 // pred_fallthru
    _
  // Predicated region
  $region22: #{_forward.1} parent=0 // pred_check
    _
  $region23: #{_forward.1} parent=0 // pred_check_branch
    %1443 = sbr.rel (0) target = $region25
  $region24: #{_forward.1} parent=0 // pred_region
    _
  $region25: #{_forward.1} parent=0 // pred_fallthru
    _

</llo_original>
